<compile_context>
chip_gen: v6e
topology: v6e:2x2x1
jax: 0.10.0
libtpu: 0.0.40
codegen_flags: <defaults>
</compile_context>

<pallas_src>
import jax
import jax.numpy as jnp
from jax.experimental import pallas as pl
from jax.experimental.pallas import tpu as pltpu

# ---------------- problem sizes (small, consistent with the module) ----------
B = 8            # batch
D = 6            # flow dimensionality (y)
D1 = 3           # identity half of the coupling
D2 = D - D1      # transformed half
C = 16           # raw context dim (x)
H = 32           # embedding-net hidden
E = 8            # embedding (context feature) dim
HC = 32          # conditioner hidden
K = 8            # spline bins per transformed dim
G24 = D2 * K     # 24 grouped lanes (K bins per transformed dim)
P2 = 4 * G24     # packed conditioner head width: widths|heights|dlow|dhigh
TB = 3.0         # tail bound (linear tails outside [-TB, TB])
MIN_BIN = 1e-3   # min bin width == min bin height
MIN_DERIV = 1e-3
OUT_LANES = 128  # lane-dense output slab width

# packed-weight layout: one (128, 128) f32 operand, all blocks 8-row aligned
PACK_ROWS = 128
PACK_COLS = 128
R_WE1, R_BE1 = 0, 16      # embedding layer 1: (C, H)   + (1, H)
R_WE2, R_BE2 = 24, 56     # embedding layer 2: (H, E)   + (1, E)
R_WC1, R_BC1 = 64, 80     # conditioner in:    (D1+E,HC)+ (1, HC)
R_WC2, R_BC2 = 88, 120    # conditioner head:  (HC, P2) + (1, P2)


# ---------------- shared math (kernel body == pure-JAX reference) ------------
def _softplus(x):
    return jnp.maximum(x, 0.0) + jnp.log(1.0 + jnp.exp(-jnp.abs(x)))


def _dot(a, b):
    # tiny matmuls; HIGHEST keeps the 0/1 "structural" contractions exact and
    # removes the Mosaic-vs-XLA default-precision mismatch (review concern).
    return jnp.dot(a, b, preferred_element_type=jnp.float32,
                   precision=jax.lax.Precision.HIGHEST)


def _iota_f(shape, dim):
    return jax.lax.broadcasted_iota(jnp.int32, shape, dim).astype(jnp.float32)


def _grp_f(idx_f):
    # group index (float) for a lane/row index, groups of K lanes; avoids
    # vector integer div/mod.
    g = jnp.zeros_like(idx_f)
    for b in range(1, D2):
        g = g + (idx_f >= float(b * K)).astype(jnp.float32)
    return g


def _unpack(w):
    # works on both the VMEM Ref (kernel) and a plain array (reference)
    we1 = w[R_WE1:R_WE1 + C, 0:H]
    be1 = w[R_BE1:R_BE1 + 1, 0:H]
    we2 = w[R_WE2:R_WE2 + H, 0:E]
    be2 = w[R_BE2:R_BE2 + 1, 0:E]
    wc1 = w[R_WC1:R_WC1 + D1 + E, 0:HC]
    bc1 = w[R_BC1:R_BC1 + 1, 0:HC]
    wc2 = w[R_WC2:R_WC2 + HC, 0:P2]
    bc2 = w[R_BC2:R_BC2 + 1, 0:P2]
    return we1, be1, we2, be2, wc1, bc1, wc2, bc2


def _forward_math(y, x, w, *, recip):
    """Full FlowWrapper.forward math. Returns (B, 1) log_prob."""
    we1, be1, we2, be2, wc1, bc1, wc2, bc2 = _unpack(w)

    # --- embedding net (2-layer MLP on context x) ---
    he = jnp.maximum(_dot(x, we1) + be1, 0.0)
    e = _dot(he, we2) + be2                                   # (B, E)

    # --- coupling conditioner on [y1, embed(x)] (single merged matmul) ---
    y1 = y[:, 0:D1]
    ctx = jnp.concatenate([y1, e], axis=1)                    # (B, D1+E)
    hc = jnp.maximum(_dot(ctx, wc1) + bc1, 0.0)
    params = _dot(hc, wc2) + bc2                              # (B, P2)

    # --- iota-built 0/1 matrices (built once, shared by all spline steps) ---
    rf = _iota_f((G24, G24), 0)
    cf = _iota_f((G24, G24), 1)
    same = _grp_f(rf) == _grp_f(cf)
    GG = same.astype(jnp.float32)                             # block all-ones
    M24 = (same & (rf <= cf)).astype(jnp.float32)             # block upper-tri
    Gsum = (_grp_f(_iota_f((G24, D2), 0)) ==
            _iota_f((G24, D2), 1)).astype(jnp.float32)        # (24, 3)
    Gbc = (_iota_f((D2, G24), 0) ==
           _grp_f(_iota_f((D2, G24), 1))).astype(jnp.float32)  # (3, 24)
    lane = _iota_f((1, G24), 1)
    ki = lane - float(K) * _grp_f(lane)                       # within-group idx

    # --- grouped softmax for widths & heights (stacked along sublanes) ---
    UW = params[:, 0:G24]
    UH = params[:, G24:2 * G24]
    WH = jnp.concatenate([UW, UH], axis=0)                    # (2B, 24)
    mx = jnp.max(WH, axis=-1, keepdims=True)                  # per-row max
    ex = jnp.exp(WH - mx)
    sm = ex / _dot(ex, GG)                                    # per-group softmax
    whb = 2.0 * TB * (MIN_BIN + (1.0 - MIN_BIN * K) * sm)     # bin widths/heights
    cwh = _dot(whb, M24)                                      # grouped cumsum
    Wb, Hb = whb[0:B], whb[B:2 * B]
    CW, CH = cwh[0:B], cwh[B:2 * B]

    # --- knot derivatives (boundary derivatives fixed to 1, linear tails) ---
    UDL = params[:, 2 * G24:3 * G24]
    UDH = params[:, 3 * G24:4 * G24]
    sp = MIN_DERIV + _softplus(jnp.concatenate([UDL, UDH], axis=0))
    dlow = jnp.where(ki < 0.5, 1.0, sp[0:B])                  # left-knot deriv
    dhigh = jnp.where(ki > K - 1.5, 1.0, sp[B:2 * B])         # right-knot deriv

    # --- bin search (one-hot per dim, all D2 dims at once) ---
    y2 = y[:, D1:D]                                           # (B, D2)
    t = _dot(y2 + TB, Gbc)                                    # block-broadcast
    cmp = (t >= CW).astype(jnp.float32)
    binc = jnp.clip(_dot(cmp, Gsum), 0.0, float(K - 1))       # (B, D2)
    oh = (jnp.abs(_dot(binc, Gbc) - ki) < 0.5).astype(jnp.float32)

    # --- gather every per-bin quantity with ONE MXU contraction ---
    S = jnp.concatenate([oh * Wb, oh * CW, oh * Hb, oh * CH,
                         oh * dlow, oh * dhigh], axis=0)      # (6B, 24)
    Gsel = _dot(S, Gsum)                                      # (6B, D2)
    gw = Gsel[0:B]
    cw_r = Gsel[B:2 * B]
    gh = Gsel[2 * B:3 * B]
    ch_r = Gsel[3 * B:4 * B]
    d_l = Gsel[4 * B:5 * B]
    d_r = Gsel[5 * B:6 * B]

    rw = recip(gw)
    gcw = cw_r - gw - TB                                      # left knot (x)
    gch = ch_r - gh - TB                                      # left knot (y)
    gdelta = gh * rw

    theta = jnp.clip((y2 - gcw) * rw, 0.0, 1.0)
    th2 = theta * theta
    tt = theta * (1.0 - theta)
    num = gh * (gdelta * th2 + d_l * tt)
    den = gdelta + (d_l + d_r - 2.0 * gdelta) * tt
    z_in = gch + num * recip(den)
    dnum = (gdelta * gdelta) * (d_r * th2 + 2.0 * gdelta * tt
                                + d_l * (1.0 - theta) * (1.0 - theta))
    lad_in = jnp.log(jnp.maximum(
        dnum * recip(jnp.maximum(den * den, 1e-30)), 1e-30))  # fused single log

    inside = (y2 >= -TB) & (y2 <= TB)
    z = jnp.where(inside, z_in, y2)                           # identity on tails
    lad = jnp.where(inside, lad_in, 0.0)

    # --- standard-normal base log-prob + log|det| (one lane reduction) ---
    red = jnp.concatenate([-0.5 * y1 * y1, -0.5 * z * z, lad], axis=1)
    logp = (jnp.sum(red, axis=-1, keepdims=True)
            - 0.5 * D * jnp.log(2.0 * jnp.pi))
    return logp                                               # (B, 1)


# ---------------- Pallas kernel ----------------------------------------------
def _flow_logprob_kernel(y_ref, x_ref, w_ref, out_ref):
    logp = _forward_math(y_ref[...], x_ref[...], w_ref,
                         recip=lambda v: pl.reciprocal(v, approx=True))
    # lane-dense output slab (unmasked store); sliced to (B,) in the wrapper
    out_ref[...] = jnp.broadcast_to(logp, (B, OUT_LANES))


def flow_wrapper_forward(y, x, w_packed):
    """FlowWrapper.forward(y, x) -> log_prob of shape (B,)."""
    out = pl.pallas_call(
        _flow_logprob_kernel,
        out_shape=jax.ShapeDtypeStruct((B, OUT_LANES), jnp.float32),
        in_specs=[pl.BlockSpec(memory_space=pltpu.MemorySpace.VMEM)] * 3,
        out_specs=pl.BlockSpec(memory_space=pltpu.MemorySpace.VMEM),
    )(y, x, w_packed)
    return out[:, 0]


# ---------------- parameter init & packing -----------------------------------
def _init_packed_weights(key):
    ks = jax.random.split(key, 12)

    def init(k, shape, scale):
        return (scale * jax.random.normal(k, shape)).astype(jnp.float32)

    we1 = init(ks[0], (C, H), 0.3)
    be1 = init(ks[1], (1, H), 0.1)
    we2 = init(ks[2], (H, E), 0.3)
    be2 = init(ks[3], (1, E), 0.1)
    wc1 = init(ks[4], (D1 + E, HC), 0.3)          # merged [y1 | e] conditioner
    bc1 = init(ks[5], (1, HC), 0.1)
    # conditioner head, logical layout: widths | heights | interior derivatives
    w_w = init(ks[6], (HC, D2 * K), 0.3)
    b_w = init(ks[7], (1, D2 * K), 0.1)
    w_h = init(ks[8], (HC, D2 * K), 0.3)
    b_h = init(ks[9], (1, D2 * K), 0.1)
    w_d = init(ks[10], (HC, D2 * (K - 1)), 0.3)
    b_d = init(ks[11], (1, D2 * (K - 1)), 0.1)

    def deriv_slabs(m):
        # per-dim (K-1) interior-deriv columns -> left/right K-wide slabs with
        # a dummy column at the boundary position (masked to 1.0 in-kernel).
        lo, hi = [], []
        for d in range(D2):
            blk = m[:, d * (K - 1):(d + 1) * (K - 1)]
            zero = jnp.zeros((m.shape[0], 1), jnp.float32)
            lo.append(jnp.concatenate([zero, blk], axis=1))   # knots 0..K-1
            hi.append(jnp.concatenate([blk, zero], axis=1))   # knots 1..K
        return jnp.concatenate(lo, axis=1), jnp.concatenate(hi, axis=1)

    wdl, wdh = deriv_slabs(w_d)
    bdl, bdh = deriv_slabs(b_d)
    wc2 = jnp.concatenate([w_w, w_h, wdl, wdh], axis=1)       # (HC, P2)
    bc2 = jnp.concatenate([b_w, b_h, bdl, bdh], axis=1)       # (1, P2)

    wp = jnp.zeros((PACK_ROWS, PACK_COLS), jnp.float32)
    for blk, row in ((we1, R_WE1), (be1, R_BE1), (we2, R_WE2), (be2, R_BE2),
                     (wc1, R_WC1), (bc1, R_BC1), (wc2, R_WC2), (bc2, R_BC2)):
        wp = wp.at[row:row + blk.shape[0], 0:blk.shape[1]].set(blk)
    return wp


# ---------------- driver ------------------------------------------------------
if __name__ == "__main__":
    key = jax.random.PRNGKey(0)
    kp, ky, kx = jax.random.split(key, 3)
    w_packed = _init_packed_weights(kp)
    y = jax.random.normal(ky, (B, D), dtype=jnp.float32)
    x = jax.random.normal(kx, (B, C), dtype=jnp.float32)

    log_prob = flow_wrapper_forward(y, x, w_packed)
    jax.block_until_ready(log_prob)

    # sanity check against the identical math in plain JAX (exact divides)
    ref = _forward_math(y, x, w_packed, recip=lambda v: 1.0 / v)[:, 0]
    assert log_prob.shape == (B,)
    assert bool(jnp.all(jnp.isfinite(log_prob)))
    assert bool(jnp.allclose(log_prob, ref, rtol=2e-2, atol=2e-2)), (
        f"mismatch: {log_prob} vs {ref}")

    # TODO(synk): flow.sample / sample_and_log_prob need the spline inverse
    # (root of a quadratic per element); only log_prob/forward is implemented.
    print("KERNEL_OK")
</pallas_src>

<mosaic_0001>
module attributes {stable_mosaic.version = 11 : i64} {
  func.func @_flow_logprob_kernel(%arg0: memref<8x6xf32, #tpu.memory_space<vmem>>, %arg1: memref<8x16xf32, #tpu.memory_space<vmem>>, %arg2: memref<128x128xf32, #tpu.memory_space<vmem>>, %arg3: memref<8x128xf32, #tpu.memory_space<vmem>>) attributes {dimension_semantics = [], scalar_prefetch = 0 : i64, scratch_operands = 0 : i64, tpu.core_type = #tpu.core_type<tc>} {
    %c0 = arith.constant 0 : index
    %c0_0 = arith.constant 0 : index
    %0 = vector.load %arg0[%c0, %c0_0] : memref<8x6xf32, #tpu.memory_space<vmem>>, vector<8x6xf32>
    %c0_1 = arith.constant 0 : index
    %c0_2 = arith.constant 0 : index
    %1 = vector.load %arg1[%c0_1, %c0_2] : memref<8x16xf32, #tpu.memory_space<vmem>>, vector<8x16xf32>
    %c0_3 = arith.constant 0 : index
    %c0_4 = arith.constant 0 : index
    %2 = vector.load %arg2[%c0_3, %c0_4] : memref<128x128xf32, #tpu.memory_space<vmem>>, vector<16x32xf32>
    %c16 = arith.constant 16 : index
    %c0_5 = arith.constant 0 : index
    %3 = vector.load %arg2[%c16, %c0_5] : memref<128x128xf32, #tpu.memory_space<vmem>>, vector<1x32xf32>
    %c24 = arith.constant 24 : index
    %c0_6 = arith.constant 0 : index
    %4 = vector.load %arg2[%c24, %c0_6] : memref<128x128xf32, #tpu.memory_space<vmem>>, vector<32x8xf32>
    %c56 = arith.constant 56 : index
    %c0_7 = arith.constant 0 : index
    %5 = vector.load %arg2[%c56, %c0_7] : memref<128x128xf32, #tpu.memory_space<vmem>>, vector<1x8xf32>
    %c64 = arith.constant 64 : index
    %c0_8 = arith.constant 0 : index
    %6 = vector.load %arg2[%c64, %c0_8] : memref<128x128xf32, #tpu.memory_space<vmem>>, vector<11x32xf32>
    %c80 = arith.constant 80 : index
    %c0_9 = arith.constant 0 : index
    %7 = vector.load %arg2[%c80, %c0_9] : memref<128x128xf32, #tpu.memory_space<vmem>>, vector<1x32xf32>
    %c88 = arith.constant 88 : index
    %c0_10 = arith.constant 0 : index
    %8 = vector.load %arg2[%c88, %c0_10] : memref<128x128xf32, #tpu.memory_space<vmem>>, vector<32x96xf32>
    %c120 = arith.constant 120 : index
    %c0_11 = arith.constant 0 : index
    %9 = vector.load %arg2[%c120, %c0_11] : memref<128x128xf32, #tpu.memory_space<vmem>>, vector<1x96xf32>
    %cst = arith.constant dense<0.000000e+00> : vector<8x32xf32>
    %10 = tpu.matmul %1, %2, %cst {dimension_numbers = #tpu.dot_dimension_numbers<[1], [0], [0], [1], [0, 0, 1, 1], [], []>, precision = #tpu.contract_precision<fp32>} : vector<8x16xf32>, vector<16x32xf32>, vector<8x32xf32> -> vector<8x32xf32>
    %11 = vector.broadcast %3 : vector<1x32xf32> to vector<8x32xf32>
    %12 = arith.addf %10, %11 : vector<8x32xf32>
    %cst_12 = arith.constant 0.000000e+00 : f32
    %13 = vector.broadcast %cst_12 : f32 to vector<8x32xf32>
    %14 = arith.maximumf %12, %13 : vector<8x32xf32>
    %cst_13 = arith.constant dense<0.000000e+00> : vector<8x8xf32>
    %15 = tpu.matmul %14, %4, %cst_13 {dimension_numbers = #tpu.dot_dimension_numbers<[1], [0], [0], [1], [0, 0, 1, 1], [], []>, precision = #tpu.contract_precision<fp32>} : vector<8x32xf32>, vector<32x8xf32>, vector<8x8xf32> -> vector<8x8xf32>
    %16 = vector.broadcast %5 : vector<1x8xf32> to vector<8x8xf32>
    %17 = arith.addf %15, %16 : vector<8x8xf32>
    %18 = vector.extract_strided_slice %0 {offsets = [0, 0], sizes = [8, 3], strides = [1, 1]} : vector<8x6xf32> to vector<8x3xf32>
    %19 = tpu.concatenate %18, %17 in 1 : vector<8x3xf32>, vector<8x8xf32> -> vector<8x11xf32>
    %cst_14 = arith.constant dense<0.000000e+00> : vector<8x32xf32>
    %20 = tpu.matmul %19, %6, %cst_14 {dimension_numbers = #tpu.dot_dimension_numbers<[1], [0], [0], [1], [0, 0, 1, 1], [], []>, precision = #tpu.contract_precision<fp32>} : vector<8x11xf32>, vector<11x32xf32>, vector<8x32xf32> -> vector<8x32xf32>
    %21 = vector.broadcast %7 : vector<1x32xf32> to vector<8x32xf32>
    %22 = arith.addf %20, %21 : vector<8x32xf32>
    %cst_15 = arith.constant 0.000000e+00 : f32
    %23 = vector.broadcast %cst_15 : f32 to vector<8x32xf32>
    %24 = arith.maximumf %22, %23 : vector<8x32xf32>
    %cst_16 = arith.constant dense<0.000000e+00> : vector<8x96xf32>
    %25 = tpu.matmul %24, %8, %cst_16 {dimension_numbers = #tpu.dot_dimension_numbers<[1], [0], [0], [1], [0, 0, 1, 1], [], []>, precision = #tpu.contract_precision<fp32>} : vector<8x32xf32>, vector<32x96xf32>, vector<8x96xf32> -> vector<8x96xf32>
    %26 = vector.broadcast %9 : vector<1x96xf32> to vector<8x96xf32>
    %27 = arith.addf %25, %26 : vector<8x96xf32>
    %28 = tpu.iota {dimensions = array<i32: 0>} : vector<24x24xi32>
    %29 = arith.sitofp %28 : vector<24x24xi32> to vector<24x24xf32>
    %30 = tpu.iota {dimensions = array<i32: 1>} : vector<24x24xi32>
    %31 = arith.sitofp %30 : vector<24x24xi32> to vector<24x24xf32>
    %cst_17 = arith.constant 0.000000e+00 : f32
    %32 = vector.broadcast %cst_17 : f32 to vector<24x24xf32>
    %cst_18 = arith.constant 8.000000e+00 : f32
    %33 = vector.broadcast %cst_18 : f32 to vector<24x24xf32>
    %34 = arith.cmpf oge, %29, %33 : vector<24x24xf32>
    %35 = arith.extui %34 : vector<24x24xi1> to vector<24x24xi32>
    %36 = arith.sitofp %35 : vector<24x24xi32> to vector<24x24xf32>
    %37 = arith.addf %32, %36 : vector<24x24xf32>
    %cst_19 = arith.constant 1.600000e+01 : f32
    %38 = vector.broadcast %cst_19 : f32 to vector<24x24xf32>
    %39 = arith.cmpf oge, %29, %38 : vector<24x24xf32>
    %40 = arith.extui %39 : vector<24x24xi1> to vector<24x24xi32>
    %41 = arith.sitofp %40 : vector<24x24xi32> to vector<24x24xf32>
    %42 = arith.addf %37, %41 : vector<24x24xf32>
    %cst_20 = arith.constant 0.000000e+00 : f32
    %43 = vector.broadcast %cst_20 : f32 to vector<24x24xf32>
    %cst_21 = arith.constant 8.000000e+00 : f32
    %44 = vector.broadcast %cst_21 : f32 to vector<24x24xf32>
    %45 = arith.cmpf oge, %31, %44 : vector<24x24xf32>
    %46 = arith.extui %45 : vector<24x24xi1> to vector<24x24xi32>
    %47 = arith.sitofp %46 : vector<24x24xi32> to vector<24x24xf32>
    %48 = arith.addf %43, %47 : vector<24x24xf32>
    %cst_22 = arith.constant 1.600000e+01 : f32
    %49 = vector.broadcast %cst_22 : f32 to vector<24x24xf32>
    %50 = arith.cmpf oge, %31, %49 : vector<24x24xf32>
    %51 = arith.extui %50 : vector<24x24xi1> to vector<24x24xi32>
    %52 = arith.sitofp %51 : vector<24x24xi32> to vector<24x24xf32>
    %53 = arith.addf %48, %52 : vector<24x24xf32>
    %54 = arith.cmpf oeq, %42, %53 : vector<24x24xf32>
    %55 = arith.extui %54 : vector<24x24xi1> to vector<24x24xi32>
    %56 = arith.sitofp %55 : vector<24x24xi32> to vector<24x24xf32>
    %57 = arith.cmpf ole, %29, %31 : vector<24x24xf32>
    %58 = arith.andi %54, %57 : vector<24x24xi1>
    %59 = arith.extui %58 : vector<24x24xi1> to vector<24x24xi32>
    %60 = arith.sitofp %59 : vector<24x24xi32> to vector<24x24xf32>
    %61 = tpu.iota {dimensions = array<i32: 0>} : vector<24x3xi32>
    %62 = arith.sitofp %61 : vector<24x3xi32> to vector<24x3xf32>
    %cst_23 = arith.constant 0.000000e+00 : f32
    %63 = vector.broadcast %cst_23 : f32 to vector<24x3xf32>
    %cst_24 = arith.constant 8.000000e+00 : f32
    %64 = vector.broadcast %cst_24 : f32 to vector<24x3xf32>
    %65 = arith.cmpf oge, %62, %64 : vector<24x3xf32>
    %66 = arith.extui %65 : vector<24x3xi1> to vector<24x3xi32>
    %67 = arith.sitofp %66 : vector<24x3xi32> to vector<24x3xf32>
    %68 = arith.addf %63, %67 : vector<24x3xf32>
    %cst_25 = arith.constant 1.600000e+01 : f32
    %69 = vector.broadcast %cst_25 : f32 to vector<24x3xf32>
    %70 = arith.cmpf oge, %62, %69 : vector<24x3xf32>
    %71 = arith.extui %70 : vector<24x3xi1> to vector<24x3xi32>
    %72 = arith.sitofp %71 : vector<24x3xi32> to vector<24x3xf32>
    %73 = arith.addf %68, %72 : vector<24x3xf32>
    %74 = tpu.iota {dimensions = array<i32: 1>} : vector<24x3xi32>
    %75 = arith.sitofp %74 : vector<24x3xi32> to vector<24x3xf32>
    %76 = arith.cmpf oeq, %73, %75 : vector<24x3xf32>
    %77 = arith.extui %76 : vector<24x3xi1> to vector<24x3xi32>
    %78 = arith.sitofp %77 : vector<24x3xi32> to vector<24x3xf32>
    %79 = tpu.iota {dimensions = array<i32: 0>} : vector<3x24xi32>
    %80 = arith.sitofp %79 : vector<3x24xi32> to vector<3x24xf32>
    %81 = tpu.iota {dimensions = array<i32: 1>} : vector<3x24xi32>
    %82 = arith.sitofp %81 : vector<3x24xi32> to vector<3x24xf32>
    %cst_26 = arith.constant 0.000000e+00 : f32
    %83 = vector.broadcast %cst_26 : f32 to vector<3x24xf32>
    %cst_27 = arith.constant 8.000000e+00 : f32
    %84 = vector.broadcast %cst_27 : f32 to vector<3x24xf32>
    %85 = arith.cmpf oge, %82, %84 : vector<3x24xf32>
    %86 = arith.extui %85 : vector<3x24xi1> to vector<3x24xi32>
    %87 = arith.sitofp %86 : vector<3x24xi32> to vector<3x24xf32>
    %88 = arith.addf %83, %87 : vector<3x24xf32>
    %cst_28 = arith.constant 1.600000e+01 : f32
    %89 = vector.broadcast %cst_28 : f32 to vector<3x24xf32>
    %90 = arith.cmpf oge, %82, %89 : vector<3x24xf32>
    %91 = arith.extui %90 : vector<3x24xi1> to vector<3x24xi32>
    %92 = arith.sitofp %91 : vector<3x24xi32> to vector<3x24xf32>
    %93 = arith.addf %88, %92 : vector<3x24xf32>
    %94 = arith.cmpf oeq, %80, %93 : vector<3x24xf32>
    %95 = arith.extui %94 : vector<3x24xi1> to vector<3x24xi32>
    %96 = arith.sitofp %95 : vector<3x24xi32> to vector<3x24xf32>
    %97 = tpu.iota {dimensions = array<i32: 1>} : vector<1x24xi32>
    %98 = arith.sitofp %97 : vector<1x24xi32> to vector<1x24xf32>
    %cst_29 = arith.constant 0.000000e+00 : f32
    %99 = vector.broadcast %cst_29 : f32 to vector<1x24xf32>
    %cst_30 = arith.constant 8.000000e+00 : f32
    %100 = vector.broadcast %cst_30 : f32 to vector<1x24xf32>
    %101 = arith.cmpf oge, %98, %100 : vector<1x24xf32>
    %102 = arith.extui %101 : vector<1x24xi1> to vector<1x24xi32>
    %103 = arith.sitofp %102 : vector<1x24xi32> to vector<1x24xf32>
    %104 = arith.addf %99, %103 : vector<1x24xf32>
    %cst_31 = arith.constant 1.600000e+01 : f32
    %105 = vector.broadcast %cst_31 : f32 to vector<1x24xf32>
    %106 = arith.cmpf oge, %98, %105 : vector<1x24xf32>
    %107 = arith.extui %106 : vector<1x24xi1> to vector<1x24xi32>
    %108 = arith.sitofp %107 : vector<1x24xi32> to vector<1x24xf32>
    %109 = arith.addf %104, %108 : vector<1x24xf32>
    %cst_32 = arith.constant 8.000000e+00 : f32
    %110 = vector.broadcast %cst_32 : f32 to vector<1x24xf32>
    %111 = arith.mulf %110, %109 : vector<1x24xf32>
    %112 = arith.subf %98, %111 : vector<1x24xf32>
    %113 = vector.extract_strided_slice %27 {offsets = [0, 0], sizes = [8, 24], strides = [1, 1]} : vector<8x96xf32> to vector<8x24xf32>
    %114 = vector.extract_strided_slice %27 {offsets = [0, 24], sizes = [8, 24], strides = [1, 1]} : vector<8x96xf32> to vector<8x24xf32>
    %115 = tpu.concatenate %113, %114 in 0 : vector<8x24xf32>, vector<8x24xf32> -> vector<16x24xf32>
    %cst_33 = arith.constant dense<0xFF800000> : vector<16xf32>
    %116 = vector.multi_reduction <maximumf>, %115, %cst_33 [1] : vector<16x24xf32> to vector<16xf32>
    %117 = vector.shape_cast %116 : vector<16xf32> to vector<16x1xf32>
    %118 = vector.broadcast %117 : vector<16x1xf32> to vector<16x24xf32>
    %119 = arith.subf %115, %118 : vector<16x24xf32>
    %120 = math.exp %119 : vector<16x24xf32>
    %cst_34 = arith.constant dense<0.000000e+00> : vector<16x24xf32>
    %121 = tpu.matmul %120, %56, %cst_34 {dimension_numbers = #tpu.dot_dimension_numbers<[1], [0], [0], [1], [0, 0, 1, 1], [], []>, precision = #tpu.contract_precision<fp32>} : vector<16x24xf32>, vector<24x24xf32>, vector<16x24xf32> -> vector<16x24xf32>
    %122 = arith.divf %120, %121 : vector<16x24xf32>
    %cst_35 = arith.constant 0.991999983 : f32
    %123 = vector.broadcast %cst_35 : f32 to vector<16x24xf32>
    %124 = arith.mulf %123, %122 : vector<16x24xf32>
    %cst_36 = arith.constant 1.000000e-03 : f32
    %125 = vector.broadcast %cst_36 : f32 to vector<16x24xf32>
    %126 = arith.addf %125, %124 : vector<16x24xf32>
    %cst_37 = arith.constant 6.000000e+00 : f32
    %127 = vector.broadcast %cst_37 : f32 to vector<16x24xf32>
    %128 = arith.mulf %127, %126 : vector<16x24xf32>
    %cst_38 = arith.constant dense<0.000000e+00> : vector<16x24xf32>
    %129 = tpu.matmul %128, %60, %cst_38 {dimension_numbers = #tpu.dot_dimension_numbers<[1], [0], [0], [1], [0, 0, 1, 1], [], []>, precision = #tpu.contract_precision<fp32>} : vector<16x24xf32>, vector<24x24xf32>, vector<16x24xf32> -> vector<16x24xf32>
    %130 = vector.extract_strided_slice %128 {offsets = [0, 0], sizes = [8, 24], strides = [1, 1]} : vector<16x24xf32> to vector<8x24xf32>
    %131 = vector.extract_strided_slice %128 {offsets = [8, 0], sizes = [8, 24], strides = [1, 1]} : vector<16x24xf32> to vector<8x24xf32>
    %132 = vector.extract_strided_slice %129 {offsets = [0, 0], sizes = [8, 24], strides = [1, 1]} : vector<16x24xf32> to vector<8x24xf32>
    %133 = vector.extract_strided_slice %129 {offsets = [8, 0], sizes = [8, 24], strides = [1, 1]} : vector<16x24xf32> to vector<8x24xf32>
    %134 = vector.extract_strided_slice %27 {offsets = [0, 48], sizes = [8, 24], strides = [1, 1]} : vector<8x96xf32> to vector<8x24xf32>
    %135 = vector.extract_strided_slice %27 {offsets = [0, 72], sizes = [8, 24], strides = [1, 1]} : vector<8x96xf32> to vector<8x24xf32>
    %136 = tpu.concatenate %134, %135 in 0 : vector<8x24xf32>, vector<8x24xf32> -> vector<16x24xf32>
    %cst_39 = arith.constant 0.000000e+00 : f32
    %137 = vector.broadcast %cst_39 : f32 to vector<16x24xf32>
    %138 = arith.maximumf %136, %137 : vector<16x24xf32>
    %139 = math.absf %136 : vector<16x24xf32>
    %cst_40 = arith.constant 0.000000e+00 : f32
    %140 = vector.broadcast %cst_40 : f32 to vector<16x24xf32>
    %141 = arith.subf %140, %139 : vector<16x24xf32>
    %142 = math.exp %141 : vector<16x24xf32>
    %cst_41 = arith.constant 1.000000e+00 : f32
    %143 = vector.broadcast %cst_41 : f32 to vector<16x24xf32>
    %144 = arith.addf %143, %142 : vector<16x24xf32>
    %145 = math.log %144 : vector<16x24xf32>
    %146 = arith.addf %138, %145 : vector<16x24xf32>
    %cst_42 = arith.constant 1.000000e-03 : f32
    %147 = vector.broadcast %cst_42 : f32 to vector<16x24xf32>
    %148 = arith.addf %147, %146 : vector<16x24xf32>
    %cst_43 = arith.constant 5.000000e-01 : f32
    %149 = vector.broadcast %cst_43 : f32 to vector<1x24xf32>
    %150 = arith.cmpf olt, %112, %149 : vector<1x24xf32>
    %151 = vector.extract_strided_slice %148 {offsets = [0, 0], sizes = [8, 24], strides = [1, 1]} : vector<16x24xf32> to vector<8x24xf32>
    %cst_44 = arith.constant 1.000000e+00 : f32
    %152 = vector.shape_cast %150 : vector<1x24xi1> to vector<1x24xi1>
    %153 = vector.broadcast %152 : vector<1x24xi1> to vector<8x24xi1>
    %154 = vector.broadcast %cst_44 : f32 to vector<8x24xf32>
    %155 = arith.select %153, %154, %151 : vector<8x24xi1>, vector<8x24xf32>
    %cst_45 = arith.constant 6.500000e+00 : f32
    %156 = vector.broadcast %cst_45 : f32 to vector<1x24xf32>
    %157 = arith.cmpf ogt, %112, %156 : vector<1x24xf32>
    %158 = vector.extract_strided_slice %148 {offsets = [8, 0], sizes = [8, 24], strides = [1, 1]} : vector<16x24xf32> to vector<8x24xf32>
    %cst_46 = arith.constant 1.000000e+00 : f32
    %159 = vector.shape_cast %157 : vector<1x24xi1> to vector<1x24xi1>
    %160 = vector.broadcast %159 : vector<1x24xi1> to vector<8x24xi1>
    %161 = vector.broadcast %cst_46 : f32 to vector<8x24xf32>
    %162 = arith.select %160, %161, %158 : vector<8x24xi1>, vector<8x24xf32>
    %163 = vector.extract_strided_slice %0 {offsets = [0, 3], sizes = [8, 3], strides = [1, 1]} : vector<8x6xf32> to vector<8x3xf32>
    %cst_47 = arith.constant 3.000000e+00 : f32
    %164 = vector.broadcast %cst_47 : f32 to vector<8x3xf32>
    %165 = arith.addf %163, %164 : vector<8x3xf32>
    %cst_48 = arith.constant dense<0.000000e+00> : vector<8x24xf32>
    %166 = tpu.matmul %165, %96, %cst_48 {dimension_numbers = #tpu.dot_dimension_numbers<[1], [0], [0], [1], [0, 0, 1, 1], [], []>, precision = #tpu.contract_precision<fp32>} : vector<8x3xf32>, vector<3x24xf32>, vector<8x24xf32> -> vector<8x24xf32>
    %167 = arith.cmpf oge, %166, %132 : vector<8x24xf32>
    %168 = arith.extui %167 : vector<8x24xi1> to vector<8x24xi32>
    %169 = arith.sitofp %168 : vector<8x24xi32> to vector<8x24xf32>
    %cst_49 = arith.constant dense<0.000000e+00> : vector<8x3xf32>
    %170 = tpu.matmul %169, %78, %cst_49 {dimension_numbers = #tpu.dot_dimension_numbers<[1], [0], [0], [1], [0, 0, 1, 1], [], []>, precision = #tpu.contract_precision<fp32>} : vector<8x24xf32>, vector<24x3xf32>, vector<8x3xf32> -> vector<8x3xf32>
    %cst_50 = arith.constant 0.000000e+00 : f32
    %cst_51 = arith.constant 7.000000e+00 : f32
    %171 = vector.broadcast %cst_50 : f32 to vector<8x3xf32>
    %172 = arith.maximumf %171, %170 : vector<8x3xf32>
    %173 = vector.broadcast %cst_51 : f32 to vector<8x3xf32>
    %174 = arith.minimumf %173, %172 : vector<8x3xf32>
    %cst_52 = arith.constant dense<0.000000e+00> : vector<8x24xf32>
    %175 = tpu.matmul %174, %96, %cst_52 {dimension_numbers = #tpu.dot_dimension_numbers<[1], [0], [0], [1], [0, 0, 1, 1], [], []>, precision = #tpu.contract_precision<fp32>} : vector<8x3xf32>, vector<3x24xf32>, vector<8x24xf32> -> vector<8x24xf32>
    %176 = vector.broadcast %112 : vector<1x24xf32> to vector<8x24xf32>
    %177 = arith.subf %175, %176 : vector<8x24xf32>
    %178 = math.absf %177 : vector<8x24xf32>
    %cst_53 = arith.constant 5.000000e-01 : f32
    %179 = vector.broadcast %cst_53 : f32 to vector<8x24xf32>
    %180 = arith.cmpf olt, %178, %179 : vector<8x24xf32>
    %181 = arith.extui %180 : vector<8x24xi1> to vector<8x24xi32>
    %182 = arith.sitofp %181 : vector<8x24xi32> to vector<8x24xf32>
    %183 = arith.mulf %182, %130 : vector<8x24xf32>
    %184 = arith.mulf %182, %132 : vector<8x24xf32>
    %185 = arith.mulf %182, %131 : vector<8x24xf32>
    %186 = arith.mulf %182, %133 : vector<8x24xf32>
    %187 = arith.mulf %182, %155 : vector<8x24xf32>
    %188 = arith.mulf %182, %162 : vector<8x24xf32>
    %189 = tpu.concatenate %183, %184, %185, %186, %187, %188 in 0 : vector<8x24xf32>, vector<8x24xf32>, vector<8x24xf32>, vector<8x24xf32>, vector<8x24xf32>, vector<8x24xf32> -> vector<48x24xf32>
    %cst_54 = arith.constant dense<0.000000e+00> : vector<48x3xf32>
    %190 = tpu.matmul %189, %78, %cst_54 {dimension_numbers = #tpu.dot_dimension_numbers<[1], [0], [0], [1], [0, 0, 1, 1], [], []>, precision = #tpu.contract_precision<fp32>} : vector<48x24xf32>, vector<24x3xf32>, vector<48x3xf32> -> vector<48x3xf32>
    %191 = vector.extract_strided_slice %190 {offsets = [0, 0], sizes = [8, 3], strides = [1, 1]} : vector<48x3xf32> to vector<8x3xf32>
    %192 = vector.extract_strided_slice %190 {offsets = [8, 0], sizes = [8, 3], strides = [1, 1]} : vector<48x3xf32> to vector<8x3xf32>
    %193 = vector.extract_strided_slice %190 {offsets = [16, 0], sizes = [8, 3], strides = [1, 1]} : vector<48x3xf32> to vector<8x3xf32>
    %194 = vector.extract_strided_slice %190 {offsets = [24, 0], sizes = [8, 3], strides = [1, 1]} : vector<48x3xf32> to vector<8x3xf32>
    %195 = vector.extract_strided_slice %190 {offsets = [32, 0], sizes = [8, 3], strides = [1, 1]} : vector<48x3xf32> to vector<8x3xf32>
    %196 = vector.extract_strided_slice %190 {offsets = [40, 0], sizes = [8, 3], strides = [1, 1]} : vector<48x3xf32> to vector<8x3xf32>
    %197 = tpu.reciprocal %191 {approx = true} : vector<8x3xf32> -> vector<8x3xf32>
    %198 = arith.subf %192, %191 : vector<8x3xf32>
    %cst_55 = arith.constant 3.000000e+00 : f32
    %199 = vector.broadcast %cst_55 : f32 to vector<8x3xf32>
    %200 = arith.subf %198, %199 : vector<8x3xf32>
    %201 = arith.subf %194, %193 : vector<8x3xf32>
    %cst_56 = arith.constant 3.000000e+00 : f32
    %202 = vector.broadcast %cst_56 : f32 to vector<8x3xf32>
    %203 = arith.subf %201, %202 : vector<8x3xf32>
    %204 = arith.mulf %193, %197 : vector<8x3xf32>
    %205 = arith.subf %163, %200 : vector<8x3xf32>
    %206 = arith.mulf %205, %197 : vector<8x3xf32>
    %cst_57 = arith.constant 0.000000e+00 : f32
    %cst_58 = arith.constant 1.000000e+00 : f32
    %207 = vector.broadcast %cst_57 : f32 to vector<8x3xf32>
    %208 = arith.maximumf %207, %206 : vector<8x3xf32>
    %209 = vector.broadcast %cst_58 : f32 to vector<8x3xf32>
    %210 = arith.minimumf %209, %208 : vector<8x3xf32>
    %211 = arith.mulf %210, %210 : vector<8x3xf32>
    %cst_59 = arith.constant 1.000000e+00 : f32
    %212 = vector.broadcast %cst_59 : f32 to vector<8x3xf32>
    %213 = arith.subf %212, %210 : vector<8x3xf32>
    %214 = arith.mulf %210, %213 : vector<8x3xf32>
    %215 = arith.mulf %204, %211 : vector<8x3xf32>
    %216 = arith.mulf %195, %214 : vector<8x3xf32>
    %217 = arith.addf %215, %216 : vector<8x3xf32>
    %218 = arith.mulf %193, %217 : vector<8x3xf32>
    %219 = arith.addf %195, %196 : vector<8x3xf32>
    %cst_60 = arith.constant 2.000000e+00 : f32
    %220 = vector.broadcast %cst_60 : f32 to vector<8x3xf32>
    %221 = arith.mulf %220, %204 : vector<8x3xf32>
    %222 = arith.subf %219, %221 : vector<8x3xf32>
    %223 = arith.mulf %222, %214 : vector<8x3xf32>
    %224 = arith.addf %204, %223 : vector<8x3xf32>
    %225 = tpu.reciprocal %224 {approx = true} : vector<8x3xf32> -> vector<8x3xf32>
    %226 = arith.mulf %218, %225 : vector<8x3xf32>
    %227 = arith.addf %203, %226 : vector<8x3xf32>
    %228 = arith.mulf %204, %204 : vector<8x3xf32>
    %229 = arith.mulf %196, %211 : vector<8x3xf32>
    %cst_61 = arith.constant 2.000000e+00 : f32
    %230 = vector.broadcast %cst_61 : f32 to vector<8x3xf32>
    %231 = arith.mulf %230, %204 : vector<8x3xf32>
    %232 = arith.mulf %231, %214 : vector<8x3xf32>
    %233 = arith.addf %229, %232 : vector<8x3xf32>
    %cst_62 = arith.constant 1.000000e+00 : f32
    %234 = vector.broadcast %cst_62 : f32 to vector<8x3xf32>
    %235 = arith.subf %234, %210 : vector<8x3xf32>
    %236 = arith.mulf %195, %235 : vector<8x3xf32>
    %cst_63 = arith.constant 1.000000e+00 : f32
    %237 = vector.broadcast %cst_63 : f32 to vector<8x3xf32>
    %238 = arith.subf %237, %210 : vector<8x3xf32>
    %239 = arith.mulf %236, %238 : vector<8x3xf32>
    %240 = arith.addf %233, %239 : vector<8x3xf32>
    %241 = arith.mulf %228, %240 : vector<8x3xf32>
    %242 = arith.mulf %224, %224 : vector<8x3xf32>
    %cst_64 = arith.constant 1.000000e-30 : f32
    %243 = vector.broadcast %cst_64 : f32 to vector<8x3xf32>
    %244 = arith.maximumf %242, %243 : vector<8x3xf32>
    %245 = tpu.reciprocal %244 {approx = true} : vector<8x3xf32> -> vector<8x3xf32>
    %246 = arith.mulf %241, %245 : vector<8x3xf32>
    %cst_65 = arith.constant 1.000000e-30 : f32
    %247 = vector.broadcast %cst_65 : f32 to vector<8x3xf32>
    %248 = arith.maximumf %246, %247 : vector<8x3xf32>
    %249 = math.log %248 : vector<8x3xf32>
    %cst_66 = arith.constant -3.000000e+00 : f32
    %250 = vector.broadcast %cst_66 : f32 to vector<8x3xf32>
    %251 = arith.cmpf oge, %163, %250 : vector<8x3xf32>
    %cst_67 = arith.constant 3.000000e+00 : f32
    %252 = vector.broadcast %cst_67 : f32 to vector<8x3xf32>
    %253 = arith.cmpf ole, %163, %252 : vector<8x3xf32>
    %254 = arith.andi %251, %253 : vector<8x3xi1>
    %255 = arith.select %254, %227, %163 : vector<8x3xi1>, vector<8x3xf32>
    %cst_68 = arith.constant 0.000000e+00 : f32
    %256 = vector.broadcast %cst_68 : f32 to vector<8x3xf32>
    %257 = arith.select %254, %249, %256 : vector<8x3xi1>, vector<8x3xf32>
    %cst_69 = arith.constant -5.000000e-01 : f32
    %258 = vector.broadcast %cst_69 : f32 to vector<8x3xf32>
    %259 = arith.mulf %258, %18 : vector<8x3xf32>
    %260 = arith.mulf %259, %18 : vector<8x3xf32>
    %cst_70 = arith.constant -5.000000e-01 : f32
    %261 = vector.broadcast %cst_70 : f32 to vector<8x3xf32>
    %262 = arith.mulf %261, %255 : vector<8x3xf32>
    %263 = arith.mulf %262, %255 : vector<8x3xf32>
    %264 = tpu.concatenate %260, %263, %257 in 1 : vector<8x3xf32>, vector<8x3xf32>, vector<8x3xf32> -> vector<8x9xf32>
    %cst_71 = arith.constant dense<0.000000e+00> : vector<8xf32>
    %265 = vector.multi_reduction <add>, %264, %cst_71 [1] : vector<8x9xf32> to vector<8xf32>
    %266 = vector.shape_cast %265 : vector<8xf32> to vector<8x1xf32>
    %cst_72 = arith.constant 6.28318548 : f32
    %267 = math.log %cst_72 : f32
    %cst_73 = arith.constant 3.000000e+00 : f32
    %268 = arith.mulf %cst_73, %267 : f32
    %269 = vector.broadcast %268 : f32 to vector<8x1xf32>
    %270 = arith.subf %266, %269 : vector<8x1xf32>
    %271 = vector.shape_cast %270 : vector<8x1xf32> to vector<8x1xf32>
    %272 = vector.broadcast %271 : vector<8x1xf32> to vector<8x128xf32>
    %c0_74 = arith.constant 0 : index
    %c0_75 = arith.constant 0 : index
    %273 = vector.load %arg3[%c0_74, %c0_75] : memref<8x128xf32, #tpu.memory_space<vmem>>, vector<8x128xf32>
    tpu.vector_store %arg3[%c0_74, %c0_75], %272 {strides = array<i32>} : memref<8x128xf32, #tpu.memory_space<vmem>>, vector<8x128xf32>,
    return
  }
}

</mosaic_0001>

<llo_original>
// kernel: tpu_custom_call.1
$region0: #{tpu_custom_call.1}
  #allocation0 [shape = 'u32[]', space=smem, size = 0x4, offset = 0x4, fixed_abs, tag = 'smem constant byte address 0x4 - core index']
  #allocation1 [shape = 'u32[144,128]{1,0:T(1,128)}', space=vmem, size = 0x12000, scoped, tag = 'internal scratch']
  %s0 = inlined_call_operand.hbm [shape: f32[8,6], index: 0, kind: input, shape index: {}]
  %s1 = inlined_call_operand.hbm [shape: f32[8,16], index: 1, kind: input, shape index: {}]
  %s2 = inlined_call_operand.hbm [shape: f32[128,128], index: 2, kind: input, shape index: {}]
  %s3 = inlined_call_operand.hbm [shape: f32[8,128], index: 3, kind: output, shape index: {}]
  %s4 = sld [smem:[#allocation0]]
  $region34: #{tpu_custom_call.1} parent=0
    _
  %s6 = ssub.s32 1, %s4
  %s7 = scalar_select 0, %s6, %s4
  $region1: #{tpu_custom_call.1} parent=0
    #allocation2 [shape = 'u8[4096]{0}', space=vmem, size = 0x1000, scoped, tag = 'input window, operand 0, single buffered']
    #allocation3 [shape = 's32[1]{0}', space=sflag, size = 0x4, scoped, tag = 'scoped memory for tpu_custom_call.1']
    #allocation4 [shape = 's32[1]{0}', space=sflag, size = 0x4, scoped, tag = 'scoped memory for tpu_custom_call.1']
    #allocation5 [shape = 'u8[4096]{0}', space=vmem, size = 0x1000, scoped, tag = 'input window, operand 1, single buffered']
    #allocation6 [shape = 's32[1]{0}', space=sflag, size = 0x4, scoped, tag = 'scoped memory for tpu_custom_call.1']
    #allocation7 [shape = 'u8[65536]{0}', space=vmem, size = 0x10000, scoped, tag = 'input window, operand 2, single buffered']
    #allocation8 [shape = 'u8[4096]{0}', space=vmem, size = 0x1000, scoped, tag = 'output window, operand 0, single buffered']
    %8 = vsyncpa [#allocation3], 0
    %9 = vsyncpa [#allocation6], 0
    %10 = vsyncpa [#allocation4], 0
    // Predicated region
    $region2: #{tpu_custom_call.1} parent=1 // pred_check
      _
    $region3: #{tpu_custom_call.1} parent=1 // pred_check_branch
      %12 = sbr.rel (0) target = $region5
    $region4: #{tpu_custom_call.1} parent=1 // pred_region
      %s14 = ssub.s32 128, 128
      %15 = vsyncadd [#allocation3], %s14
      %s17 = sshll.u32 [#allocation2], 4
      %s18 = int_to_ptr.vmem [resolvable:$true] %s17
      %20 = dma.hbm_to_vmem [thread:$0]  %s0, 128, %s18, [#allocation3]
    $region5: #{tpu_custom_call.1} parent=1 // pred_fallthru
      _
    // Predicated region
    $region6: #{tpu_custom_call.1} parent=1 // pred_check
      _
    $region7: #{tpu_custom_call.1} parent=1 // pred_check_branch
      %22 = sbr.rel (0) target = $region9
    $region8: #{tpu_custom_call.1} parent=1 // pred_region
      %s24 = ssub.s32 128, 128
      %25 = vsyncadd [#allocation6], %s24
      %s27 = sshll.u32 [#allocation5], 4
      %s28 = int_to_ptr.vmem [resolvable:$true] %s27
      %30 = dma.hbm_to_vmem [thread:$0]  %s1, 128, %s28, [#allocation6]
    $region9: #{tpu_custom_call.1} parent=1 // pred_fallthru
      _
    // Predicated region
    $region10: #{tpu_custom_call.1} parent=1 // pred_check
      _
    $region11: #{tpu_custom_call.1} parent=1 // pred_check_branch
      %32 = sbr.rel (0) target = $region13
    $region12: #{tpu_custom_call.1} parent=1 // pred_region
      %s34 = ssub.s32 2048, 2048
      %35 = vsyncadd [#allocation6], %s34
      %s36 = sshll.u32 [#allocation7], 4
      %s37 = int_to_ptr.vmem [resolvable:$true] %s36
      %42 = dma.hbm_to_vmem [thread:$0]  %s2, 2048, %s37, [#allocation6], 128, 128, 8
    $region13: #{tpu_custom_call.1} parent=1 // pred_fallthru
      _
    // Predicated region
    $region14: #{tpu_custom_call.1} parent=1 // pred_check
      _
    $region15: #{tpu_custom_call.1} parent=1 // pred_check_branch
      %44 = sbr.rel (0) target = $region17
    $region16: #{tpu_custom_call.1} parent=1 // pred_region
      %45 = dma.done [#allocation3], 128
    $region17: #{tpu_custom_call.1} parent=1 // pred_fallthru
      _
    // Predicated region
    $region18: #{tpu_custom_call.1} parent=1 // pred_check
      _
    $region19: #{tpu_custom_call.1} parent=1 // pred_check_branch
      %47 = sbr.rel (0) target = $region21
    $region20: #{tpu_custom_call.1} parent=1 // pred_region
      %48 = dma.done [#allocation6], 128
    $region21: #{tpu_custom_call.1} parent=1 // pred_fallthru
      _
    // Predicated region
    $region22: #{tpu_custom_call.1} parent=1 // pred_check
      _
    $region23: #{tpu_custom_call.1} parent=1 // pred_check_branch
      %50 = sbr.rel (0) target = $region25
    $region24: #{tpu_custom_call.1} parent=1 // pred_region
      %51 = dma.done [#allocation6], 2048
    $region25: #{tpu_custom_call.1} parent=1 // pred_fallthru
      _
    %v52 = vld [vmem:[#allocation2] sm:$0xff]
    %v53 = vld [vmem:[#allocation5] sm:$0xff]
    %v54 = vld [vmem:[#allocation7] sm:$0xff]
    %v55 = vld [vmem:[#allocation7 + $0x8] sm:$0xff]
    %v56 = vld [vmem:[#allocation7 + $0x10] sm:$0x1]
    %v57 = vld [vmem:[#allocation7 + $0x18] sm:$0xff]
    %v58 = vld [vmem:[#allocation7 + $0x20] sm:$0xff]
    %v59 = vld [vmem:[#allocation7 + $0x28] sm:$0xff]
    %v60 = vld [vmem:[#allocation7 + $0x30] sm:$0xff]
    %v61 = vld [vmem:[#allocation7 + $0x38] sm:$0x1]
    %v62 = vld [vmem:[#allocation7 + $0x40] sm:$0xff]
    %v63 = vld [vmem:[#allocation7 + $0x48] sm:$0x7]
    %v64 = vld [vmem:[#allocation7 + $0x50] sm:$0x1]
    %v65 = vld [vmem:[#allocation7 + $0x58] sm:$0xff]
    %v66 = vld [vmem:[#allocation7 + $0x60] sm:$0xff]
    %v67 = vld [vmem:[#allocation7 + $0x68] sm:$0xff]
    %v68 = vld [vmem:[#allocation7 + $0x70] sm:$0xff]
    %v69 = vld [vmem:[#allocation7 + $0x78] sm:$0x1]
    %v70 = vlaneseq
    %v71 = vshrl.u32 %v70, 7
    %v72 = vsub.s32 0, %v71
    %v73 = vrot.slane %v56, %v72
    %vm74 = vcmask 130048
    %v76 = vsel %vm74, %v53, 0
    %78 = vmatprep.subr.mxu0 0.0
    %79 = vmatpush1.msra.mxu0 0.0
    %80 = vmatprep.subr.mxu0 0.0
    %81 = vmatpush1.msra.mxu0 0.0
    %82 = vmatprep.subr.mxu0 0.0
    %83 = vmatpush1.msra.mxu0 0.0
    %84 = vmatprep.subr.mxu0 0.0
    %85 = vmatpush1.msra.mxu0 0.0
    %86 = vmatprep.subr.mxu0 0.0
    %87 = vmatpush1.msra.mxu0 0.0
    %88 = vmatprep.subr.mxu0 0.0
    %89 = vmatpush1.msra.mxu0 0.0
    %90 = vmatprep.subr.mxu0 0.0
    %91 = vmatpush1.msra.mxu0 0.0
    %92 = vmatprep.subr.mxu0 0.0
    %93 = vmatpush1.msra.mxu0 0.0
    %94 = vmatprep.subr.mxu0 0.0
    %95 = vmatpush1.msra.mxu0 0.0
    %96 = vmatprep.subr.mxu0 0.0
    %97 = vmatpush1.msra.mxu0 0.0
    %98 = vmatprep.subr.mxu0 0.0
    %99 = vmatpush1.msra.mxu0 0.0
    %100 = vmatprep.subr.mxu0 0.0
    %101 = vmatpush1.msra.mxu0 0.0
    %102 = vmatprep.subr.mxu0 0.0
    %103 = vmatpush1.msra.mxu0 0.0
    %104 = vmatprep.subr.mxu0 0.0
    %105 = vmatpush1.msra.mxu0 0.0
    %106 = vmatprep.subr.mxu0 0.0
    %v107 = vand.u32 %v55, 4294901760
    %108 = vmatpush1.msra.mxu0 %v107
    %109 = vmatprep.subr.mxu0 0.0
    %v110 = vand.u32 %v54, 4294901760
    %111 = vmatpush1.msra.mxu0 %v110
    %112 = vmatprep.subr.mxu0 0.0
    %113 = vmatpush2.msra.mxu0 0.0
    %114 = vmatprep.subr.mxu0 0.0
    %115 = vmatpush2.msra.mxu0 0.0
    %116 = vmatprep.subr.mxu0 0.0
    %117 = vmatpush2.msra.mxu0 0.0
    %118 = vmatprep.subr.mxu0 0.0
    %119 = vmatpush2.msra.mxu0 0.0
    %120 = vmatprep.subr.mxu0 0.0
    %121 = vmatpush2.msra.mxu0 0.0
    %122 = vmatprep.subr.mxu0 0.0
    %123 = vmatpush2.msra.mxu0 0.0
    %124 = vmatprep.subr.mxu0 0.0
    %125 = vmatpush2.msra.mxu0 0.0
    %126 = vmatprep.subr.mxu0 0.0
    %127 = vmatpush2.msra.mxu0 0.0
    %128 = vmatprep.subr.mxu0 0.0
    %129 = vmatpush2.msra.mxu0 0.0
    %130 = vmatprep.subr.mxu0 0.0
    %131 = vmatpush2.msra.mxu0 0.0
    %132 = vmatprep.subr.mxu0 0.0
    %133 = vmatpush2.msra.mxu0 0.0
    %134 = vmatprep.subr.mxu0 0.0
    %135 = vmatpush2.msra.mxu0 0.0
    %136 = vmatprep.subr.mxu0 0.0
    %137 = vmatpush2.msra.mxu0 0.0
    %138 = vmatprep.subr.mxu0 0.0
    %139 = vmatpush2.msra.mxu0 0.0
    %140 = vmatprep.subr.mxu0 0.0
    %141 = vmatpush2.msra.mxu0 0.0
    %142 = vmatprep.subr.mxu0 0.0
    %143 = vmatpush2.msra.mxu0 0.0
    %144 = vmatprep.mubr.f32.mxu0 0.0
    %v145 = vand.u32 %v76, 4294901760
    %v146 = vsub.f32 %v76, %v145
    %v147 = vand.u32 %v146, 4294901760
    %v148 = vsub.f32 %v146, %v147
    %v149 = vand.u32 %v148, 4294901760
    %150 = vmatmul.mubr.f32.gmra.mxu0 %v149
    %v151 = vpop.f32.mrf.mxu0
    %v152 = vadd.f32 %v73, %v151
    %v153 = vpop.f32.mrf.mxu0
    %154 = vdwg.mxu0
    %155 = vmatprep.subr.mxu0 0.0
    %156 = vmatpush1.msra.mxu0 0.0
    %157 = vmatprep.subr.mxu0 0.0
    %158 = vmatpush1.msra.mxu0 0.0
    %159 = vmatprep.subr.mxu0 0.0
    %160 = vmatpush1.msra.mxu0 0.0
    %161 = vmatprep.subr.mxu0 0.0
    %162 = vmatpush1.msra.mxu0 0.0
    %163 = vmatprep.subr.mxu0 0.0
    %164 = vmatpush1.msra.mxu0 0.0
    %165 = vmatprep.subr.mxu0 0.0
    %166 = vmatpush1.msra.mxu0 0.0
    %167 = vmatprep.subr.mxu0 0.0
    %168 = vmatpush1.msra.mxu0 0.0
    %169 = vmatprep.subr.mxu0 0.0
    %170 = vmatpush1.msra.mxu0 0.0
    %171 = vmatprep.subr.mxu0 0.0
    %172 = vmatpush1.msra.mxu0 0.0
    %173 = vmatprep.subr.mxu0 0.0
    %174 = vmatpush1.msra.mxu0 0.0
    %175 = vmatprep.subr.mxu0 0.0
    %176 = vmatpush1.msra.mxu0 0.0
    %177 = vmatprep.subr.mxu0 0.0
    %178 = vmatpush1.msra.mxu0 0.0
    %179 = vmatprep.subr.mxu0 0.0
    %180 = vmatpush1.msra.mxu0 0.0
    %181 = vmatprep.subr.mxu0 0.0
    %182 = vmatpush1.msra.mxu0 0.0
    %183 = vmatprep.subr.mxu0 0.0
    %v184 = vand.u32 %v55, 4294901760
    %v185 = vsub.f32 %v55, %v184
    %v186 = vand.u32 %v185, 4294901760
    %v187 = vsub.f32 %v185, %v186
    %v188 = vand.u32 %v187, 4294901760
    %189 = vmatpush1.msra.mxu0 %v188
    %190 = vmatprep.subr.mxu0 0.0
    %v191 = vand.u32 %v54, 4294901760
    %v192 = vsub.f32 %v54, %v191
    %v193 = vand.u32 %v192, 4294901760
    %v194 = vsub.f32 %v192, %v193
    %v195 = vand.u32 %v194, 4294901760
    %196 = vmatpush1.msra.mxu0 %v195
    %197 = vmatprep.subr.mxu0 0.0
    %198 = vmatpush2.msra.mxu0 0.0
    %199 = vmatprep.subr.mxu0 0.0
    %200 = vmatpush2.msra.mxu0 0.0
    %201 = vmatprep.subr.mxu0 0.0
    %202 = vmatpush2.msra.mxu0 0.0
    %203 = vmatprep.subr.mxu0 0.0
    %204 = vmatpush2.msra.mxu0 0.0
    %205 = vmatprep.subr.mxu0 0.0
    %206 = vmatpush2.msra.mxu0 0.0
    %207 = vmatprep.subr.mxu0 0.0
    %208 = vmatpush2.msra.mxu0 0.0
    %209 = vmatprep.subr.mxu0 0.0
    %210 = vmatpush2.msra.mxu0 0.0
    %211 = vmatprep.subr.mxu0 0.0
    %212 = vmatpush2.msra.mxu0 0.0
    %213 = vmatprep.subr.mxu0 0.0
    %214 = vmatpush2.msra.mxu0 0.0
    %215 = vmatprep.subr.mxu0 0.0
    %216 = vmatpush2.msra.mxu0 0.0
    %217 = vmatprep.subr.mxu0 0.0
    %218 = vmatpush2.msra.mxu0 0.0
    %219 = vmatprep.subr.mxu0 0.0
    %220 = vmatpush2.msra.mxu0 0.0
    %221 = vmatprep.subr.mxu0 0.0
    %222 = vmatpush2.msra.mxu0 0.0
    %223 = vmatprep.subr.mxu0 0.0
    %224 = vmatpush2.msra.mxu0 0.0
    %225 = vmatprep.subr.mxu0 0.0
    %226 = vmatpush2.msra.mxu0 0.0
    %227 = vmatprep.subr.mxu0 0.0
    %228 = vmatpush2.msra.mxu0 0.0
    %229 = vmatprep.mubr.f32.mxu0 0.0
    %v230 = vand.u32 %v76, 4294901760
    %231 = vmatmul.mubr.f32.gmra.mxu0 %v230
    %v232 = vpop.f32.mrf.mxu0
    %v233 = vadd.f32 %v152, %v232
    %v234 = vpop.f32.mrf.mxu0
    %235 = vdwg.mxu0
    %236 = vmatprep.subr.mxu0 0.0
    %237 = vmatpush1.msra.mxu0 0.0
    %238 = vmatprep.subr.mxu0 0.0
    %239 = vmatpush1.msra.mxu0 0.0
    %240 = vmatprep.subr.mxu0 0.0
    %241 = vmatpush1.msra.mxu0 0.0
    %242 = vmatprep.subr.mxu0 0.0
    %243 = vmatpush1.msra.mxu0 0.0
    %244 = vmatprep.subr.mxu0 0.0
    %245 = vmatpush1.msra.mxu0 0.0
    %246 = vmatprep.subr.mxu0 0.0
    %247 = vmatpush1.msra.mxu0 0.0
    %248 = vmatprep.subr.mxu0 0.0
    %249 = vmatpush1.msra.mxu0 0.0
    %250 = vmatprep.subr.mxu0 0.0
    %251 = vmatpush1.msra.mxu0 0.0
    %252 = vmatprep.subr.mxu0 0.0
    %253 = vmatpush1.msra.mxu0 0.0
    %254 = vmatprep.subr.mxu0 0.0
    %255 = vmatpush1.msra.mxu0 0.0
    %256 = vmatprep.subr.mxu0 0.0
    %257 = vmatpush1.msra.mxu0 0.0
    %258 = vmatprep.subr.mxu0 0.0
    %259 = vmatpush1.msra.mxu0 0.0
    %260 = vmatprep.subr.mxu0 0.0
    %261 = vmatpush1.msra.mxu0 0.0
    %262 = vmatprep.subr.mxu0 0.0
    %263 = vmatpush1.msra.mxu0 0.0
    %264 = vmatprep.subr.mxu0 0.0
    %v265 = vand.u32 %v55, 4294901760
    %v266 = vsub.f32 %v55, %v265
    %267 = vmatpush1.msra.mxu0 %v266
    %268 = vmatprep.subr.mxu0 0.0
    %v269 = vand.u32 %v54, 4294901760
    %v270 = vsub.f32 %v54, %v269
    %271 = vmatpush1.msra.mxu0 %v270
    %272 = vmatprep.subr.mxu0 0.0
    %273 = vmatpush2.msra.mxu0 0.0
    %274 = vmatprep.subr.mxu0 0.0
    %275 = vmatpush2.msra.mxu0 0.0
    %276 = vmatprep.subr.mxu0 0.0
    %277 = vmatpush2.msra.mxu0 0.0
    %278 = vmatprep.subr.mxu0 0.0
    %279 = vmatpush2.msra.mxu0 0.0
    %280 = vmatprep.subr.mxu0 0.0
    %281 = vmatpush2.msra.mxu0 0.0
    %282 = vmatprep.subr.mxu0 0.0
    %283 = vmatpush2.msra.mxu0 0.0
    %284 = vmatprep.subr.mxu0 0.0
    %285 = vmatpush2.msra.mxu0 0.0
    %286 = vmatprep.subr.mxu0 0.0
    %287 = vmatpush2.msra.mxu0 0.0
    %288 = vmatprep.subr.mxu0 0.0
    %289 = vmatpush2.msra.mxu0 0.0
    %290 = vmatprep.subr.mxu0 0.0
    %291 = vmatpush2.msra.mxu0 0.0
    %292 = vmatprep.subr.mxu0 0.0
    %293 = vmatpush2.msra.mxu0 0.0
    %294 = vmatprep.subr.mxu0 0.0
    %295 = vmatpush2.msra.mxu0 0.0
    %296 = vmatprep.subr.mxu0 0.0
    %297 = vmatpush2.msra.mxu0 0.0
    %298 = vmatprep.subr.mxu0 0.0
    %299 = vmatpush2.msra.mxu0 0.0
    %300 = vmatprep.subr.mxu0 0.0
    %301 = vmatpush2.msra.mxu0 0.0
    %302 = vmatprep.subr.mxu0 0.0
    %303 = vmatpush2.msra.mxu0 0.0
    %304 = vmatprep.mubr.f32.mxu0 0.0
    %v305 = vand.u32 %v76, 4294901760
    %v306 = vsub.f32 %v76, %v305
    %307 = vmatmul.mubr.f32.gmra.mxu0 %v306
    %v308 = vpop.f32.mrf.mxu0
    %v309 = vadd.f32 %v233, %v308
    %v310 = vpop.f32.mrf.mxu0
    %311 = vdwg.mxu0
    %312 = vmatprep.subr.mxu0 0.0
    %313 = vmatpush1.msra.mxu0 0.0
    %314 = vmatprep.subr.mxu0 0.0
    %315 = vmatpush1.msra.mxu0 0.0
    %316 = vmatprep.subr.mxu0 0.0
    %317 = vmatpush1.msra.mxu0 0.0
    %318 = vmatprep.subr.mxu0 0.0
    %319 = vmatpush1.msra.mxu0 0.0
    %320 = vmatprep.subr.mxu0 0.0
    %321 = vmatpush1.msra.mxu0 0.0
    %322 = vmatprep.subr.mxu0 0.0
    %323 = vmatpush1.msra.mxu0 0.0
    %324 = vmatprep.subr.mxu0 0.0
    %325 = vmatpush1.msra.mxu0 0.0
    %326 = vmatprep.subr.mxu0 0.0
    %327 = vmatpush1.msra.mxu0 0.0
    %328 = vmatprep.subr.mxu0 0.0
    %329 = vmatpush1.msra.mxu0 0.0
    %330 = vmatprep.subr.mxu0 0.0
    %331 = vmatpush1.msra.mxu0 0.0
    %332 = vmatprep.subr.mxu0 0.0
    %333 = vmatpush1.msra.mxu0 0.0
    %334 = vmatprep.subr.mxu0 0.0
    %335 = vmatpush1.msra.mxu0 0.0
    %336 = vmatprep.subr.mxu0 0.0
    %337 = vmatpush1.msra.mxu0 0.0
    %338 = vmatprep.subr.mxu0 0.0
    %339 = vmatpush1.msra.mxu0 0.0
    %340 = vmatprep.subr.mxu0 0.0
    %v341 = vand.u32 %v55, 4294901760
    %342 = vmatpush1.msra.mxu0 %v341
    %343 = vmatprep.subr.mxu0 0.0
    %v344 = vand.u32 %v54, 4294901760
    %345 = vmatpush1.msra.mxu0 %v344
    %346 = vmatprep.subr.mxu0 0.0
    %347 = vmatpush2.msra.mxu0 0.0
    %348 = vmatprep.subr.mxu0 0.0
    %349 = vmatpush2.msra.mxu0 0.0
    %350 = vmatprep.subr.mxu0 0.0
    %351 = vmatpush2.msra.mxu0 0.0
    %352 = vmatprep.subr.mxu0 0.0
    %353 = vmatpush2.msra.mxu0 0.0
    %354 = vmatprep.subr.mxu0 0.0
    %355 = vmatpush2.msra.mxu0 0.0
    %356 = vmatprep.subr.mxu0 0.0
    %357 = vmatpush2.msra.mxu0 0.0
    %358 = vmatprep.subr.mxu0 0.0
    %359 = vmatpush2.msra.mxu0 0.0
    %360 = vmatprep.subr.mxu0 0.0
    %361 = vmatpush2.msra.mxu0 0.0
    %362 = vmatprep.subr.mxu0 0.0
    %363 = vmatpush2.msra.mxu0 0.0
    %364 = vmatprep.subr.mxu0 0.0
    %365 = vmatpush2.msra.mxu0 0.0
    %366 = vmatprep.subr.mxu0 0.0
    %367 = vmatpush2.msra.mxu0 0.0
    %368 = vmatprep.subr.mxu0 0.0
    %369 = vmatpush2.msra.mxu0 0.0
    %370 = vmatprep.subr.mxu0 0.0
    %371 = vmatpush2.msra.mxu0 0.0
    %372 = vmatprep.subr.mxu0 0.0
    %373 = vmatpush2.msra.mxu0 0.0
    %374 = vmatprep.subr.mxu0 0.0
    %375 = vmatpush2.msra.mxu0 0.0
    %376 = vmatprep.subr.mxu0 0.0
    %377 = vmatpush2.msra.mxu0 0.0
    %378 = vmatprep.mubr.f32.mxu0 0.0
    %v379 = vand.u32 %v76, 4294901760
    %v380 = vsub.f32 %v76, %v379
    %v381 = vand.u32 %v380, 4294901760
    %382 = vmatmul.mubr.f32.gmra.mxu0 %v381
    %v383 = vpop.f32.mrf.mxu0
    %v384 = vadd.f32 %v309, %v383
    %v385 = vpop.f32.mrf.mxu0
    %386 = vdwg.mxu0
    %387 = vmatprep.subr.mxu0 0.0
    %388 = vmatpush1.msra.mxu0 0.0
    %389 = vmatprep.subr.mxu0 0.0
    %390 = vmatpush1.msra.mxu0 0.0
    %391 = vmatprep.subr.mxu0 0.0
    %392 = vmatpush1.msra.mxu0 0.0
    %393 = vmatprep.subr.mxu0 0.0
    %394 = vmatpush1.msra.mxu0 0.0
    %395 = vmatprep.subr.mxu0 0.0
    %396 = vmatpush1.msra.mxu0 0.0
    %397 = vmatprep.subr.mxu0 0.0
    %398 = vmatpush1.msra.mxu0 0.0
    %399 = vmatprep.subr.mxu0 0.0
    %400 = vmatpush1.msra.mxu0 0.0
    %401 = vmatprep.subr.mxu0 0.0
    %402 = vmatpush1.msra.mxu0 0.0
    %403 = vmatprep.subr.mxu0 0.0
    %404 = vmatpush1.msra.mxu0 0.0
    %405 = vmatprep.subr.mxu0 0.0
    %406 = vmatpush1.msra.mxu0 0.0
    %407 = vmatprep.subr.mxu0 0.0
    %408 = vmatpush1.msra.mxu0 0.0
    %409 = vmatprep.subr.mxu0 0.0
    %410 = vmatpush1.msra.mxu0 0.0
    %411 = vmatprep.subr.mxu0 0.0
    %412 = vmatpush1.msra.mxu0 0.0
    %413 = vmatprep.subr.mxu0 0.0
    %414 = vmatpush1.msra.mxu0 0.0
    %415 = vmatprep.subr.mxu0 0.0
    %v416 = vand.u32 %v55, 4294901760
    %v417 = vsub.f32 %v55, %v416
    %v418 = vand.u32 %v417, 4294901760
    %419 = vmatpush1.msra.mxu0 %v418
    %420 = vmatprep.subr.mxu0 0.0
    %v421 = vand.u32 %v54, 4294901760
    %v422 = vsub.f32 %v54, %v421
    %v423 = vand.u32 %v422, 4294901760
    %424 = vmatpush1.msra.mxu0 %v423
    %425 = vmatprep.subr.mxu0 0.0
    %426 = vmatpush2.msra.mxu0 0.0
    %427 = vmatprep.subr.mxu0 0.0
    %428 = vmatpush2.msra.mxu0 0.0
    %429 = vmatprep.subr.mxu0 0.0
    %430 = vmatpush2.msra.mxu0 0.0
    %431 = vmatprep.subr.mxu0 0.0
    %432 = vmatpush2.msra.mxu0 0.0
    %433 = vmatprep.subr.mxu0 0.0
    %434 = vmatpush2.msra.mxu0 0.0
    %435 = vmatprep.subr.mxu0 0.0
    %436 = vmatpush2.msra.mxu0 0.0
    %437 = vmatprep.subr.mxu0 0.0
    %438 = vmatpush2.msra.mxu0 0.0
    %439 = vmatprep.subr.mxu0 0.0
    %440 = vmatpush2.msra.mxu0 0.0
    %441 = vmatprep.subr.mxu0 0.0
    %442 = vmatpush2.msra.mxu0 0.0
    %443 = vmatprep.subr.mxu0 0.0
    %444 = vmatpush2.msra.mxu0 0.0
    %445 = vmatprep.subr.mxu0 0.0
    %446 = vmatpush2.msra.mxu0 0.0
    %447 = vmatprep.subr.mxu0 0.0
    %448 = vmatpush2.msra.mxu0 0.0
    %449 = vmatprep.subr.mxu0 0.0
    %450 = vmatpush2.msra.mxu0 0.0
    %451 = vmatprep.subr.mxu0 0.0
    %452 = vmatpush2.msra.mxu0 0.0
    %453 = vmatprep.subr.mxu0 0.0
    %454 = vmatpush2.msra.mxu0 0.0
    %455 = vmatprep.subr.mxu0 0.0
    %456 = vmatpush2.msra.mxu0 0.0
    %457 = vmatprep.mubr.f32.mxu0 0.0
    %v458 = vand.u32 %v76, 4294901760
    %459 = vmatmul.mubr.f32.gmra.mxu0 %v458
    %v460 = vpop.f32.mrf.mxu0
    %v461 = vadd.f32 %v384, %v460
    %v462 = vpop.f32.mrf.mxu0
    %463 = vdwg.mxu0
    %464 = vmatprep.subr.mxu0 0.0
    %465 = vmatpush1.msra.mxu0 0.0
    %466 = vmatprep.subr.mxu0 0.0
    %467 = vmatpush1.msra.mxu0 0.0
    %468 = vmatprep.subr.mxu0 0.0
    %469 = vmatpush1.msra.mxu0 0.0
    %470 = vmatprep.subr.mxu0 0.0
    %471 = vmatpush1.msra.mxu0 0.0
    %472 = vmatprep.subr.mxu0 0.0
    %473 = vmatpush1.msra.mxu0 0.0
    %474 = vmatprep.subr.mxu0 0.0
    %475 = vmatpush1.msra.mxu0 0.0
    %476 = vmatprep.subr.mxu0 0.0
    %477 = vmatpush1.msra.mxu0 0.0
    %478 = vmatprep.subr.mxu0 0.0
    %479 = vmatpush1.msra.mxu0 0.0
    %480 = vmatprep.subr.mxu0 0.0
    %481 = vmatpush1.msra.mxu0 0.0
    %482 = vmatprep.subr.mxu0 0.0
    %483 = vmatpush1.msra.mxu0 0.0
    %484 = vmatprep.subr.mxu0 0.0
    %485 = vmatpush1.msra.mxu0 0.0
    %486 = vmatprep.subr.mxu0 0.0
    %487 = vmatpush1.msra.mxu0 0.0
    %488 = vmatprep.subr.mxu0 0.0
    %489 = vmatpush1.msra.mxu0 0.0
    %490 = vmatprep.subr.mxu0 0.0
    %491 = vmatpush1.msra.mxu0 0.0
    %492 = vmatprep.subr.mxu0 0.0
    %v493 = vand.u32 %v55, 4294901760
    %494 = vmatpush1.msra.mxu0 %v493
    %495 = vmatprep.subr.mxu0 0.0
    %v496 = vand.u32 %v54, 4294901760
    %497 = vmatpush1.msra.mxu0 %v496
    %498 = vmatprep.subr.mxu0 0.0
    %499 = vmatpush2.msra.mxu0 0.0
    %500 = vmatprep.subr.mxu0 0.0
    %501 = vmatpush2.msra.mxu0 0.0
    %502 = vmatprep.subr.mxu0 0.0
    %503 = vmatpush2.msra.mxu0 0.0
    %504 = vmatprep.subr.mxu0 0.0
    %505 = vmatpush2.msra.mxu0 0.0
    %506 = vmatprep.subr.mxu0 0.0
    %507 = vmatpush2.msra.mxu0 0.0
    %508 = vmatprep.subr.mxu0 0.0
    %509 = vmatpush2.msra.mxu0 0.0
    %510 = vmatprep.subr.mxu0 0.0
    %511 = vmatpush2.msra.mxu0 0.0
    %512 = vmatprep.subr.mxu0 0.0
    %513 = vmatpush2.msra.mxu0 0.0
    %514 = vmatprep.subr.mxu0 0.0
    %515 = vmatpush2.msra.mxu0 0.0
    %516 = vmatprep.subr.mxu0 0.0
    %517 = vmatpush2.msra.mxu0 0.0
    %518 = vmatprep.subr.mxu0 0.0
    %519 = vmatpush2.msra.mxu0 0.0
    %520 = vmatprep.subr.mxu0 0.0
    %521 = vmatpush2.msra.mxu0 0.0
    %522 = vmatprep.subr.mxu0 0.0
    %523 = vmatpush2.msra.mxu0 0.0
    %524 = vmatprep.subr.mxu0 0.0
    %525 = vmatpush2.msra.mxu0 0.0
    %526 = vmatprep.subr.mxu0 0.0
    %527 = vmatpush2.msra.mxu0 0.0
    %528 = vmatprep.subr.mxu0 0.0
    %529 = vmatpush2.msra.mxu0 0.0
    %530 = vmatprep.mubr.f32.mxu0 0.0
    %v531 = vand.u32 %v76, 4294901760
    %532 = vmatmul.mubr.f32.gmra.mxu0 %v531
    %v533 = vpop.f32.mrf.mxu0
    %v534 = vadd.f32 %v461, %v533
    %v535 = vpop.f32.mrf.mxu0
    %536 = vdwg.mxu0
    %v537 = vmax.f32 %v534, 0.0
    %v538 = vlaneseq
    %v539 = vshrl.u32 %v538, 7
    %v540 = vsub.s32 0, %v539
    %v541 = vrot.slane %v61, %v540
    %vm542 = vcmask 261120
    %v544 = vsel %vm542, %v537, 0
    %546 = vmatprep.subr.mxu0 0.0
    %547 = vmatpush1.msra.mxu0 0.0
    %548 = vmatprep.subr.mxu0 0.0
    %549 = vmatpush1.msra.mxu0 0.0
    %550 = vmatprep.subr.mxu0 0.0
    %551 = vmatpush1.msra.mxu0 0.0
    %552 = vmatprep.subr.mxu0 0.0
    %553 = vmatpush1.msra.mxu0 0.0
    %554 = vmatprep.subr.mxu0 0.0
    %555 = vmatpush1.msra.mxu0 0.0
    %556 = vmatprep.subr.mxu0 0.0
    %557 = vmatpush1.msra.mxu0 0.0
    %558 = vmatprep.subr.mxu0 0.0
    %559 = vmatpush1.msra.mxu0 0.0
    %560 = vmatprep.subr.mxu0 0.0
    %561 = vmatpush1.msra.mxu0 0.0
    %562 = vmatprep.subr.mxu0 0.0
    %563 = vmatpush1.msra.mxu0 0.0
    %564 = vmatprep.subr.mxu0 0.0
    %565 = vmatpush1.msra.mxu0 0.0
    %566 = vmatprep.subr.mxu0 0.0
    %567 = vmatpush1.msra.mxu0 0.0
    %568 = vmatprep.subr.mxu0 0.0
    %569 = vmatpush1.msra.mxu0 0.0
    %570 = vmatprep.subr.mxu0 0.0
    %v571 = vand.u32 %v60, 4294901760
    %572 = vmatpush1.msra.mxu0 %v571
    %573 = vmatprep.subr.mxu0 0.0
    %v574 = vand.u32 %v59, 4294901760
    %575 = vmatpush1.msra.mxu0 %v574
    %576 = vmatprep.subr.mxu0 0.0
    %v577 = vand.u32 %v58, 4294901760
    %578 = vmatpush1.msra.mxu0 %v577
    %579 = vmatprep.subr.mxu0 0.0
    %v580 = vand.u32 %v57, 4294901760
    %581 = vmatpush1.msra.mxu0 %v580
    %582 = vmatprep.subr.mxu0 0.0
    %583 = vmatpush2.msra.mxu0 0.0
    %584 = vmatprep.subr.mxu0 0.0
    %585 = vmatpush2.msra.mxu0 0.0
    %586 = vmatprep.subr.mxu0 0.0
    %587 = vmatpush2.msra.mxu0 0.0
    %588 = vmatprep.subr.mxu0 0.0
    %589 = vmatpush2.msra.mxu0 0.0
    %590 = vmatprep.subr.mxu0 0.0
    %591 = vmatpush2.msra.mxu0 0.0
    %592 = vmatprep.subr.mxu0 0.0
    %593 = vmatpush2.msra.mxu0 0.0
    %594 = vmatprep.subr.mxu0 0.0
    %595 = vmatpush2.msra.mxu0 0.0
    %596 = vmatprep.subr.mxu0 0.0
    %597 = vmatpush2.msra.mxu0 0.0
    %598 = vmatprep.subr.mxu0 0.0
    %599 = vmatpush2.msra.mxu0 0.0
    %600 = vmatprep.subr.mxu0 0.0
    %601 = vmatpush2.msra.mxu0 0.0
    %602 = vmatprep.subr.mxu0 0.0
    %603 = vmatpush2.msra.mxu0 0.0
    %604 = vmatprep.subr.mxu0 0.0
    %605 = vmatpush2.msra.mxu0 0.0
    %606 = vmatprep.subr.mxu0 0.0
    %607 = vmatpush2.msra.mxu0 0.0
    %608 = vmatprep.subr.mxu0 0.0
    %609 = vmatpush2.msra.mxu0 0.0
    %610 = vmatprep.subr.mxu0 0.0
    %611 = vmatpush2.msra.mxu0 0.0
    %612 = vmatprep.subr.mxu0 0.0
    %613 = vmatpush2.msra.mxu0 0.0
    %614 = vmatprep.mubr.f32.mxu0 0.0
    %v615 = vand.u32 %v544, 4294901760
    %v616 = vsub.f32 %v544, %v615
    %v617 = vand.u32 %v616, 4294901760
    %v618 = vsub.f32 %v616, %v617
    %v619 = vand.u32 %v618, 4294901760
    %620 = vmatmul.mubr.f32.gmra.mxu0 %v619
    %v621 = vpop.f32.mrf.mxu0
    %v622 = vadd.f32 %v541, %v621
    %v623 = vpop.f32.mrf.mxu0
    %624 = vdwg.mxu0
    %625 = vmatprep.subr.mxu0 0.0
    %626 = vmatpush1.msra.mxu0 0.0
    %627 = vmatprep.subr.mxu0 0.0
    %628 = vmatpush1.msra.mxu0 0.0
    %629 = vmatprep.subr.mxu0 0.0
    %630 = vmatpush1.msra.mxu0 0.0
    %631 = vmatprep.subr.mxu0 0.0
    %632 = vmatpush1.msra.mxu0 0.0
    %633 = vmatprep.subr.mxu0 0.0
    %634 = vmatpush1.msra.mxu0 0.0
    %635 = vmatprep.subr.mxu0 0.0
    %636 = vmatpush1.msra.mxu0 0.0
    %637 = vmatprep.subr.mxu0 0.0
    %638 = vmatpush1.msra.mxu0 0.0
    %639 = vmatprep.subr.mxu0 0.0
    %640 = vmatpush1.msra.mxu0 0.0
    %641 = vmatprep.subr.mxu0 0.0
    %642 = vmatpush1.msra.mxu0 0.0
    %643 = vmatprep.subr.mxu0 0.0
    %644 = vmatpush1.msra.mxu0 0.0
    %645 = vmatprep.subr.mxu0 0.0
    %646 = vmatpush1.msra.mxu0 0.0
    %647 = vmatprep.subr.mxu0 0.0
    %648 = vmatpush1.msra.mxu0 0.0
    %649 = vmatprep.subr.mxu0 0.0
    %v650 = vand.u32 %v60, 4294901760
    %v651 = vsub.f32 %v60, %v650
    %v652 = vand.u32 %v651, 4294901760
    %v653 = vsub.f32 %v651, %v652
    %v654 = vand.u32 %v653, 4294901760
    %655 = vmatpush1.msra.mxu0 %v654
    %656 = vmatprep.subr.mxu0 0.0
    %v657 = vand.u32 %v59, 4294901760
    %v658 = vsub.f32 %v59, %v657
    %v659 = vand.u32 %v658, 4294901760
    %v660 = vsub.f32 %v658, %v659
    %v661 = vand.u32 %v660, 4294901760
    %662 = vmatpush1.msra.mxu0 %v661
    %663 = vmatprep.subr.mxu0 0.0
    %v664 = vand.u32 %v58, 4294901760
    %v665 = vsub.f32 %v58, %v664
    %v666 = vand.u32 %v665, 4294901760
    %v667 = vsub.f32 %v665, %v666
    %v668 = vand.u32 %v667, 4294901760
    %669 = vmatpush1.msra.mxu0 %v668
    %670 = vmatprep.subr.mxu0 0.0
    %v671 = vand.u32 %v57, 4294901760
    %v672 = vsub.f32 %v57, %v671
    %v673 = vand.u32 %v672, 4294901760
    %v674 = vsub.f32 %v672, %v673
    %v675 = vand.u32 %v674, 4294901760
    %676 = vmatpush1.msra.mxu0 %v675
    %677 = vmatprep.subr.mxu0 0.0
    %678 = vmatpush2.msra.mxu0 0.0
    %679 = vmatprep.subr.mxu0 0.0
    %680 = vmatpush2.msra.mxu0 0.0
    %681 = vmatprep.subr.mxu0 0.0
    %682 = vmatpush2.msra.mxu0 0.0
    %683 = vmatprep.subr.mxu0 0.0
    %684 = vmatpush2.msra.mxu0 0.0
    %685 = vmatprep.subr.mxu0 0.0
    %686 = vmatpush2.msra.mxu0 0.0
    %687 = vmatprep.subr.mxu0 0.0
    %688 = vmatpush2.msra.mxu0 0.0
    %689 = vmatprep.subr.mxu0 0.0
    %690 = vmatpush2.msra.mxu0 0.0
    %691 = vmatprep.subr.mxu0 0.0
    %692 = vmatpush2.msra.mxu0 0.0
    %693 = vmatprep.subr.mxu0 0.0
    %694 = vmatpush2.msra.mxu0 0.0
    %695 = vmatprep.subr.mxu0 0.0
    %696 = vmatpush2.msra.mxu0 0.0
    %697 = vmatprep.subr.mxu0 0.0
    %698 = vmatpush2.msra.mxu0 0.0
    %699 = vmatprep.subr.mxu0 0.0
    %700 = vmatpush2.msra.mxu0 0.0
    %701 = vmatprep.subr.mxu0 0.0
    %702 = vmatpush2.msra.mxu0 0.0
    %703 = vmatprep.subr.mxu0 0.0
    %704 = vmatpush2.msra.mxu0 0.0
    %705 = vmatprep.subr.mxu0 0.0
    %706 = vmatpush2.msra.mxu0 0.0
    %707 = vmatprep.subr.mxu0 0.0
    %708 = vmatpush2.msra.mxu0 0.0
    %709 = vmatprep.mubr.f32.mxu0 0.0
    %v710 = vand.u32 %v544, 4294901760
    %711 = vmatmul.mubr.f32.gmra.mxu0 %v710
    %v712 = vpop.f32.mrf.mxu0
    %v713 = vadd.f32 %v622, %v712
    %v714 = vpop.f32.mrf.mxu0
    %715 = vdwg.mxu0
    %716 = vmatprep.subr.mxu0 0.0
    %717 = vmatpush1.msra.mxu0 0.0
    %718 = vmatprep.subr.mxu0 0.0
    %719 = vmatpush1.msra.mxu0 0.0
    %720 = vmatprep.subr.mxu0 0.0
    %721 = vmatpush1.msra.mxu0 0.0
    %722 = vmatprep.subr.mxu0 0.0
    %723 = vmatpush1.msra.mxu0 0.0
    %724 = vmatprep.subr.mxu0 0.0
    %725 = vmatpush1.msra.mxu0 0.0
    %726 = vmatprep.subr.mxu0 0.0
    %727 = vmatpush1.msra.mxu0 0.0
    %728 = vmatprep.subr.mxu0 0.0
    %729 = vmatpush1.msra.mxu0 0.0
    %730 = vmatprep.subr.mxu0 0.0
    %731 = vmatpush1.msra.mxu0 0.0
    %732 = vmatprep.subr.mxu0 0.0
    %733 = vmatpush1.msra.mxu0 0.0
    %734 = vmatprep.subr.mxu0 0.0
    %735 = vmatpush1.msra.mxu0 0.0
    %736 = vmatprep.subr.mxu0 0.0
    %737 = vmatpush1.msra.mxu0 0.0
    %738 = vmatprep.subr.mxu0 0.0
    %739 = vmatpush1.msra.mxu0 0.0
    %740 = vmatprep.subr.mxu0 0.0
    %v741 = vand.u32 %v60, 4294901760
    %v742 = vsub.f32 %v60, %v741
    %743 = vmatpush1.msra.mxu0 %v742
    %744 = vmatprep.subr.mxu0 0.0
    %v745 = vand.u32 %v59, 4294901760
    %v746 = vsub.f32 %v59, %v745
    %747 = vmatpush1.msra.mxu0 %v746
    %748 = vmatprep.subr.mxu0 0.0
    %v749 = vand.u32 %v58, 4294901760
    %v750 = vsub.f32 %v58, %v749
    %751 = vmatpush1.msra.mxu0 %v750
    %752 = vmatprep.subr.mxu0 0.0
    %v753 = vand.u32 %v57, 4294901760
    %v754 = vsub.f32 %v57, %v753
    %755 = vmatpush1.msra.mxu0 %v754
    %756 = vmatprep.subr.mxu0 0.0
    %757 = vmatpush2.msra.mxu0 0.0
    %758 = vmatprep.subr.mxu0 0.0
    %759 = vmatpush2.msra.mxu0 0.0
    %760 = vmatprep.subr.mxu0 0.0
    %761 = vmatpush2.msra.mxu0 0.0
    %762 = vmatprep.subr.mxu0 0.0
    %763 = vmatpush2.msra.mxu0 0.0
    %764 = vmatprep.subr.mxu0 0.0
    %765 = vmatpush2.msra.mxu0 0.0
    %766 = vmatprep.subr.mxu0 0.0
    %767 = vmatpush2.msra.mxu0 0.0
    %768 = vmatprep.subr.mxu0 0.0
    %769 = vmatpush2.msra.mxu0 0.0
    %770 = vmatprep.subr.mxu0 0.0
    %771 = vmatpush2.msra.mxu0 0.0
    %772 = vmatprep.subr.mxu0 0.0
    %773 = vmatpush2.msra.mxu0 0.0
    %774 = vmatprep.subr.mxu0 0.0
    %775 = vmatpush2.msra.mxu0 0.0
    %776 = vmatprep.subr.mxu0 0.0
    %777 = vmatpush2.msra.mxu0 0.0
    %778 = vmatprep.subr.mxu0 0.0
    %779 = vmatpush2.msra.mxu0 0.0
    %780 = vmatprep.subr.mxu0 0.0
    %781 = vmatpush2.msra.mxu0 0.0
    %782 = vmatprep.subr.mxu0 0.0
    %783 = vmatpush2.msra.mxu0 0.0
    %784 = vmatprep.subr.mxu0 0.0
    %785 = vmatpush2.msra.mxu0 0.0
    %786 = vmatprep.subr.mxu0 0.0
    %787 = vmatpush2.msra.mxu0 0.0
    %788 = vmatprep.mubr.f32.mxu0 0.0
    %v789 = vand.u32 %v544, 4294901760
    %v790 = vsub.f32 %v544, %v789
    %791 = vmatmul.mubr.f32.gmra.mxu0 %v790
    %v792 = vpop.f32.mrf.mxu0
    %v793 = vadd.f32 %v713, %v792
    %v794 = vpop.f32.mrf.mxu0
    %795 = vdwg.mxu0
    %796 = vmatprep.subr.mxu0 0.0
    %797 = vmatpush1.msra.mxu0 0.0
    %798 = vmatprep.subr.mxu0 0.0
    %799 = vmatpush1.msra.mxu0 0.0
    %800 = vmatprep.subr.mxu0 0.0
    %801 = vmatpush1.msra.mxu0 0.0
    %802 = vmatprep.subr.mxu0 0.0
    %803 = vmatpush1.msra.mxu0 0.0
    %804 = vmatprep.subr.mxu0 0.0
    %805 = vmatpush1.msra.mxu0 0.0
    %806 = vmatprep.subr.mxu0 0.0
    %807 = vmatpush1.msra.mxu0 0.0
    %808 = vmatprep.subr.mxu0 0.0
    %809 = vmatpush1.msra.mxu0 0.0
    %810 = vmatprep.subr.mxu0 0.0
    %811 = vmatpush1.msra.mxu0 0.0
    %812 = vmatprep.subr.mxu0 0.0
    %813 = vmatpush1.msra.mxu0 0.0
    %814 = vmatprep.subr.mxu0 0.0
    %815 = vmatpush1.msra.mxu0 0.0
    %816 = vmatprep.subr.mxu0 0.0
    %817 = vmatpush1.msra.mxu0 0.0
    %818 = vmatprep.subr.mxu0 0.0
    %819 = vmatpush1.msra.mxu0 0.0
    %820 = vmatprep.subr.mxu0 0.0
    %v821 = vand.u32 %v60, 4294901760
    %822 = vmatpush1.msra.mxu0 %v821
    %823 = vmatprep.subr.mxu0 0.0
    %v824 = vand.u32 %v59, 4294901760
    %825 = vmatpush1.msra.mxu0 %v824
    %826 = vmatprep.subr.mxu0 0.0
    %v827 = vand.u32 %v58, 4294901760
    %828 = vmatpush1.msra.mxu0 %v827
    %829 = vmatprep.subr.mxu0 0.0
    %v830 = vand.u32 %v57, 4294901760
    %831 = vmatpush1.msra.mxu0 %v830
    %832 = vmatprep.subr.mxu0 0.0
    %833 = vmatpush2.msra.mxu0 0.0
    %834 = vmatprep.subr.mxu0 0.0
    %835 = vmatpush2.msra.mxu0 0.0
    %836 = vmatprep.subr.mxu0 0.0
    %837 = vmatpush2.msra.mxu0 0.0
    %838 = vmatprep.subr.mxu0 0.0
    %839 = vmatpush2.msra.mxu0 0.0
    %840 = vmatprep.subr.mxu0 0.0
    %841 = vmatpush2.msra.mxu0 0.0
    %842 = vmatprep.subr.mxu0 0.0
    %843 = vmatpush2.msra.mxu0 0.0
    %844 = vmatprep.subr.mxu0 0.0
    %845 = vmatpush2.msra.mxu0 0.0
    %846 = vmatprep.subr.mxu0 0.0
    %847 = vmatpush2.msra.mxu0 0.0
    %848 = vmatprep.subr.mxu0 0.0
    %849 = vmatpush2.msra.mxu0 0.0
    %850 = vmatprep.subr.mxu0 0.0
    %851 = vmatpush2.msra.mxu0 0.0
    %852 = vmatprep.subr.mxu0 0.0
    %853 = vmatpush2.msra.mxu0 0.0
    %854 = vmatprep.subr.mxu0 0.0
    %855 = vmatpush2.msra.mxu0 0.0
    %856 = vmatprep.subr.mxu0 0.0
    %857 = vmatpush2.msra.mxu0 0.0
    %858 = vmatprep.subr.mxu0 0.0
    %859 = vmatpush2.msra.mxu0 0.0
    %860 = vmatprep.subr.mxu0 0.0
    %861 = vmatpush2.msra.mxu0 0.0
    %862 = vmatprep.subr.mxu0 0.0
    %863 = vmatpush2.msra.mxu0 0.0
    %864 = vmatprep.mubr.f32.mxu0 0.0
    %v865 = vand.u32 %v544, 4294901760
    %v866 = vsub.f32 %v544, %v865
    %v867 = vand.u32 %v866, 4294901760
    %868 = vmatmul.mubr.f32.gmra.mxu0 %v867
    %v869 = vpop.f32.mrf.mxu0
    %v870 = vadd.f32 %v793, %v869
    %v871 = vpop.f32.mrf.mxu0
    %872 = vdwg.mxu0
    %873 = vmatprep.subr.mxu0 0.0
    %874 = vmatpush1.msra.mxu0 0.0
    %875 = vmatprep.subr.mxu0 0.0
    %876 = vmatpush1.msra.mxu0 0.0
    %877 = vmatprep.subr.mxu0 0.0
    %878 = vmatpush1.msra.mxu0 0.0
    %879 = vmatprep.subr.mxu0 0.0
    %880 = vmatpush1.msra.mxu0 0.0
    %881 = vmatprep.subr.mxu0 0.0
    %882 = vmatpush1.msra.mxu0 0.0
    %883 = vmatprep.subr.mxu0 0.0
    %884 = vmatpush1.msra.mxu0 0.0
    %885 = vmatprep.subr.mxu0 0.0
    %886 = vmatpush1.msra.mxu0 0.0
    %887 = vmatprep.subr.mxu0 0.0
    %888 = vmatpush1.msra.mxu0 0.0
    %889 = vmatprep.subr.mxu0 0.0
    %890 = vmatpush1.msra.mxu0 0.0
    %891 = vmatprep.subr.mxu0 0.0
    %892 = vmatpush1.msra.mxu0 0.0
    %893 = vmatprep.subr.mxu0 0.0
    %894 = vmatpush1.msra.mxu0 0.0
    %895 = vmatprep.subr.mxu0 0.0
    %896 = vmatpush1.msra.mxu0 0.0
    %897 = vmatprep.subr.mxu0 0.0
    %v898 = vand.u32 %v60, 4294901760
    %v899 = vsub.f32 %v60, %v898
    %v900 = vand.u32 %v899, 4294901760
    %901 = vmatpush1.msra.mxu0 %v900
    %902 = vmatprep.subr.mxu0 0.0
    %v903 = vand.u32 %v59, 4294901760
    %v904 = vsub.f32 %v59, %v903
    %v905 = vand.u32 %v904, 4294901760
    %906 = vmatpush1.msra.mxu0 %v905
    %907 = vmatprep.subr.mxu0 0.0
    %v908 = vand.u32 %v58, 4294901760
    %v909 = vsub.f32 %v58, %v908
    %v910 = vand.u32 %v909, 4294901760
    %911 = vmatpush1.msra.mxu0 %v910
    %912 = vmatprep.subr.mxu0 0.0
    %v913 = vand.u32 %v57, 4294901760
    %v914 = vsub.f32 %v57, %v913
    %v915 = vand.u32 %v914, 4294901760
    %916 = vmatpush1.msra.mxu0 %v915
    %917 = vmatprep.subr.mxu0 0.0
    %918 = vmatpush2.msra.mxu0 0.0
    %919 = vmatprep.subr.mxu0 0.0
    %920 = vmatpush2.msra.mxu0 0.0
    %921 = vmatprep.subr.mxu0 0.0
    %922 = vmatpush2.msra.mxu0 0.0
    %923 = vmatprep.subr.mxu0 0.0
    %924 = vmatpush2.msra.mxu0 0.0
    %925 = vmatprep.subr.mxu0 0.0
    %926 = vmatpush2.msra.mxu0 0.0
    %927 = vmatprep.subr.mxu0 0.0
    %928 = vmatpush2.msra.mxu0 0.0
    %929 = vmatprep.subr.mxu0 0.0
    %930 = vmatpush2.msra.mxu0 0.0
    %931 = vmatprep.subr.mxu0 0.0
    %932 = vmatpush2.msra.mxu0 0.0
    %933 = vmatprep.subr.mxu0 0.0
    %934 = vmatpush2.msra.mxu0 0.0
    %935 = vmatprep.subr.mxu0 0.0
    %936 = vmatpush2.msra.mxu0 0.0
    %937 = vmatprep.subr.mxu0 0.0
    %938 = vmatpush2.msra.mxu0 0.0
    %939 = vmatprep.subr.mxu0 0.0
    %940 = vmatpush2.msra.mxu0 0.0
    %941 = vmatprep.subr.mxu0 0.0
    %942 = vmatpush2.msra.mxu0 0.0
    %943 = vmatprep.subr.mxu0 0.0
    %944 = vmatpush2.msra.mxu0 0.0
    %945 = vmatprep.subr.mxu0 0.0
    %946 = vmatpush2.msra.mxu0 0.0
    %947 = vmatprep.subr.mxu0 0.0
    %948 = vmatpush2.msra.mxu0 0.0
    %949 = vmatprep.mubr.f32.mxu0 0.0
    %v950 = vand.u32 %v544, 4294901760
    %951 = vmatmul.mubr.f32.gmra.mxu0 %v950
    %v952 = vpop.f32.mrf.mxu0
    %v953 = vadd.f32 %v870, %v952
    %v954 = vpop.f32.mrf.mxu0
    %955 = vdwg.mxu0
    %956 = vmatprep.subr.mxu0 0.0
    %957 = vmatpush1.msra.mxu0 0.0
    %958 = vmatprep.subr.mxu0 0.0
    %959 = vmatpush1.msra.mxu0 0.0
    %960 = vmatprep.subr.mxu0 0.0
    %961 = vmatpush1.msra.mxu0 0.0
    %962 = vmatprep.subr.mxu0 0.0
    %963 = vmatpush1.msra.mxu0 0.0
    %964 = vmatprep.subr.mxu0 0.0
    %965 = vmatpush1.msra.mxu0 0.0
    %966 = vmatprep.subr.mxu0 0.0
    %967 = vmatpush1.msra.mxu0 0.0
    %968 = vmatprep.subr.mxu0 0.0
    %969 = vmatpush1.msra.mxu0 0.0
    %970 = vmatprep.subr.mxu0 0.0
    %971 = vmatpush1.msra.mxu0 0.0
    %972 = vmatprep.subr.mxu0 0.0
    %973 = vmatpush1.msra.mxu0 0.0
    %974 = vmatprep.subr.mxu0 0.0
    %975 = vmatpush1.msra.mxu0 0.0
    %976 = vmatprep.subr.mxu0 0.0
    %977 = vmatpush1.msra.mxu0 0.0
    %978 = vmatprep.subr.mxu0 0.0
    %979 = vmatpush1.msra.mxu0 0.0
    %980 = vmatprep.subr.mxu0 0.0
    %v981 = vand.u32 %v60, 4294901760
    %982 = vmatpush1.msra.mxu0 %v981
    %983 = vmatprep.subr.mxu0 0.0
    %v984 = vand.u32 %v59, 4294901760
    %985 = vmatpush1.msra.mxu0 %v984
    %986 = vmatprep.subr.mxu0 0.0
    %v987 = vand.u32 %v58, 4294901760
    %988 = vmatpush1.msra.mxu0 %v987
    %989 = vmatprep.subr.mxu0 0.0
    %v990 = vand.u32 %v57, 4294901760
    %991 = vmatpush1.msra.mxu0 %v990
    %992 = vmatprep.subr.mxu0 0.0
    %993 = vmatpush2.msra.mxu0 0.0
    %994 = vmatprep.subr.mxu0 0.0
    %995 = vmatpush2.msra.mxu0 0.0
    %996 = vmatprep.subr.mxu0 0.0
    %997 = vmatpush2.msra.mxu0 0.0
    %998 = vmatprep.subr.mxu0 0.0
    %999 = vmatpush2.msra.mxu0 0.0
    %1000 = vmatprep.subr.mxu0 0.0
    %1001 = vmatpush2.msra.mxu0 0.0
    %1002 = vmatprep.subr.mxu0 0.0
    %1003 = vmatpush2.msra.mxu0 0.0
    %1004 = vmatprep.subr.mxu0 0.0
    %1005 = vmatpush2.msra.mxu0 0.0
    %1006 = vmatprep.subr.mxu0 0.0
    %1007 = vmatpush2.msra.mxu0 0.0
    %1008 = vmatprep.subr.mxu0 0.0
    %1009 = vmatpush2.msra.mxu0 0.0
    %1010 = vmatprep.subr.mxu0 0.0
    %1011 = vmatpush2.msra.mxu0 0.0
    %1012 = vmatprep.subr.mxu0 0.0
    %1013 = vmatpush2.msra.mxu0 0.0
    %1014 = vmatprep.subr.mxu0 0.0
    %1015 = vmatpush2.msra.mxu0 0.0
    %1016 = vmatprep.subr.mxu0 0.0
    %1017 = vmatpush2.msra.mxu0 0.0
    %1018 = vmatprep.subr.mxu0 0.0
    %1019 = vmatpush2.msra.mxu0 0.0
    %1020 = vmatprep.subr.mxu0 0.0
    %1021 = vmatpush2.msra.mxu0 0.0
    %1022 = vmatprep.subr.mxu0 0.0
    %1023 = vmatpush2.msra.mxu0 0.0
    %1024 = vmatprep.mubr.f32.mxu0 0.0
    %v1025 = vand.u32 %v544, 4294901760
    %1026 = vmatmul.mubr.f32.gmra.mxu0 %v1025
    %v1027 = vpop.f32.mrf.mxu0
    %v1028 = vadd.f32 %v953, %v1027
    %v1029 = vpop.f32.mrf.mxu0
    %1030 = vdwg.mxu0
    %1032 = vrot.lane.b32.xlu0 %v1028, 3
    %v1033 = vpop.permute.xlu0 %1032
    %vm1035 = vcmask 23552
    %v1036 = vsel %vm1035, %v52, %v1033
    %v1037 = vlaneseq
    %v1038 = vshrl.u32 %v1037, 7
    %v1039 = vsub.s32 0, %v1038
    %v1040 = vrot.slane %v64, %v1039
    %vm1041 = vcmask 89088
    %v1043 = vsel %vm1041, %v1036, 0
    %vm1045 = vcmask 1042432
    %v1047 = vsel %vm1045, %v63, 0
    %1049 = vmatprep.subr.mxu0 0.0
    %1050 = vmatpush1.msra.mxu0 0.0
    %1051 = vmatprep.subr.mxu0 0.0
    %1052 = vmatpush1.msra.mxu0 0.0
    %1053 = vmatprep.subr.mxu0 0.0
    %1054 = vmatpush1.msra.mxu0 0.0
    %1055 = vmatprep.subr.mxu0 0.0
    %1056 = vmatpush1.msra.mxu0 0.0
    %1057 = vmatprep.subr.mxu0 0.0
    %1058 = vmatpush1.msra.mxu0 0.0
    %1059 = vmatprep.subr.mxu0 0.0
    %1060 = vmatpush1.msra.mxu0 0.0
    %1061 = vmatprep.subr.mxu0 0.0
    %1062 = vmatpush1.msra.mxu0 0.0
    %1063 = vmatprep.subr.mxu0 0.0
    %1064 = vmatpush1.msra.mxu0 0.0
    %1065 = vmatprep.subr.mxu0 0.0
    %1066 = vmatpush1.msra.mxu0 0.0
    %1067 = vmatprep.subr.mxu0 0.0
    %1068 = vmatpush1.msra.mxu0 0.0
    %1069 = vmatprep.subr.mxu0 0.0
    %1070 = vmatpush1.msra.mxu0 0.0
    %1071 = vmatprep.subr.mxu0 0.0
    %1072 = vmatpush1.msra.mxu0 0.0
    %1073 = vmatprep.subr.mxu0 0.0
    %1074 = vmatpush1.msra.mxu0 0.0
    %1075 = vmatprep.subr.mxu0 0.0
    %1076 = vmatpush1.msra.mxu0 0.0
    %1077 = vmatprep.subr.mxu0 0.0
    %v1078 = vand.u32 %v1047, 4294901760
    %1079 = vmatpush1.msra.mxu0 %v1078
    %1080 = vmatprep.subr.mxu0 0.0
    %v1081 = vand.u32 %v62, 4294901760
    %1082 = vmatpush1.msra.mxu0 %v1081
    %1083 = vmatprep.subr.mxu0 0.0
    %1084 = vmatpush2.msra.mxu0 0.0
    %1085 = vmatprep.subr.mxu0 0.0
    %1086 = vmatpush2.msra.mxu0 0.0
    %1087 = vmatprep.subr.mxu0 0.0
    %1088 = vmatpush2.msra.mxu0 0.0
    %1089 = vmatprep.subr.mxu0 0.0
    %1090 = vmatpush2.msra.mxu0 0.0
    %1091 = vmatprep.subr.mxu0 0.0
    %1092 = vmatpush2.msra.mxu0 0.0
    %1093 = vmatprep.subr.mxu0 0.0
    %1094 = vmatpush2.msra.mxu0 0.0
    %1095 = vmatprep.subr.mxu0 0.0
    %1096 = vmatpush2.msra.mxu0 0.0
    %1097 = vmatprep.subr.mxu0 0.0
    %1098 = vmatpush2.msra.mxu0 0.0
    %1099 = vmatprep.subr.mxu0 0.0
    %1100 = vmatpush2.msra.mxu0 0.0
    %1101 = vmatprep.subr.mxu0 0.0
    %1102 = vmatpush2.msra.mxu0 0.0
    %1103 = vmatprep.subr.mxu0 0.0
    %1104 = vmatpush2.msra.mxu0 0.0
    %1105 = vmatprep.subr.mxu0 0.0
    %1106 = vmatpush2.msra.mxu0 0.0
    %1107 = vmatprep.subr.mxu0 0.0
    %1108 = vmatpush2.msra.mxu0 0.0
    %1109 = vmatprep.subr.mxu0 0.0
    %1110 = vmatpush2.msra.mxu0 0.0
    %1111 = vmatprep.subr.mxu0 0.0
    %1112 = vmatpush2.msra.mxu0 0.0
    %1113 = vmatprep.subr.mxu0 0.0
    %1114 = vmatpush2.msra.mxu0 0.0
    %1115 = vmatprep.mubr.f32.mxu0 0.0
    %v1116 = vand.u32 %v1043, 4294901760
    %v1117 = vsub.f32 %v1043, %v1116
    %v1118 = vand.u32 %v1117, 4294901760
    %v1119 = vsub.f32 %v1117, %v1118
    %v1120 = vand.u32 %v1119, 4294901760
    %1121 = vmatmul.mubr.f32.gmra.mxu0 %v1120
    %v1122 = vpop.f32.mrf.mxu0
    %v1123 = vadd.f32 %v1040, %v1122
    %v1124 = vpop.f32.mrf.mxu0
    %1125 = vdwg.mxu0
    %1126 = vmatprep.subr.mxu0 0.0
    %1127 = vmatpush1.msra.mxu0 0.0
    %1128 = vmatprep.subr.mxu0 0.0
    %1129 = vmatpush1.msra.mxu0 0.0
    %1130 = vmatprep.subr.mxu0 0.0
    %1131 = vmatpush1.msra.mxu0 0.0
    %1132 = vmatprep.subr.mxu0 0.0
    %1133 = vmatpush1.msra.mxu0 0.0
    %1134 = vmatprep.subr.mxu0 0.0
    %1135 = vmatpush1.msra.mxu0 0.0
    %1136 = vmatprep.subr.mxu0 0.0
    %1137 = vmatpush1.msra.mxu0 0.0
    %1138 = vmatprep.subr.mxu0 0.0
    %1139 = vmatpush1.msra.mxu0 0.0
    %1140 = vmatprep.subr.mxu0 0.0
    %1141 = vmatpush1.msra.mxu0 0.0
    %1142 = vmatprep.subr.mxu0 0.0
    %1143 = vmatpush1.msra.mxu0 0.0
    %1144 = vmatprep.subr.mxu0 0.0
    %1145 = vmatpush1.msra.mxu0 0.0
    %1146 = vmatprep.subr.mxu0 0.0
    %1147 = vmatpush1.msra.mxu0 0.0
    %1148 = vmatprep.subr.mxu0 0.0
    %1149 = vmatpush1.msra.mxu0 0.0
    %1150 = vmatprep.subr.mxu0 0.0
    %1151 = vmatpush1.msra.mxu0 0.0
    %1152 = vmatprep.subr.mxu0 0.0
    %1153 = vmatpush1.msra.mxu0 0.0
    %1154 = vmatprep.subr.mxu0 0.0
    %v1155 = vand.u32 %v1047, 4294901760
    %v1156 = vsub.f32 %v1047, %v1155
    %v1157 = vand.u32 %v1156, 4294901760
    %v1158 = vsub.f32 %v1156, %v1157
    %v1159 = vand.u32 %v1158, 4294901760
    %1160 = vmatpush1.msra.mxu0 %v1159
    %1161 = vmatprep.subr.mxu0 0.0
    %v1162 = vand.u32 %v62, 4294901760
    %v1163 = vsub.f32 %v62, %v1162
    %v1164 = vand.u32 %v1163, 4294901760
    %v1165 = vsub.f32 %v1163, %v1164
    %v1166 = vand.u32 %v1165, 4294901760
    %1167 = vmatpush1.msra.mxu0 %v1166
    %1168 = vmatprep.subr.mxu0 0.0
    %1169 = vmatpush2.msra.mxu0 0.0
    %1170 = vmatprep.subr.mxu0 0.0
    %1171 = vmatpush2.msra.mxu0 0.0
    %1172 = vmatprep.subr.mxu0 0.0
    %1173 = vmatpush2.msra.mxu0 0.0
    %1174 = vmatprep.subr.mxu0 0.0
    %1175 = vmatpush2.msra.mxu0 0.0
    %1176 = vmatprep.subr.mxu0 0.0
    %1177 = vmatpush2.msra.mxu0 0.0
    %1178 = vmatprep.subr.mxu0 0.0
    %1179 = vmatpush2.msra.mxu0 0.0
    %1180 = vmatprep.subr.mxu0 0.0
    %1181 = vmatpush2.msra.mxu0 0.0
    %1182 = vmatprep.subr.mxu0 0.0
    %1183 = vmatpush2.msra.mxu0 0.0
    %1184 = vmatprep.subr.mxu0 0.0
    %1185 = vmatpush2.msra.mxu0 0.0
    %1186 = vmatprep.subr.mxu0 0.0
    %1187 = vmatpush2.msra.mxu0 0.0
    %1188 = vmatprep.subr.mxu0 0.0
    %1189 = vmatpush2.msra.mxu0 0.0
    %1190 = vmatprep.subr.mxu0 0.0
    %1191 = vmatpush2.msra.mxu0 0.0
    %1192 = vmatprep.subr.mxu0 0.0
    %1193 = vmatpush2.msra.mxu0 0.0
    %1194 = vmatprep.subr.mxu0 0.0
    %1195 = vmatpush2.msra.mxu0 0.0
    %1196 = vmatprep.subr.mxu0 0.0
    %1197 = vmatpush2.msra.mxu0 0.0
    %1198 = vmatprep.subr.mxu0 0.0
    %1199 = vmatpush2.msra.mxu0 0.0
    %1200 = vmatprep.mubr.f32.mxu0 0.0
    %v1201 = vand.u32 %v1043, 4294901760
    %1202 = vmatmul.mubr.f32.gmra.mxu0 %v1201
    %v1203 = vpop.f32.mrf.mxu0
    %v1204 = vadd.f32 %v1123, %v1203
    %v1205 = vpop.f32.mrf.mxu0
    %1206 = vdwg.mxu0
    %1207 = vmatprep.subr.mxu0 0.0
    %1208 = vmatpush1.msra.mxu0 0.0
    %1209 = vmatprep.subr.mxu0 0.0
    %1210 = vmatpush1.msra.mxu0 0.0
    %1211 = vmatprep.subr.mxu0 0.0
    %1212 = vmatpush1.msra.mxu0 0.0
    %1213 = vmatprep.subr.mxu0 0.0
    %1214 = vmatpush1.msra.mxu0 0.0
    %1215 = vmatprep.subr.mxu0 0.0
    %1216 = vmatpush1.msra.mxu0 0.0
    %1217 = vmatprep.subr.mxu0 0.0
    %1218 = vmatpush1.msra.mxu0 0.0
    %1219 = vmatprep.subr.mxu0 0.0
    %1220 = vmatpush1.msra.mxu0 0.0
    %1221 = vmatprep.subr.mxu0 0.0
    %1222 = vmatpush1.msra.mxu0 0.0
    %1223 = vmatprep.subr.mxu0 0.0
    %1224 = vmatpush1.msra.mxu0 0.0
    %1225 = vmatprep.subr.mxu0 0.0
    %1226 = vmatpush1.msra.mxu0 0.0
    %1227 = vmatprep.subr.mxu0 0.0
    %1228 = vmatpush1.msra.mxu0 0.0
    %1229 = vmatprep.subr.mxu0 0.0
    %1230 = vmatpush1.msra.mxu0 0.0
    %1231 = vmatprep.subr.mxu0 0.0
    %1232 = vmatpush1.msra.mxu0 0.0
    %1233 = vmatprep.subr.mxu0 0.0
    %1234 = vmatpush1.msra.mxu0 0.0
    %1235 = vmatprep.subr.mxu0 0.0
    %v1236 = vand.u32 %v1047, 4294901760
    %v1237 = vsub.f32 %v1047, %v1236
    %1238 = vmatpush1.msra.mxu0 %v1237
    %1239 = vmatprep.subr.mxu0 0.0
    %v1240 = vand.u32 %v62, 4294901760
    %v1241 = vsub.f32 %v62, %v1240
    %1242 = vmatpush1.msra.mxu0 %v1241
    %1243 = vmatprep.subr.mxu0 0.0
    %1244 = vmatpush2.msra.mxu0 0.0
    %1245 = vmatprep.subr.mxu0 0.0
    %1246 = vmatpush2.msra.mxu0 0.0
    %1247 = vmatprep.subr.mxu0 0.0
    %1248 = vmatpush2.msra.mxu0 0.0
    %1249 = vmatprep.subr.mxu0 0.0
    %1250 = vmatpush2.msra.mxu0 0.0
    %1251 = vmatprep.subr.mxu0 0.0
    %1252 = vmatpush2.msra.mxu0 0.0
    %1253 = vmatprep.subr.mxu0 0.0
    %1254 = vmatpush2.msra.mxu0 0.0
    %1255 = vmatprep.subr.mxu0 0.0
    %1256 = vmatpush2.msra.mxu0 0.0
    %1257 = vmatprep.subr.mxu0 0.0
    %1258 = vmatpush2.msra.mxu0 0.0
    %1259 = vmatprep.subr.mxu0 0.0
    %1260 = vmatpush2.msra.mxu0 0.0
    %1261 = vmatprep.subr.mxu0 0.0
    %1262 = vmatpush2.msra.mxu0 0.0
    %1263 = vmatprep.subr.mxu0 0.0
    %1264 = vmatpush2.msra.mxu0 0.0
    %1265 = vmatprep.subr.mxu0 0.0
    %1266 = vmatpush2.msra.mxu0 0.0
    %1267 = vmatprep.subr.mxu0 0.0
    %1268 = vmatpush2.msra.mxu0 0.0
    %1269 = vmatprep.subr.mxu0 0.0
    %1270 = vmatpush2.msra.mxu0 0.0
    %1271 = vmatprep.subr.mxu0 0.0
    %1272 = vmatpush2.msra.mxu0 0.0
    %1273 = vmatprep.subr.mxu0 0.0
    %1274 = vmatpush2.msra.mxu0 0.0
    %1275 = vmatprep.mubr.f32.mxu0 0.0
    %v1276 = vand.u32 %v1043, 4294901760
    %v1277 = vsub.f32 %v1043, %v1276
    %1278 = vmatmul.mubr.f32.gmra.mxu0 %v1277
    %v1279 = vpop.f32.mrf.mxu0
    %v1280 = vadd.f32 %v1204, %v1279
    %v1281 = vpop.f32.mrf.mxu0
    %1282 = vdwg.mxu0
    %1283 = vmatprep.subr.mxu0 0.0
    %1284 = vmatpush1.msra.mxu0 0.0
    %1285 = vmatprep.subr.mxu0 0.0
    %1286 = vmatpush1.msra.mxu0 0.0
    %1287 = vmatprep.subr.mxu0 0.0
    %1288 = vmatpush1.msra.mxu0 0.0
    %1289 = vmatprep.subr.mxu0 0.0
    %1290 = vmatpush1.msra.mxu0 0.0
    %1291 = vmatprep.subr.mxu0 0.0
    %1292 = vmatpush1.msra.mxu0 0.0
    %1293 = vmatprep.subr.mxu0 0.0
    %1294 = vmatpush1.msra.mxu0 0.0
    %1295 = vmatprep.subr.mxu0 0.0
    %1296 = vmatpush1.msra.mxu0 0.0
    %1297 = vmatprep.subr.mxu0 0.0
    %1298 = vmatpush1.msra.mxu0 0.0
    %1299 = vmatprep.subr.mxu0 0.0
    %1300 = vmatpush1.msra.mxu0 0.0
    %1301 = vmatprep.subr.mxu0 0.0
    %1302 = vmatpush1.msra.mxu0 0.0
    %1303 = vmatprep.subr.mxu0 0.0
    %1304 = vmatpush1.msra.mxu0 0.0
    %1305 = vmatprep.subr.mxu0 0.0
    %1306 = vmatpush1.msra.mxu0 0.0
    %1307 = vmatprep.subr.mxu0 0.0
    %1308 = vmatpush1.msra.mxu0 0.0
    %1309 = vmatprep.subr.mxu0 0.0
    %1310 = vmatpush1.msra.mxu0 0.0
    %1311 = vmatprep.subr.mxu0 0.0
    %v1312 = vand.u32 %v1047, 4294901760
    %1313 = vmatpush1.msra.mxu0 %v1312
    %1314 = vmatprep.subr.mxu0 0.0
    %v1315 = vand.u32 %v62, 4294901760
    %1316 = vmatpush1.msra.mxu0 %v1315
    %1317 = vmatprep.subr.mxu0 0.0
    %1318 = vmatpush2.msra.mxu0 0.0
    %1319 = vmatprep.subr.mxu0 0.0
    %1320 = vmatpush2.msra.mxu0 0.0
    %1321 = vmatprep.subr.mxu0 0.0
    %1322 = vmatpush2.msra.mxu0 0.0
    %1323 = vmatprep.subr.mxu0 0.0
    %1324 = vmatpush2.msra.mxu0 0.0
    %1325 = vmatprep.subr.mxu0 0.0
    %1326 = vmatpush2.msra.mxu0 0.0
    %1327 = vmatprep.subr.mxu0 0.0
    %1328 = vmatpush2.msra.mxu0 0.0
    %1329 = vmatprep.subr.mxu0 0.0
    %1330 = vmatpush2.msra.mxu0 0.0
    %1331 = vmatprep.subr.mxu0 0.0
    %1332 = vmatpush2.msra.mxu0 0.0
    %1333 = vmatprep.subr.mxu0 0.0
    %1334 = vmatpush2.msra.mxu0 0.0
    %1335 = vmatprep.subr.mxu0 0.0
    %1336 = vmatpush2.msra.mxu0 0.0
    %1337 = vmatprep.subr.mxu0 0.0
    %1338 = vmatpush2.msra.mxu0 0.0
    %1339 = vmatprep.subr.mxu0 0.0
    %1340 = vmatpush2.msra.mxu0 0.0
    %1341 = vmatprep.subr.mxu0 0.0
    %1342 = vmatpush2.msra.mxu0 0.0
    %1343 = vmatprep.subr.mxu0 0.0
    %1344 = vmatpush2.msra.mxu0 0.0
    %1345 = vmatprep.subr.mxu0 0.0
    %1346 = vmatpush2.msra.mxu0 0.0
    %1347 = vmatprep.subr.mxu0 0.0
    %1348 = vmatpush2.msra.mxu0 0.0
    %1349 = vmatprep.mubr.f32.mxu0 0.0
    %v1350 = vand.u32 %v1043, 4294901760
    %v1351 = vsub.f32 %v1043, %v1350
    %v1352 = vand.u32 %v1351, 4294901760
    %1353 = vmatmul.mubr.f32.gmra.mxu0 %v1352
    %v1354 = vpop.f32.mrf.mxu0
    %v1355 = vadd.f32 %v1280, %v1354
    %v1356 = vpop.f32.mrf.mxu0
    %1357 = vdwg.mxu0
    %1358 = vmatprep.subr.mxu0 0.0
    %1359 = vmatpush1.msra.mxu0 0.0
    %1360 = vmatprep.subr.mxu0 0.0
    %1361 = vmatpush1.msra.mxu0 0.0
    %1362 = vmatprep.subr.mxu0 0.0
    %1363 = vmatpush1.msra.mxu0 0.0
    %1364 = vmatprep.subr.mxu0 0.0
    %1365 = vmatpush1.msra.mxu0 0.0
    %1366 = vmatprep.subr.mxu0 0.0
    %1367 = vmatpush1.msra.mxu0 0.0
    %1368 = vmatprep.subr.mxu0 0.0
    %1369 = vmatpush1.msra.mxu0 0.0
    %1370 = vmatprep.subr.mxu0 0.0
    %1371 = vmatpush1.msra.mxu0 0.0
    %1372 = vmatprep.subr.mxu0 0.0
    %1373 = vmatpush1.msra.mxu0 0.0
    %1374 = vmatprep.subr.mxu0 0.0
    %1375 = vmatpush1.msra.mxu0 0.0
    %1376 = vmatprep.subr.mxu0 0.0
    %1377 = vmatpush1.msra.mxu0 0.0
    %1378 = vmatprep.subr.mxu0 0.0
    %1379 = vmatpush1.msra.mxu0 0.0
    %1380 = vmatprep.subr.mxu0 0.0
    %1381 = vmatpush1.msra.mxu0 0.0
    %1382 = vmatprep.subr.mxu0 0.0
    %1383 = vmatpush1.msra.mxu0 0.0
    %1384 = vmatprep.subr.mxu0 0.0
    %1385 = vmatpush1.msra.mxu0 0.0
    %1386 = vmatprep.subr.mxu0 0.0
    %v1387 = vand.u32 %v1047, 4294901760
    %v1388 = vsub.f32 %v1047, %v1387
    %v1389 = vand.u32 %v1388, 4294901760
    %1390 = vmatpush1.msra.mxu0 %v1389
    %1391 = vmatprep.subr.mxu0 0.0
    %v1392 = vand.u32 %v62, 4294901760
    %v1393 = vsub.f32 %v62, %v1392
    %v1394 = vand.u32 %v1393, 4294901760
    %1395 = vmatpush1.msra.mxu0 %v1394
    %1396 = vmatprep.subr.mxu0 0.0
    %1397 = vmatpush2.msra.mxu0 0.0
    %1398 = vmatprep.subr.mxu0 0.0
    %1399 = vmatpush2.msra.mxu0 0.0
    %1400 = vmatprep.subr.mxu0 0.0
    %1401 = vmatpush2.msra.mxu0 0.0
    %1402 = vmatprep.subr.mxu0 0.0
    %1403 = vmatpush2.msra.mxu0 0.0
    %1404 = vmatprep.subr.mxu0 0.0
    %1405 = vmatpush2.msra.mxu0 0.0
    %1406 = vmatprep.subr.mxu0 0.0
    %1407 = vmatpush2.msra.mxu0 0.0
    %1408 = vmatprep.subr.mxu0 0.0
    %1409 = vmatpush2.msra.mxu0 0.0
    %1410 = vmatprep.subr.mxu0 0.0
    %1411 = vmatpush2.msra.mxu0 0.0
    %1412 = vmatprep.subr.mxu0 0.0
    %1413 = vmatpush2.msra.mxu0 0.0
    %1414 = vmatprep.subr.mxu0 0.0
    %1415 = vmatpush2.msra.mxu0 0.0
    %1416 = vmatprep.subr.mxu0 0.0
    %1417 = vmatpush2.msra.mxu0 0.0
    %1418 = vmatprep.subr.mxu0 0.0
    %1419 = vmatpush2.msra.mxu0 0.0
    %1420 = vmatprep.subr.mxu0 0.0
    %1421 = vmatpush2.msra.mxu0 0.0
    %1422 = vmatprep.subr.mxu0 0.0
    %1423 = vmatpush2.msra.mxu0 0.0
    %1424 = vmatprep.subr.mxu0 0.0
    %1425 = vmatpush2.msra.mxu0 0.0
    %1426 = vmatprep.subr.mxu0 0.0
    %1427 = vmatpush2.msra.mxu0 0.0
    %1428 = vmatprep.mubr.f32.mxu0 0.0
    %v1429 = vand.u32 %v1043, 4294901760
    %1430 = vmatmul.mubr.f32.gmra.mxu0 %v1429
    %v1431 = vpop.f32.mrf.mxu0
    %v1432 = vadd.f32 %v1355, %v1431
    %v1433 = vpop.f32.mrf.mxu0
    %1434 = vdwg.mxu0
    %1435 = vmatprep.subr.mxu0 0.0
    %1436 = vmatpush1.msra.mxu0 0.0
    %1437 = vmatprep.subr.mxu0 0.0
    %1438 = vmatpush1.msra.mxu0 0.0
    %1439 = vmatprep.subr.mxu0 0.0
    %1440 = vmatpush1.msra.mxu0 0.0
    %1441 = vmatprep.subr.mxu0 0.0
    %1442 = vmatpush1.msra.mxu0 0.0
    %1443 = vmatprep.subr.mxu0 0.0
    %1444 = vmatpush1.msra.mxu0 0.0
    %1445 = vmatprep.subr.mxu0 0.0
    %1446 = vmatpush1.msra.mxu0 0.0
    %1447 = vmatprep.subr.mxu0 0.0
    %1448 = vmatpush1.msra.mxu0 0.0
    %1449 = vmatprep.subr.mxu0 0.0
    %1450 = vmatpush1.msra.mxu0 0.0
    %1451 = vmatprep.subr.mxu0 0.0
    %1452 = vmatpush1.msra.mxu0 0.0
    %1453 = vmatprep.subr.mxu0 0.0
    %1454 = vmatpush1.msra.mxu0 0.0
    %1455 = vmatprep.subr.mxu0 0.0
    %1456 = vmatpush1.msra.mxu0 0.0
    %1457 = vmatprep.subr.mxu0 0.0
    %1458 = vmatpush1.msra.mxu0 0.0
    %1459 = vmatprep.subr.mxu0 0.0
    %1460 = vmatpush1.msra.mxu0 0.0
    %1461 = vmatprep.subr.mxu0 0.0
    %1462 = vmatpush1.msra.mxu0 0.0
    %1463 = vmatprep.subr.mxu0 0.0
    %v1464 = vand.u32 %v1047, 4294901760
    %1465 = vmatpush1.msra.mxu0 %v1464
    %1466 = vmatprep.subr.mxu0 0.0
    %v1467 = vand.u32 %v62, 4294901760
    %1468 = vmatpush1.msra.mxu0 %v1467
    %1469 = vmatprep.subr.mxu0 0.0
    %1470 = vmatpush2.msra.mxu0 0.0
    %1471 = vmatprep.subr.mxu0 0.0
    %1472 = vmatpush2.msra.mxu0 0.0
    %1473 = vmatprep.subr.mxu0 0.0
    %1474 = vmatpush2.msra.mxu0 0.0
    %1475 = vmatprep.subr.mxu0 0.0
    %1476 = vmatpush2.msra.mxu0 0.0
    %1477 = vmatprep.subr.mxu0 0.0
    %1478 = vmatpush2.msra.mxu0 0.0
    %1479 = vmatprep.subr.mxu0 0.0
    %1480 = vmatpush2.msra.mxu0 0.0
    %1481 = vmatprep.subr.mxu0 0.0
    %1482 = vmatpush2.msra.mxu0 0.0
    %1483 = vmatprep.subr.mxu0 0.0
    %1484 = vmatpush2.msra.mxu0 0.0
    %1485 = vmatprep.subr.mxu0 0.0
    %1486 = vmatpush2.msra.mxu0 0.0
    %1487 = vmatprep.subr.mxu0 0.0
    %1488 = vmatpush2.msra.mxu0 0.0
    %1489 = vmatprep.subr.mxu0 0.0
    %1490 = vmatpush2.msra.mxu0 0.0
    %1491 = vmatprep.subr.mxu0 0.0
    %1492 = vmatpush2.msra.mxu0 0.0
    %1493 = vmatprep.subr.mxu0 0.0
    %1494 = vmatpush2.msra.mxu0 0.0
    %1495 = vmatprep.subr.mxu0 0.0
    %1496 = vmatpush2.msra.mxu0 0.0
    %1497 = vmatprep.subr.mxu0 0.0
    %1498 = vmatpush2.msra.mxu0 0.0
    %1499 = vmatprep.subr.mxu0 0.0
    %1500 = vmatpush2.msra.mxu0 0.0
    %1501 = vmatprep.mubr.f32.mxu0 0.0
    %v1502 = vand.u32 %v1043, 4294901760
    %1503 = vmatmul.mubr.f32.gmra.mxu0 %v1502
    %v1504 = vpop.f32.mrf.mxu0
    %v1505 = vadd.f32 %v1432, %v1504
    %v1506 = vpop.f32.mrf.mxu0
    %1507 = vdwg.mxu0
    %v1508 = vmax.f32 %v1505, 0.0
    %v1509 = vlaneseq
    %v1510 = vshrl.u32 %v1509, 7
    %v1511 = vsub.s32 0, %v1510
    %v1512 = vrot.slane %v69, %v1511
    %v1514 = vsel %vm542, %v1508, 0
    %1516 = vmatprep.subr.mxu0 0.0
    %1517 = vmatpush1.msra.mxu0 0.0
    %1518 = vmatprep.subr.mxu0 0.0
    %1519 = vmatpush1.msra.mxu0 0.0
    %1520 = vmatprep.subr.mxu0 0.0
    %1521 = vmatpush1.msra.mxu0 0.0
    %1522 = vmatprep.subr.mxu0 0.0
    %1523 = vmatpush1.msra.mxu0 0.0
    %1524 = vmatprep.subr.mxu0 0.0
    %1525 = vmatpush1.msra.mxu0 0.0
    %1526 = vmatprep.subr.mxu0 0.0
    %1527 = vmatpush1.msra.mxu0 0.0
    %1528 = vmatprep.subr.mxu0 0.0
    %1529 = vmatpush1.msra.mxu0 0.0
    %1530 = vmatprep.subr.mxu0 0.0
    %1531 = vmatpush1.msra.mxu0 0.0
    %1532 = vmatprep.subr.mxu0 0.0
    %1533 = vmatpush1.msra.mxu0 0.0
    %1534 = vmatprep.subr.mxu0 0.0
    %1535 = vmatpush1.msra.mxu0 0.0
    %1536 = vmatprep.subr.mxu0 0.0
    %1537 = vmatpush1.msra.mxu0 0.0
    %1538 = vmatprep.subr.mxu0 0.0
    %1539 = vmatpush1.msra.mxu0 0.0
    %1540 = vmatprep.subr.mxu0 0.0
    %v1541 = vand.u32 %v68, 4294901760
    %1542 = vmatpush1.msra.mxu0 %v1541
    %1543 = vmatprep.subr.mxu0 0.0
    %v1544 = vand.u32 %v67, 4294901760
    %1545 = vmatpush1.msra.mxu0 %v1544
    %1546 = vmatprep.subr.mxu0 0.0
    %v1547 = vand.u32 %v66, 4294901760
    %1548 = vmatpush1.msra.mxu0 %v1547
    %1549 = vmatprep.subr.mxu0 0.0
    %v1550 = vand.u32 %v65, 4294901760
    %1551 = vmatpush1.msra.mxu0 %v1550
    %1552 = vmatprep.subr.mxu0 0.0
    %1553 = vmatpush2.msra.mxu0 0.0
    %1554 = vmatprep.subr.mxu0 0.0
    %1555 = vmatpush2.msra.mxu0 0.0
    %1556 = vmatprep.subr.mxu0 0.0
    %1557 = vmatpush2.msra.mxu0 0.0
    %1558 = vmatprep.subr.mxu0 0.0
    %1559 = vmatpush2.msra.mxu0 0.0
    %1560 = vmatprep.subr.mxu0 0.0
    %1561 = vmatpush2.msra.mxu0 0.0
    %1562 = vmatprep.subr.mxu0 0.0
    %1563 = vmatpush2.msra.mxu0 0.0
    %1564 = vmatprep.subr.mxu0 0.0
    %1565 = vmatpush2.msra.mxu0 0.0
    %1566 = vmatprep.subr.mxu0 0.0
    %1567 = vmatpush2.msra.mxu0 0.0
    %1568 = vmatprep.subr.mxu0 0.0
    %1569 = vmatpush2.msra.mxu0 0.0
    %1570 = vmatprep.subr.mxu0 0.0
    %1571 = vmatpush2.msra.mxu0 0.0
    %1572 = vmatprep.subr.mxu0 0.0
    %1573 = vmatpush2.msra.mxu0 0.0
    %1574 = vmatprep.subr.mxu0 0.0
    %1575 = vmatpush2.msra.mxu0 0.0
    %1576 = vmatprep.subr.mxu0 0.0
    %1577 = vmatpush2.msra.mxu0 0.0
    %1578 = vmatprep.subr.mxu0 0.0
    %1579 = vmatpush2.msra.mxu0 0.0
    %1580 = vmatprep.subr.mxu0 0.0
    %1581 = vmatpush2.msra.mxu0 0.0
    %1582 = vmatprep.subr.mxu0 0.0
    %1583 = vmatpush2.msra.mxu0 0.0
    %1584 = vmatprep.mubr.f32.mxu0 0.0
    %v1585 = vand.u32 %v1514, 4294901760
    %v1586 = vsub.f32 %v1514, %v1585
    %v1587 = vand.u32 %v1586, 4294901760
    %v1588 = vsub.f32 %v1586, %v1587
    %v1589 = vand.u32 %v1588, 4294901760
    %1590 = vmatmul.mubr.f32.gmra.mxu0 %v1589
    %v1591 = vpop.f32.mrf.mxu0
    %v1592 = vadd.f32 %v1512, %v1591
    %v1593 = vpop.f32.mrf.mxu0
    %1594 = vdwg.mxu0
    %1595 = vmatprep.subr.mxu0 0.0
    %1596 = vmatpush1.msra.mxu0 0.0
    %1597 = vmatprep.subr.mxu0 0.0
    %1598 = vmatpush1.msra.mxu0 0.0
    %1599 = vmatprep.subr.mxu0 0.0
    %1600 = vmatpush1.msra.mxu0 0.0
    %1601 = vmatprep.subr.mxu0 0.0
    %1602 = vmatpush1.msra.mxu0 0.0
    %1603 = vmatprep.subr.mxu0 0.0
    %1604 = vmatpush1.msra.mxu0 0.0
    %1605 = vmatprep.subr.mxu0 0.0
    %1606 = vmatpush1.msra.mxu0 0.0
    %1607 = vmatprep.subr.mxu0 0.0
    %1608 = vmatpush1.msra.mxu0 0.0
    %1609 = vmatprep.subr.mxu0 0.0
    %1610 = vmatpush1.msra.mxu0 0.0
    %1611 = vmatprep.subr.mxu0 0.0
    %1612 = vmatpush1.msra.mxu0 0.0
    %1613 = vmatprep.subr.mxu0 0.0
    %1614 = vmatpush1.msra.mxu0 0.0
    %1615 = vmatprep.subr.mxu0 0.0
    %1616 = vmatpush1.msra.mxu0 0.0
    %1617 = vmatprep.subr.mxu0 0.0
    %1618 = vmatpush1.msra.mxu0 0.0
    %1619 = vmatprep.subr.mxu0 0.0
    %v1620 = vand.u32 %v68, 4294901760
    %v1621 = vsub.f32 %v68, %v1620
    %v1622 = vand.u32 %v1621, 4294901760
    %v1623 = vsub.f32 %v1621, %v1622
    %v1624 = vand.u32 %v1623, 4294901760
    %1625 = vmatpush1.msra.mxu0 %v1624
    %1626 = vmatprep.subr.mxu0 0.0
    %v1627 = vand.u32 %v67, 4294901760
    %v1628 = vsub.f32 %v67, %v1627
    %v1629 = vand.u32 %v1628, 4294901760
    %v1630 = vsub.f32 %v1628, %v1629
    %v1631 = vand.u32 %v1630, 4294901760
    %1632 = vmatpush1.msra.mxu0 %v1631
    %1633 = vmatprep.subr.mxu0 0.0
    %v1634 = vand.u32 %v66, 4294901760
    %v1635 = vsub.f32 %v66, %v1634
    %v1636 = vand.u32 %v1635, 4294901760
    %v1637 = vsub.f32 %v1635, %v1636
    %v1638 = vand.u32 %v1637, 4294901760
    %1639 = vmatpush1.msra.mxu0 %v1638
    %1640 = vmatprep.subr.mxu0 0.0
    %v1641 = vand.u32 %v65, 4294901760
    %v1642 = vsub.f32 %v65, %v1641
    %v1643 = vand.u32 %v1642, 4294901760
    %v1644 = vsub.f32 %v1642, %v1643
    %v1645 = vand.u32 %v1644, 4294901760
    %1646 = vmatpush1.msra.mxu0 %v1645
    %1647 = vmatprep.subr.mxu0 0.0
    %1648 = vmatpush2.msra.mxu0 0.0
    %1649 = vmatprep.subr.mxu0 0.0
    %1650 = vmatpush2.msra.mxu0 0.0
    %1651 = vmatprep.subr.mxu0 0.0
    %1652 = vmatpush2.msra.mxu0 0.0
    %1653 = vmatprep.subr.mxu0 0.0
    %1654 = vmatpush2.msra.mxu0 0.0
    %1655 = vmatprep.subr.mxu0 0.0
    %1656 = vmatpush2.msra.mxu0 0.0
    %1657 = vmatprep.subr.mxu0 0.0
    %1658 = vmatpush2.msra.mxu0 0.0
    %1659 = vmatprep.subr.mxu0 0.0
    %1660 = vmatpush2.msra.mxu0 0.0
    %1661 = vmatprep.subr.mxu0 0.0
    %1662 = vmatpush2.msra.mxu0 0.0
    %1663 = vmatprep.subr.mxu0 0.0
    %1664 = vmatpush2.msra.mxu0 0.0
    %1665 = vmatprep.subr.mxu0 0.0
    %1666 = vmatpush2.msra.mxu0 0.0
    %1667 = vmatprep.subr.mxu0 0.0
    %1668 = vmatpush2.msra.mxu0 0.0
    %1669 = vmatprep.subr.mxu0 0.0
    %1670 = vmatpush2.msra.mxu0 0.0
    %1671 = vmatprep.subr.mxu0 0.0
    %1672 = vmatpush2.msra.mxu0 0.0
    %1673 = vmatprep.subr.mxu0 0.0
    %1674 = vmatpush2.msra.mxu0 0.0
    %1675 = vmatprep.subr.mxu0 0.0
    %1676 = vmatpush2.msra.mxu0 0.0
    %1677 = vmatprep.subr.mxu0 0.0
    %1678 = vmatpush2.msra.mxu0 0.0
    %1679 = vmatprep.mubr.f32.mxu0 0.0
    %v1680 = vand.u32 %v1514, 4294901760
    %1681 = vmatmul.mubr.f32.gmra.mxu0 %v1680
    %v1682 = vpop.f32.mrf.mxu0
    %v1683 = vadd.f32 %v1592, %v1682
    %v1684 = vpop.f32.mrf.mxu0
    %1685 = vdwg.mxu0
    %1686 = vmatprep.subr.mxu0 0.0
    %1687 = vmatpush1.msra.mxu0 0.0
    %1688 = vmatprep.subr.mxu0 0.0
    %1689 = vmatpush1.msra.mxu0 0.0
    %1690 = vmatprep.subr.mxu0 0.0
    %1691 = vmatpush1.msra.mxu0 0.0
    %1692 = vmatprep.subr.mxu0 0.0
    %1693 = vmatpush1.msra.mxu0 0.0
    %1694 = vmatprep.subr.mxu0 0.0
    %1695 = vmatpush1.msra.mxu0 0.0
    %1696 = vmatprep.subr.mxu0 0.0
    %1697 = vmatpush1.msra.mxu0 0.0
    %1698 = vmatprep.subr.mxu0 0.0
    %1699 = vmatpush1.msra.mxu0 0.0
    %1700 = vmatprep.subr.mxu0 0.0
    %1701 = vmatpush1.msra.mxu0 0.0
    %1702 = vmatprep.subr.mxu0 0.0
    %1703 = vmatpush1.msra.mxu0 0.0
    %1704 = vmatprep.subr.mxu0 0.0
    %1705 = vmatpush1.msra.mxu0 0.0
    %1706 = vmatprep.subr.mxu0 0.0
    %1707 = vmatpush1.msra.mxu0 0.0
    %1708 = vmatprep.subr.mxu0 0.0
    %1709 = vmatpush1.msra.mxu0 0.0
    %1710 = vmatprep.subr.mxu0 0.0
    %v1711 = vand.u32 %v68, 4294901760
    %v1712 = vsub.f32 %v68, %v1711
    %1713 = vmatpush1.msra.mxu0 %v1712
    %1714 = vmatprep.subr.mxu0 0.0
    %v1715 = vand.u32 %v67, 4294901760
    %v1716 = vsub.f32 %v67, %v1715
    %1717 = vmatpush1.msra.mxu0 %v1716
    %1718 = vmatprep.subr.mxu0 0.0
    %v1719 = vand.u32 %v66, 4294901760
    %v1720 = vsub.f32 %v66, %v1719
    %1721 = vmatpush1.msra.mxu0 %v1720
    %1722 = vmatprep.subr.mxu0 0.0
    %v1723 = vand.u32 %v65, 4294901760
    %v1724 = vsub.f32 %v65, %v1723
    %1725 = vmatpush1.msra.mxu0 %v1724
    %1726 = vmatprep.subr.mxu0 0.0
    %1727 = vmatpush2.msra.mxu0 0.0
    %1728 = vmatprep.subr.mxu0 0.0
    %1729 = vmatpush2.msra.mxu0 0.0
    %1730 = vmatprep.subr.mxu0 0.0
    %1731 = vmatpush2.msra.mxu0 0.0
    %1732 = vmatprep.subr.mxu0 0.0
    %1733 = vmatpush2.msra.mxu0 0.0
    %1734 = vmatprep.subr.mxu0 0.0
    %1735 = vmatpush2.msra.mxu0 0.0
    %1736 = vmatprep.subr.mxu0 0.0
    %1737 = vmatpush2.msra.mxu0 0.0
    %1738 = vmatprep.subr.mxu0 0.0
    %1739 = vmatpush2.msra.mxu0 0.0
    %1740 = vmatprep.subr.mxu0 0.0
    %1741 = vmatpush2.msra.mxu0 0.0
    %1742 = vmatprep.subr.mxu0 0.0
    %1743 = vmatpush2.msra.mxu0 0.0
    %1744 = vmatprep.subr.mxu0 0.0
    %1745 = vmatpush2.msra.mxu0 0.0
    %1746 = vmatprep.subr.mxu0 0.0
    %1747 = vmatpush2.msra.mxu0 0.0
    %1748 = vmatprep.subr.mxu0 0.0
    %1749 = vmatpush2.msra.mxu0 0.0
    %1750 = vmatprep.subr.mxu0 0.0
    %1751 = vmatpush2.msra.mxu0 0.0
    %1752 = vmatprep.subr.mxu0 0.0
    %1753 = vmatpush2.msra.mxu0 0.0
    %1754 = vmatprep.subr.mxu0 0.0
    %1755 = vmatpush2.msra.mxu0 0.0
    %1756 = vmatprep.subr.mxu0 0.0
    %1757 = vmatpush2.msra.mxu0 0.0
    %1758 = vmatprep.mubr.f32.mxu0 0.0
    %v1759 = vand.u32 %v1514, 4294901760
    %v1760 = vsub.f32 %v1514, %v1759
    %1761 = vmatmul.mubr.f32.gmra.mxu0 %v1760
    %v1762 = vpop.f32.mrf.mxu0
    %v1763 = vadd.f32 %v1683, %v1762
    %v1764 = vpop.f32.mrf.mxu0
    %1765 = vdwg.mxu0
    %1766 = vmatprep.subr.mxu0 0.0
    %1767 = vmatpush1.msra.mxu0 0.0
    %1768 = vmatprep.subr.mxu0 0.0
    %1769 = vmatpush1.msra.mxu0 0.0
    %1770 = vmatprep.subr.mxu0 0.0
    %1771 = vmatpush1.msra.mxu0 0.0
    %1772 = vmatprep.subr.mxu0 0.0
    %1773 = vmatpush1.msra.mxu0 0.0
    %1774 = vmatprep.subr.mxu0 0.0
    %1775 = vmatpush1.msra.mxu0 0.0
    %1776 = vmatprep.subr.mxu0 0.0
    %1777 = vmatpush1.msra.mxu0 0.0
    %1778 = vmatprep.subr.mxu0 0.0
    %1779 = vmatpush1.msra.mxu0 0.0
    %1780 = vmatprep.subr.mxu0 0.0
    %1781 = vmatpush1.msra.mxu0 0.0
    %1782 = vmatprep.subr.mxu0 0.0
    %1783 = vmatpush1.msra.mxu0 0.0
    %1784 = vmatprep.subr.mxu0 0.0
    %1785 = vmatpush1.msra.mxu0 0.0
    %1786 = vmatprep.subr.mxu0 0.0
    %1787 = vmatpush1.msra.mxu0 0.0
    %1788 = vmatprep.subr.mxu0 0.0
    %1789 = vmatpush1.msra.mxu0 0.0
    %1790 = vmatprep.subr.mxu0 0.0
    %v1791 = vand.u32 %v68, 4294901760
    %1792 = vmatpush1.msra.mxu0 %v1791
    %1793 = vmatprep.subr.mxu0 0.0
    %v1794 = vand.u32 %v67, 4294901760
    %1795 = vmatpush1.msra.mxu0 %v1794
    %1796 = vmatprep.subr.mxu0 0.0
    %v1797 = vand.u32 %v66, 4294901760
    %1798 = vmatpush1.msra.mxu0 %v1797
    %1799 = vmatprep.subr.mxu0 0.0
    %v1800 = vand.u32 %v65, 4294901760
    %1801 = vmatpush1.msra.mxu0 %v1800
    %1802 = vmatprep.subr.mxu0 0.0
    %1803 = vmatpush2.msra.mxu0 0.0
    %1804 = vmatprep.subr.mxu0 0.0
    %1805 = vmatpush2.msra.mxu0 0.0
    %1806 = vmatprep.subr.mxu0 0.0
    %1807 = vmatpush2.msra.mxu0 0.0
    %1808 = vmatprep.subr.mxu0 0.0
    %1809 = vmatpush2.msra.mxu0 0.0
    %1810 = vmatprep.subr.mxu0 0.0
    %1811 = vmatpush2.msra.mxu0 0.0
    %1812 = vmatprep.subr.mxu0 0.0
    %1813 = vmatpush2.msra.mxu0 0.0
    %1814 = vmatprep.subr.mxu0 0.0
    %1815 = vmatpush2.msra.mxu0 0.0
    %1816 = vmatprep.subr.mxu0 0.0
    %1817 = vmatpush2.msra.mxu0 0.0
    %1818 = vmatprep.subr.mxu0 0.0
    %1819 = vmatpush2.msra.mxu0 0.0
    %1820 = vmatprep.subr.mxu0 0.0
    %1821 = vmatpush2.msra.mxu0 0.0
    %1822 = vmatprep.subr.mxu0 0.0
    %1823 = vmatpush2.msra.mxu0 0.0
    %1824 = vmatprep.subr.mxu0 0.0
    %1825 = vmatpush2.msra.mxu0 0.0
    %1826 = vmatprep.subr.mxu0 0.0
    %1827 = vmatpush2.msra.mxu0 0.0
    %1828 = vmatprep.subr.mxu0 0.0
    %1829 = vmatpush2.msra.mxu0 0.0
    %1830 = vmatprep.subr.mxu0 0.0
    %1831 = vmatpush2.msra.mxu0 0.0
    %1832 = vmatprep.subr.mxu0 0.0
    %1833 = vmatpush2.msra.mxu0 0.0
    %1834 = vmatprep.mubr.f32.mxu0 0.0
    %v1835 = vand.u32 %v1514, 4294901760
    %v1836 = vsub.f32 %v1514, %v1835
    %v1837 = vand.u32 %v1836, 4294901760
    %1838 = vmatmul.mubr.f32.gmra.mxu0 %v1837
    %v1839 = vpop.f32.mrf.mxu0
    %v1840 = vadd.f32 %v1763, %v1839
    %v1841 = vpop.f32.mrf.mxu0
    %1842 = vdwg.mxu0
    %1843 = vmatprep.subr.mxu0 0.0
    %1844 = vmatpush1.msra.mxu0 0.0
    %1845 = vmatprep.subr.mxu0 0.0
    %1846 = vmatpush1.msra.mxu0 0.0
    %1847 = vmatprep.subr.mxu0 0.0
    %1848 = vmatpush1.msra.mxu0 0.0
    %1849 = vmatprep.subr.mxu0 0.0
    %1850 = vmatpush1.msra.mxu0 0.0
    %1851 = vmatprep.subr.mxu0 0.0
    %1852 = vmatpush1.msra.mxu0 0.0
    %1853 = vmatprep.subr.mxu0 0.0
    %1854 = vmatpush1.msra.mxu0 0.0
    %1855 = vmatprep.subr.mxu0 0.0
    %1856 = vmatpush1.msra.mxu0 0.0
    %1857 = vmatprep.subr.mxu0 0.0
    %1858 = vmatpush1.msra.mxu0 0.0
    %1859 = vmatprep.subr.mxu0 0.0
    %1860 = vmatpush1.msra.mxu0 0.0
    %1861 = vmatprep.subr.mxu0 0.0
    %1862 = vmatpush1.msra.mxu0 0.0
    %1863 = vmatprep.subr.mxu0 0.0
    %1864 = vmatpush1.msra.mxu0 0.0
    %1865 = vmatprep.subr.mxu0 0.0
    %1866 = vmatpush1.msra.mxu0 0.0
    %1867 = vmatprep.subr.mxu0 0.0
    %v1868 = vand.u32 %v68, 4294901760
    %v1869 = vsub.f32 %v68, %v1868
    %v1870 = vand.u32 %v1869, 4294901760
    %1871 = vmatpush1.msra.mxu0 %v1870
    %1872 = vmatprep.subr.mxu0 0.0
    %v1873 = vand.u32 %v67, 4294901760
    %v1874 = vsub.f32 %v67, %v1873
    %v1875 = vand.u32 %v1874, 4294901760
    %1876 = vmatpush1.msra.mxu0 %v1875
    %1877 = vmatprep.subr.mxu0 0.0
    %v1878 = vand.u32 %v66, 4294901760
    %v1879 = vsub.f32 %v66, %v1878
    %v1880 = vand.u32 %v1879, 4294901760
    %1881 = vmatpush1.msra.mxu0 %v1880
    %1882 = vmatprep.subr.mxu0 0.0
    %v1883 = vand.u32 %v65, 4294901760
    %v1884 = vsub.f32 %v65, %v1883
    %v1885 = vand.u32 %v1884, 4294901760
    %1886 = vmatpush1.msra.mxu0 %v1885
    %1887 = vmatprep.subr.mxu0 0.0
    %1888 = vmatpush2.msra.mxu0 0.0
    %1889 = vmatprep.subr.mxu0 0.0
    %1890 = vmatpush2.msra.mxu0 0.0
    %1891 = vmatprep.subr.mxu0 0.0
    %1892 = vmatpush2.msra.mxu0 0.0
    %1893 = vmatprep.subr.mxu0 0.0
    %1894 = vmatpush2.msra.mxu0 0.0
    %1895 = vmatprep.subr.mxu0 0.0
    %1896 = vmatpush2.msra.mxu0 0.0
    %1897 = vmatprep.subr.mxu0 0.0
    %1898 = vmatpush2.msra.mxu0 0.0
    %1899 = vmatprep.subr.mxu0 0.0
    %1900 = vmatpush2.msra.mxu0 0.0
    %1901 = vmatprep.subr.mxu0 0.0
    %1902 = vmatpush2.msra.mxu0 0.0
    %1903 = vmatprep.subr.mxu0 0.0
    %1904 = vmatpush2.msra.mxu0 0.0
    %1905 = vmatprep.subr.mxu0 0.0
    %1906 = vmatpush2.msra.mxu0 0.0
    %1907 = vmatprep.subr.mxu0 0.0
    %1908 = vmatpush2.msra.mxu0 0.0
    %1909 = vmatprep.subr.mxu0 0.0
    %1910 = vmatpush2.msra.mxu0 0.0
    %1911 = vmatprep.subr.mxu0 0.0
    %1912 = vmatpush2.msra.mxu0 0.0
    %1913 = vmatprep.subr.mxu0 0.0
    %1914 = vmatpush2.msra.mxu0 0.0
    %1915 = vmatprep.subr.mxu0 0.0
    %1916 = vmatpush2.msra.mxu0 0.0
    %1917 = vmatprep.subr.mxu0 0.0
    %1918 = vmatpush2.msra.mxu0 0.0
    %1919 = vmatprep.mubr.f32.mxu0 0.0
    %v1920 = vand.u32 %v1514, 4294901760
    %1921 = vmatmul.mubr.f32.gmra.mxu0 %v1920
    %v1922 = vpop.f32.mrf.mxu0
    %v1923 = vadd.f32 %v1840, %v1922
    %v1924 = vpop.f32.mrf.mxu0
    %1925 = vdwg.mxu0
    %1926 = vmatprep.subr.mxu0 0.0
    %1927 = vmatpush1.msra.mxu0 0.0
    %1928 = vmatprep.subr.mxu0 0.0
    %1929 = vmatpush1.msra.mxu0 0.0
    %1930 = vmatprep.subr.mxu0 0.0
    %1931 = vmatpush1.msra.mxu0 0.0
    %1932 = vmatprep.subr.mxu0 0.0
    %1933 = vmatpush1.msra.mxu0 0.0
    %1934 = vmatprep.subr.mxu0 0.0
    %1935 = vmatpush1.msra.mxu0 0.0
    %1936 = vmatprep.subr.mxu0 0.0
    %1937 = vmatpush1.msra.mxu0 0.0
    %1938 = vmatprep.subr.mxu0 0.0
    %1939 = vmatpush1.msra.mxu0 0.0
    %1940 = vmatprep.subr.mxu0 0.0
    %1941 = vmatpush1.msra.mxu0 0.0
    %1942 = vmatprep.subr.mxu0 0.0
    %1943 = vmatpush1.msra.mxu0 0.0
    %1944 = vmatprep.subr.mxu0 0.0
    %1945 = vmatpush1.msra.mxu0 0.0
    %1946 = vmatprep.subr.mxu0 0.0
    %1947 = vmatpush1.msra.mxu0 0.0
    %1948 = vmatprep.subr.mxu0 0.0
    %1949 = vmatpush1.msra.mxu0 0.0
    %1950 = vmatprep.subr.mxu0 0.0
    %v1951 = vand.u32 %v68, 4294901760
    %1952 = vmatpush1.msra.mxu0 %v1951
    %1953 = vmatprep.subr.mxu0 0.0
    %v1954 = vand.u32 %v67, 4294901760
    %1955 = vmatpush1.msra.mxu0 %v1954
    %1956 = vmatprep.subr.mxu0 0.0
    %v1957 = vand.u32 %v66, 4294901760
    %1958 = vmatpush1.msra.mxu0 %v1957
    %1959 = vmatprep.subr.mxu0 0.0
    %v1960 = vand.u32 %v65, 4294901760
    %1961 = vmatpush1.msra.mxu0 %v1960
    %1962 = vmatprep.subr.mxu0 0.0
    %1963 = vmatpush2.msra.mxu0 0.0
    %1964 = vmatprep.subr.mxu0 0.0
    %1965 = vmatpush2.msra.mxu0 0.0
    %1966 = vmatprep.subr.mxu0 0.0
    %1967 = vmatpush2.msra.mxu0 0.0
    %1968 = vmatprep.subr.mxu0 0.0
    %1969 = vmatpush2.msra.mxu0 0.0
    %1970 = vmatprep.subr.mxu0 0.0
    %1971 = vmatpush2.msra.mxu0 0.0
    %1972 = vmatprep.subr.mxu0 0.0
    %1973 = vmatpush2.msra.mxu0 0.0
    %1974 = vmatprep.subr.mxu0 0.0
    %1975 = vmatpush2.msra.mxu0 0.0
    %1976 = vmatprep.subr.mxu0 0.0
    %1977 = vmatpush2.msra.mxu0 0.0
    %1978 = vmatprep.subr.mxu0 0.0
    %1979 = vmatpush2.msra.mxu0 0.0
    %1980 = vmatprep.subr.mxu0 0.0
    %1981 = vmatpush2.msra.mxu0 0.0
    %1982 = vmatprep.subr.mxu0 0.0
    %1983 = vmatpush2.msra.mxu0 0.0
    %1984 = vmatprep.subr.mxu0 0.0
    %1985 = vmatpush2.msra.mxu0 0.0
    %1986 = vmatprep.subr.mxu0 0.0
    %1987 = vmatpush2.msra.mxu0 0.0
    %1988 = vmatprep.subr.mxu0 0.0
    %1989 = vmatpush2.msra.mxu0 0.0
    %1990 = vmatprep.subr.mxu0 0.0
    %1991 = vmatpush2.msra.mxu0 0.0
    %1992 = vmatprep.subr.mxu0 0.0
    %1993 = vmatpush2.msra.mxu0 0.0
    %1994 = vmatprep.mubr.f32.mxu0 0.0
    %v1995 = vand.u32 %v1514, 4294901760
    %1996 = vmatmul.mubr.f32.gmra.mxu0 %v1995
    %v1997 = vpop.f32.mrf.mxu0
    %v1998 = vadd.f32 %v1923, %v1997
    %v1999 = vpop.f32.mrf.mxu0
    %2000 = vdwg.mxu0
    %v2001 = vlaneseq
    %v2002 = vshrl.u32 %v2001, 7
    %v2003 = vadd.s32 %v2002, 8
    %v2004 = vadd.s32 %v2002, 16
    %v2005 = vcvt.s32.f32 %v2002
    %v2006 = vcvt.s32.f32 %v2003
    %v2007 = vcvt.s32.f32 %v2004
    %v2008 = vlaneseq
    %v2009 = vand.u32 %v2008, 127
    %v2010 = vcvt.s32.f32 %v2009
    %vm2011 = vcmp.ge.f32.partialorder %v2005, 8.0
    %vm2012 = vcmp.ge.f32.partialorder %v2006, 8.0
    %vm2013 = vcmp.ge.f32.partialorder %v2007, 8.0
    %v2014 = vsel %vm2011, 1, 0
    %v2015 = vsel %vm2012, 1, 0
    %v2016 = vsel %vm2013, 1, 0
    %v2017 = vcvt.s32.f32 %v2014
    %v2018 = vcvt.s32.f32 %v2015
    %v2019 = vcvt.s32.f32 %v2016
    %v2020 = vadd.f32 %v2017, 0.0
    %v2021 = vadd.f32 %v2018, 0.0
    %v2022 = vadd.f32 %v2019, 0.0
    %vm2023 = vcmp.ge.f32.partialorder %v2005, 16.0
    %vm2024 = vcmp.ge.f32.partialorder %v2006, 16.0
    %vm2025 = vcmp.ge.f32.partialorder %v2007, 16.0
    %v2026 = vsel %vm2023, 1, 0
    %v2027 = vsel %vm2024, 1, 0
    %v2028 = vsel %vm2025, 1, 0
    %v2029 = vcvt.s32.f32 %v2026
    %v2030 = vcvt.s32.f32 %v2027
    %v2031 = vcvt.s32.f32 %v2028
    %v2032 = vadd.f32 %v2020, %v2029
    %v2033 = vadd.f32 %v2021, %v2030
    %v2034 = vadd.f32 %v2022, %v2031
    %vm2035 = vcmp.ge.f32.partialorder %v2010, 8.0
    %v2036 = vsel %vm2035, 1, 0
    %v2037 = vcvt.s32.f32 %v2036
    %v2038 = vadd.f32 %v2037, 0.0
    %vm2039 = vcmp.ge.f32.partialorder %v2010, 16.0
    %v2040 = vsel %vm2039, 1, 0
    %v2041 = vcvt.s32.f32 %v2040
    %v2042 = vadd.f32 %v2038, %v2041
    %vm2043 = vcmp.eq.f32.partialorder %v2032, %v2042
    %vm2044 = vcmp.eq.f32.partialorder %v2033, %v2042
    %vm2045 = vcmp.eq.f32.partialorder %v2034, %v2042
    %v2046 = vsel %vm2043, 1, 0
    %v2047 = vsel %vm2044, 1, 0
    %v2048 = vsel %vm2045, 1, 0
    %v2049 = vcvt.s32.f32 %v2046
    %v2050 = vcvt.s32.f32 %v2047
    %v2051 = vcvt.s32.f32 %v2048
    %vm2052 = vcmp.le.f32.partialorder %v2005, %v2010
    %vm2053 = vcmp.le.f32.partialorder %v2006, %v2010
    %vm2054 = vcmp.le.f32.partialorder %v2007, %v2010
    %vm2055 = vmand %vm2043, %vm2052
    %vm2056 = vmand %vm2044, %vm2053
    %vm2057 = vmand %vm2045, %vm2054
    %v2058 = vsel %vm2055, 1, 0
    %v2059 = vsel %vm2056, 1, 0
    %v2060 = vsel %vm2057, 1, 0
    %v2061 = vcvt.s32.f32 %v2058
    %v2062 = vcvt.s32.f32 %v2059
    %v2063 = vcvt.s32.f32 %v2060
    %vm2064 = vcmp.eq.f32.partialorder %v2032, %v2010
    %vm2065 = vcmp.eq.f32.partialorder %v2033, %v2010
    %vm2066 = vcmp.eq.f32.partialorder %v2034, %v2010
    %v2067 = vsel %vm2064, 1, 0
    %v2068 = vsel %vm2065, 1, 0
    %v2069 = vsel %vm2066, 1, 0
    %v2070 = vcvt.s32.f32 %v2067
    %v2071 = vcvt.s32.f32 %v2068
    %v2072 = vcvt.s32.f32 %v2069
    %vm2073 = vcmp.eq.f32.partialorder %v2005, %v2042
    %v2074 = vsel %vm2073, 1, 0
    %v2075 = vcvt.s32.f32 %v2074
    %v2076 = vmul.f32 %v2042, 8.0
    %v2077 = vsub.f32 %v2010, %v2076
    %2079 = vrot.lane.b32.xlu0 %v1998, 104
    %v2080 = vpop.permute.xlu0 %2079
    %vm2082 = vcmask 195584
    %v2083 = vsel %vm2082, %v1998, -inf
    %2084 = vmax.xlane.f32.xlu0 %v2083
    %v2085 = vpop.xlane.xlu0 %2084
    %v2086 = vsel %vm2082, %v2080, -inf
    %2087 = vmax.xlane.f32.xlu0 %v2086
    %v2088 = vpop.xlane.xlu0 %2087
    %v2089 = vsub.f32 %v1998, %v2085
    %v2090 = vsub.f32 %v2080, %v2088
    %v2091 = vmul.f32 %v2089, 1.442695
    %v2092 = vpow.pop %v2091
    %v2093 = vmul.f32 %v2090, 1.442695
    %v2094 = vpow.pop %v2093
    %v2096 = vsel %vm2082, %v2092, 0
    %v2099 = vsel %vm2082, %v2094, 0
    %2101 = vmatprep.subr.mxu0 0.0
    %2102 = vmatpush1.msra.mxu0 0.0
    %2103 = vmatprep.subr.mxu0 0.0
    %2104 = vmatpush1.msra.mxu0 0.0
    %2105 = vmatprep.subr.mxu0 0.0
    %2106 = vmatpush1.msra.mxu0 0.0
    %2107 = vmatprep.subr.mxu0 0.0
    %2108 = vmatpush1.msra.mxu0 0.0
    %2109 = vmatprep.subr.mxu0 0.0
    %2110 = vmatpush1.msra.mxu0 0.0
    %2111 = vmatprep.subr.mxu0 0.0
    %2112 = vmatpush1.msra.mxu0 0.0
    %2113 = vmatprep.subr.mxu0 0.0
    %2114 = vmatpush1.msra.mxu0 0.0
    %2115 = vmatprep.subr.mxu0 0.0
    %2116 = vmatpush1.msra.mxu0 0.0
    %2117 = vmatprep.subr.mxu0 0.0
    %2118 = vmatpush1.msra.mxu0 0.0
    %2119 = vmatprep.subr.mxu0 0.0
    %2120 = vmatpush1.msra.mxu0 0.0
    %2121 = vmatprep.subr.mxu0 0.0
    %2122 = vmatpush1.msra.mxu0 0.0
    %2123 = vmatprep.subr.mxu0 0.0
    %2124 = vmatpush1.msra.mxu0 0.0
    %2125 = vmatprep.subr.mxu0 0.0
    %2126 = vmatpush1.msra.mxu0 0.0
    %2127 = vmatprep.subr.mxu0 0.0
    %v2128 = vand.u32 %v2051, 4294901760
    %2129 = vmatpush1.msra.mxu0 %v2128
    %2130 = vmatprep.subr.mxu0 0.0
    %v2131 = vand.u32 %v2050, 4294901760
    %2132 = vmatpush1.msra.mxu0 %v2131
    %2133 = vmatprep.subr.mxu0 0.0
    %v2134 = vand.u32 %v2049, 4294901760
    %2135 = vmatpush1.msra.mxu0 %v2134
    %2136 = vmatprep.subr.mxu0 0.0
    %2137 = vmatpush2.msra.mxu0 0.0
    %2138 = vmatprep.subr.mxu0 0.0
    %2139 = vmatpush2.msra.mxu0 0.0
    %2140 = vmatprep.subr.mxu0 0.0
    %2141 = vmatpush2.msra.mxu0 0.0
    %2142 = vmatprep.subr.mxu0 0.0
    %2143 = vmatpush2.msra.mxu0 0.0
    %2144 = vmatprep.subr.mxu0 0.0
    %2145 = vmatpush2.msra.mxu0 0.0
    %2146 = vmatprep.subr.mxu0 0.0
    %2147 = vmatpush2.msra.mxu0 0.0
    %2148 = vmatprep.subr.mxu0 0.0
    %2149 = vmatpush2.msra.mxu0 0.0
    %2150 = vmatprep.subr.mxu0 0.0
    %2151 = vmatpush2.msra.mxu0 0.0
    %2152 = vmatprep.subr.mxu0 0.0
    %2153 = vmatpush2.msra.mxu0 0.0
    %2154 = vmatprep.subr.mxu0 0.0
    %2155 = vmatpush2.msra.mxu0 0.0
    %2156 = vmatprep.subr.mxu0 0.0
    %2157 = vmatpush2.msra.mxu0 0.0
    %2158 = vmatprep.subr.mxu0 0.0
    %2159 = vmatpush2.msra.mxu0 0.0
    %2160 = vmatprep.subr.mxu0 0.0
    %2161 = vmatpush2.msra.mxu0 0.0
    %2162 = vmatprep.subr.mxu0 0.0
    %2163 = vmatpush2.msra.mxu0 0.0
    %2164 = vmatprep.subr.mxu0 0.0
    %2165 = vmatpush2.msra.mxu0 0.0
    %2166 = vmatprep.subr.mxu0 0.0
    %2167 = vmatpush2.msra.mxu0 0.0
    %2168 = vmatprep.mubr.f32.mxu0 0.0
    %v2169 = vand.u32 %v2096, 4294901760
    %v2170 = vsub.f32 %v2096, %v2169
    %v2171 = vand.u32 %v2170, 4294901760
    %v2172 = vsub.f32 %v2170, %v2171
    %v2173 = vand.u32 %v2172, 4294901760
    %2174 = vmatmul.mubr.f32.gmra.mxu0 %v2173
    %v2175 = vpop.f32.mrf.mxu0
    %v2176 = vadd.f32 0.0, %v2175
    %v2177 = vpop.f32.mrf.mxu0
    %2178 = vmatprep.mubr.f32.mxu0 0.0
    %v2179 = vand.u32 %v2099, 4294901760
    %v2180 = vsub.f32 %v2099, %v2179
    %v2181 = vand.u32 %v2180, 4294901760
    %v2182 = vsub.f32 %v2180, %v2181
    %v2183 = vand.u32 %v2182, 4294901760
    %2184 = vmatmul.mubr.f32.gmra.mxu0 %v2183
    %v2185 = vpop.f32.mrf.mxu0
    %v2186 = vadd.f32 0.0, %v2185
    %v2187 = vpop.f32.mrf.mxu0
    %2188 = vdwg.mxu0
    %2189 = vmatprep.subr.mxu0 0.0
    %2190 = vmatpush1.msra.mxu0 0.0
    %2191 = vmatprep.subr.mxu0 0.0
    %2192 = vmatpush1.msra.mxu0 0.0
    %2193 = vmatprep.subr.mxu0 0.0
    %2194 = vmatpush1.msra.mxu0 0.0
    %2195 = vmatprep.subr.mxu0 0.0
    %2196 = vmatpush1.msra.mxu0 0.0
    %2197 = vmatprep.subr.mxu0 0.0
    %2198 = vmatpush1.msra.mxu0 0.0
    %2199 = vmatprep.subr.mxu0 0.0
    %2200 = vmatpush1.msra.mxu0 0.0
    %2201 = vmatprep.subr.mxu0 0.0
    %2202 = vmatpush1.msra.mxu0 0.0
    %2203 = vmatprep.subr.mxu0 0.0
    %2204 = vmatpush1.msra.mxu0 0.0
    %2205 = vmatprep.subr.mxu0 0.0
    %2206 = vmatpush1.msra.mxu0 0.0
    %2207 = vmatprep.subr.mxu0 0.0
    %2208 = vmatpush1.msra.mxu0 0.0
    %2209 = vmatprep.subr.mxu0 0.0
    %2210 = vmatpush1.msra.mxu0 0.0
    %2211 = vmatprep.subr.mxu0 0.0
    %2212 = vmatpush1.msra.mxu0 0.0
    %2213 = vmatprep.subr.mxu0 0.0
    %2214 = vmatpush1.msra.mxu0 0.0
    %2215 = vmatprep.subr.mxu0 0.0
    %v2216 = vand.u32 %v2051, 4294901760
    %v2217 = vsub.f32 %v2051, %v2216
    %v2218 = vand.u32 %v2217, 4294901760
    %v2219 = vsub.f32 %v2217, %v2218
    %v2220 = vand.u32 %v2219, 4294901760
    %2221 = vmatpush1.msra.mxu0 %v2220
    %2222 = vmatprep.subr.mxu0 0.0
    %v2223 = vand.u32 %v2050, 4294901760
    %v2224 = vsub.f32 %v2050, %v2223
    %v2225 = vand.u32 %v2224, 4294901760
    %v2226 = vsub.f32 %v2224, %v2225
    %v2227 = vand.u32 %v2226, 4294901760
    %2228 = vmatpush1.msra.mxu0 %v2227
    %2229 = vmatprep.subr.mxu0 0.0
    %v2230 = vand.u32 %v2049, 4294901760
    %v2231 = vsub.f32 %v2049, %v2230
    %v2232 = vand.u32 %v2231, 4294901760
    %v2233 = vsub.f32 %v2231, %v2232
    %v2234 = vand.u32 %v2233, 4294901760
    %2235 = vmatpush1.msra.mxu0 %v2234
    %2236 = vmatprep.subr.mxu0 0.0
    %2237 = vmatpush2.msra.mxu0 0.0
    %2238 = vmatprep.subr.mxu0 0.0
    %2239 = vmatpush2.msra.mxu0 0.0
    %2240 = vmatprep.subr.mxu0 0.0
    %2241 = vmatpush2.msra.mxu0 0.0
    %2242 = vmatprep.subr.mxu0 0.0
    %2243 = vmatpush2.msra.mxu0 0.0
    %2244 = vmatprep.subr.mxu0 0.0
    %2245 = vmatpush2.msra.mxu0 0.0
    %2246 = vmatprep.subr.mxu0 0.0
    %2247 = vmatpush2.msra.mxu0 0.0
    %2248 = vmatprep.subr.mxu0 0.0
    %2249 = vmatpush2.msra.mxu0 0.0
    %2250 = vmatprep.subr.mxu0 0.0
    %2251 = vmatpush2.msra.mxu0 0.0
    %2252 = vmatprep.subr.mxu0 0.0
    %2253 = vmatpush2.msra.mxu0 0.0
    %2254 = vmatprep.subr.mxu0 0.0
    %2255 = vmatpush2.msra.mxu0 0.0
    %2256 = vmatprep.subr.mxu0 0.0
    %2257 = vmatpush2.msra.mxu0 0.0
    %2258 = vmatprep.subr.mxu0 0.0
    %2259 = vmatpush2.msra.mxu0 0.0
    %2260 = vmatprep.subr.mxu0 0.0
    %2261 = vmatpush2.msra.mxu0 0.0
    %2262 = vmatprep.subr.mxu0 0.0
    %2263 = vmatpush2.msra.mxu0 0.0
    %2264 = vmatprep.subr.mxu0 0.0
    %2265 = vmatpush2.msra.mxu0 0.0
    %2266 = vmatprep.subr.mxu0 0.0
    %2267 = vmatpush2.msra.mxu0 0.0
    %2268 = vmatprep.mubr.f32.mxu0 0.0
    %v2269 = vand.u32 %v2096, 4294901760
    %2270 = vmatmul.mubr.f32.gmra.mxu0 %v2269
    %v2271 = vpop.f32.mrf.mxu0
    %v2272 = vadd.f32 %v2176, %v2271
    %v2273 = vpop.f32.mrf.mxu0
    %2274 = vmatprep.mubr.f32.mxu0 0.0
    %v2275 = vand.u32 %v2099, 4294901760
    %2276 = vmatmul.mubr.f32.gmra.mxu0 %v2275
    %v2277 = vpop.f32.mrf.mxu0
    %v2278 = vadd.f32 %v2186, %v2277
    %v2279 = vpop.f32.mrf.mxu0
    %2280 = vdwg.mxu0
    %2281 = vmatprep.subr.mxu0 0.0
    %2282 = vmatpush1.msra.mxu0 0.0
    %2283 = vmatprep.subr.mxu0 0.0
    %2284 = vmatpush1.msra.mxu0 0.0
    %2285 = vmatprep.subr.mxu0 0.0
    %2286 = vmatpush1.msra.mxu0 0.0
    %2287 = vmatprep.subr.mxu0 0.0
    %2288 = vmatpush1.msra.mxu0 0.0
    %2289 = vmatprep.subr.mxu0 0.0
    %2290 = vmatpush1.msra.mxu0 0.0
    %2291 = vmatprep.subr.mxu0 0.0
    %2292 = vmatpush1.msra.mxu0 0.0
    %2293 = vmatprep.subr.mxu0 0.0
    %2294 = vmatpush1.msra.mxu0 0.0
    %2295 = vmatprep.subr.mxu0 0.0
    %2296 = vmatpush1.msra.mxu0 0.0
    %2297 = vmatprep.subr.mxu0 0.0
    %2298 = vmatpush1.msra.mxu0 0.0
    %2299 = vmatprep.subr.mxu0 0.0
    %2300 = vmatpush1.msra.mxu0 0.0
    %2301 = vmatprep.subr.mxu0 0.0
    %2302 = vmatpush1.msra.mxu0 0.0
    %2303 = vmatprep.subr.mxu0 0.0
    %2304 = vmatpush1.msra.mxu0 0.0
    %2305 = vmatprep.subr.mxu0 0.0
    %2306 = vmatpush1.msra.mxu0 0.0
    %2307 = vmatprep.subr.mxu0 0.0
    %v2308 = vand.u32 %v2051, 4294901760
    %v2309 = vsub.f32 %v2051, %v2308
    %2310 = vmatpush1.msra.mxu0 %v2309
    %2311 = vmatprep.subr.mxu0 0.0
    %v2312 = vand.u32 %v2050, 4294901760
    %v2313 = vsub.f32 %v2050, %v2312
    %2314 = vmatpush1.msra.mxu0 %v2313
    %2315 = vmatprep.subr.mxu0 0.0
    %v2316 = vand.u32 %v2049, 4294901760
    %v2317 = vsub.f32 %v2049, %v2316
    %2318 = vmatpush1.msra.mxu0 %v2317
    %2319 = vmatprep.subr.mxu0 0.0
    %2320 = vmatpush2.msra.mxu0 0.0
    %2321 = vmatprep.subr.mxu0 0.0
    %2322 = vmatpush2.msra.mxu0 0.0
    %2323 = vmatprep.subr.mxu0 0.0
    %2324 = vmatpush2.msra.mxu0 0.0
    %2325 = vmatprep.subr.mxu0 0.0
    %2326 = vmatpush2.msra.mxu0 0.0
    %2327 = vmatprep.subr.mxu0 0.0
    %2328 = vmatpush2.msra.mxu0 0.0
    %2329 = vmatprep.subr.mxu0 0.0
    %2330 = vmatpush2.msra.mxu0 0.0
    %2331 = vmatprep.subr.mxu0 0.0
    %2332 = vmatpush2.msra.mxu0 0.0
    %2333 = vmatprep.subr.mxu0 0.0
    %2334 = vmatpush2.msra.mxu0 0.0
    %2335 = vmatprep.subr.mxu0 0.0
    %2336 = vmatpush2.msra.mxu0 0.0
    %2337 = vmatprep.subr.mxu0 0.0
    %2338 = vmatpush2.msra.mxu0 0.0
    %2339 = vmatprep.subr.mxu0 0.0
    %2340 = vmatpush2.msra.mxu0 0.0
    %2341 = vmatprep.subr.mxu0 0.0
    %2342 = vmatpush2.msra.mxu0 0.0
    %2343 = vmatprep.subr.mxu0 0.0
    %2344 = vmatpush2.msra.mxu0 0.0
    %2345 = vmatprep.subr.mxu0 0.0
    %2346 = vmatpush2.msra.mxu0 0.0
    %2347 = vmatprep.subr.mxu0 0.0
    %2348 = vmatpush2.msra.mxu0 0.0
    %2349 = vmatprep.subr.mxu0 0.0
    %2350 = vmatpush2.msra.mxu0 0.0
    %2351 = vmatprep.mubr.f32.mxu0 0.0
    %v2352 = vand.u32 %v2096, 4294901760
    %v2353 = vsub.f32 %v2096, %v2352
    %2354 = vmatmul.mubr.f32.gmra.mxu0 %v2353
    %v2355 = vpop.f32.mrf.mxu0
    %v2356 = vadd.f32 %v2272, %v2355
    %v2357 = vpop.f32.mrf.mxu0
    %2358 = vmatprep.mubr.f32.mxu0 0.0
    %v2359 = vand.u32 %v2099, 4294901760
    %v2360 = vsub.f32 %v2099, %v2359
    %2361 = vmatmul.mubr.f32.gmra.mxu0 %v2360
    %v2362 = vpop.f32.mrf.mxu0
    %v2363 = vadd.f32 %v2278, %v2362
    %v2364 = vpop.f32.mrf.mxu0
    %2365 = vdwg.mxu0
    %2366 = vmatprep.subr.mxu0 0.0
    %2367 = vmatpush1.msra.mxu0 0.0
    %2368 = vmatprep.subr.mxu0 0.0
    %2369 = vmatpush1.msra.mxu0 0.0
    %2370 = vmatprep.subr.mxu0 0.0
    %2371 = vmatpush1.msra.mxu0 0.0
    %2372 = vmatprep.subr.mxu0 0.0
    %2373 = vmatpush1.msra.mxu0 0.0
    %2374 = vmatprep.subr.mxu0 0.0
    %2375 = vmatpush1.msra.mxu0 0.0
    %2376 = vmatprep.subr.mxu0 0.0
    %2377 = vmatpush1.msra.mxu0 0.0
    %2378 = vmatprep.subr.mxu0 0.0
    %2379 = vmatpush1.msra.mxu0 0.0
    %2380 = vmatprep.subr.mxu0 0.0
    %2381 = vmatpush1.msra.mxu0 0.0
    %2382 = vmatprep.subr.mxu0 0.0
    %2383 = vmatpush1.msra.mxu0 0.0
    %2384 = vmatprep.subr.mxu0 0.0
    %2385 = vmatpush1.msra.mxu0 0.0
    %2386 = vmatprep.subr.mxu0 0.0
    %2387 = vmatpush1.msra.mxu0 0.0
    %2388 = vmatprep.subr.mxu0 0.0
    %2389 = vmatpush1.msra.mxu0 0.0
    %2390 = vmatprep.subr.mxu0 0.0
    %2391 = vmatpush1.msra.mxu0 0.0
    %2392 = vmatprep.subr.mxu0 0.0
    %v2393 = vand.u32 %v2051, 4294901760
    %2394 = vmatpush1.msra.mxu0 %v2393
    %2395 = vmatprep.subr.mxu0 0.0
    %v2396 = vand.u32 %v2050, 4294901760
    %2397 = vmatpush1.msra.mxu0 %v2396
    %2398 = vmatprep.subr.mxu0 0.0
    %v2399 = vand.u32 %v2049, 4294901760
    %2400 = vmatpush1.msra.mxu0 %v2399
    %2401 = vmatprep.subr.mxu0 0.0
    %2402 = vmatpush2.msra.mxu0 0.0
    %2403 = vmatprep.subr.mxu0 0.0
    %2404 = vmatpush2.msra.mxu0 0.0
    %2405 = vmatprep.subr.mxu0 0.0
    %2406 = vmatpush2.msra.mxu0 0.0
    %2407 = vmatprep.subr.mxu0 0.0
    %2408 = vmatpush2.msra.mxu0 0.0
    %2409 = vmatprep.subr.mxu0 0.0
    %2410 = vmatpush2.msra.mxu0 0.0
    %2411 = vmatprep.subr.mxu0 0.0
    %2412 = vmatpush2.msra.mxu0 0.0
    %2413 = vmatprep.subr.mxu0 0.0
    %2414 = vmatpush2.msra.mxu0 0.0
    %2415 = vmatprep.subr.mxu0 0.0
    %2416 = vmatpush2.msra.mxu0 0.0
    %2417 = vmatprep.subr.mxu0 0.0
    %2418 = vmatpush2.msra.mxu0 0.0
    %2419 = vmatprep.subr.mxu0 0.0
    %2420 = vmatpush2.msra.mxu0 0.0
    %2421 = vmatprep.subr.mxu0 0.0
    %2422 = vmatpush2.msra.mxu0 0.0
    %2423 = vmatprep.subr.mxu0 0.0
    %2424 = vmatpush2.msra.mxu0 0.0
    %2425 = vmatprep.subr.mxu0 0.0
    %2426 = vmatpush2.msra.mxu0 0.0
    %2427 = vmatprep.subr.mxu0 0.0
    %2428 = vmatpush2.msra.mxu0 0.0
    %2429 = vmatprep.subr.mxu0 0.0
    %2430 = vmatpush2.msra.mxu0 0.0
    %2431 = vmatprep.subr.mxu0 0.0
    %2432 = vmatpush2.msra.mxu0 0.0
    %2433 = vmatprep.mubr.f32.mxu0 0.0
    %v2434 = vand.u32 %v2096, 4294901760
    %v2435 = vsub.f32 %v2096, %v2434
    %v2436 = vand.u32 %v2435, 4294901760
    %2437 = vmatmul.mubr.f32.gmra.mxu0 %v2436
    %v2438 = vpop.f32.mrf.mxu0
    %v2439 = vadd.f32 %v2356, %v2438
    %v2440 = vpop.f32.mrf.mxu0
    %2441 = vmatprep.mubr.f32.mxu0 0.0
    %v2442 = vand.u32 %v2099, 4294901760
    %v2443 = vsub.f32 %v2099, %v2442
    %v2444 = vand.u32 %v2443, 4294901760
    %2445 = vmatmul.mubr.f32.gmra.mxu0 %v2444
    %v2446 = vpop.f32.mrf.mxu0
    %v2447 = vadd.f32 %v2363, %v2446
    %v2448 = vpop.f32.mrf.mxu0
    %2449 = vdwg.mxu0
    %2450 = vmatprep.subr.mxu0 0.0
    %2451 = vmatpush1.msra.mxu0 0.0
    %2452 = vmatprep.subr.mxu0 0.0
    %2453 = vmatpush1.msra.mxu0 0.0
    %2454 = vmatprep.subr.mxu0 0.0
    %2455 = vmatpush1.msra.mxu0 0.0
    %2456 = vmatprep.subr.mxu0 0.0
    %2457 = vmatpush1.msra.mxu0 0.0
    %2458 = vmatprep.subr.mxu0 0.0
    %2459 = vmatpush1.msra.mxu0 0.0
    %2460 = vmatprep.subr.mxu0 0.0
    %2461 = vmatpush1.msra.mxu0 0.0
    %2462 = vmatprep.subr.mxu0 0.0
    %2463 = vmatpush1.msra.mxu0 0.0
    %2464 = vmatprep.subr.mxu0 0.0
    %2465 = vmatpush1.msra.mxu0 0.0
    %2466 = vmatprep.subr.mxu0 0.0
    %2467 = vmatpush1.msra.mxu0 0.0
    %2468 = vmatprep.subr.mxu0 0.0
    %2469 = vmatpush1.msra.mxu0 0.0
    %2470 = vmatprep.subr.mxu0 0.0
    %2471 = vmatpush1.msra.mxu0 0.0
    %2472 = vmatprep.subr.mxu0 0.0
    %2473 = vmatpush1.msra.mxu0 0.0
    %2474 = vmatprep.subr.mxu0 0.0
    %2475 = vmatpush1.msra.mxu0 0.0
    %2476 = vmatprep.subr.mxu0 0.0
    %v2477 = vand.u32 %v2051, 4294901760
    %v2478 = vsub.f32 %v2051, %v2477
    %v2479 = vand.u32 %v2478, 4294901760
    %2480 = vmatpush1.msra.mxu0 %v2479
    %2481 = vmatprep.subr.mxu0 0.0
    %v2482 = vand.u32 %v2050, 4294901760
    %v2483 = vsub.f32 %v2050, %v2482
    %v2484 = vand.u32 %v2483, 4294901760
    %2485 = vmatpush1.msra.mxu0 %v2484
    %2486 = vmatprep.subr.mxu0 0.0
    %v2487 = vand.u32 %v2049, 4294901760
    %v2488 = vsub.f32 %v2049, %v2487
    %v2489 = vand.u32 %v2488, 4294901760
    %2490 = vmatpush1.msra.mxu0 %v2489
    %2491 = vmatprep.subr.mxu0 0.0
    %2492 = vmatpush2.msra.mxu0 0.0
    %2493 = vmatprep.subr.mxu0 0.0
    %2494 = vmatpush2.msra.mxu0 0.0
    %2495 = vmatprep.subr.mxu0 0.0
    %2496 = vmatpush2.msra.mxu0 0.0
    %2497 = vmatprep.subr.mxu0 0.0
    %2498 = vmatpush2.msra.mxu0 0.0
    %2499 = vmatprep.subr.mxu0 0.0
    %2500 = vmatpush2.msra.mxu0 0.0
    %2501 = vmatprep.subr.mxu0 0.0
    %2502 = vmatpush2.msra.mxu0 0.0
    %2503 = vmatprep.subr.mxu0 0.0
    %2504 = vmatpush2.msra.mxu0 0.0
    %2505 = vmatprep.subr.mxu0 0.0
    %2506 = vmatpush2.msra.mxu0 0.0
    %2507 = vmatprep.subr.mxu0 0.0
    %2508 = vmatpush2.msra.mxu0 0.0
    %2509 = vmatprep.subr.mxu0 0.0
    %2510 = vmatpush2.msra.mxu0 0.0
    %2511 = vmatprep.subr.mxu0 0.0
    %2512 = vmatpush2.msra.mxu0 0.0
    %2513 = vmatprep.subr.mxu0 0.0
    %2514 = vmatpush2.msra.mxu0 0.0
    %2515 = vmatprep.subr.mxu0 0.0
    %2516 = vmatpush2.msra.mxu0 0.0
    %2517 = vmatprep.subr.mxu0 0.0
    %2518 = vmatpush2.msra.mxu0 0.0
    %2519 = vmatprep.subr.mxu0 0.0
    %2520 = vmatpush2.msra.mxu0 0.0
    %2521 = vmatprep.subr.mxu0 0.0
    %2522 = vmatpush2.msra.mxu0 0.0
    %2523 = vmatprep.mubr.f32.mxu0 0.0
    %v2524 = vand.u32 %v2096, 4294901760
    %2525 = vmatmul.mubr.f32.gmra.mxu0 %v2524
    %v2526 = vpop.f32.mrf.mxu0
    %v2527 = vadd.f32 %v2439, %v2526
    %v2528 = vpop.f32.mrf.mxu0
    %2529 = vmatprep.mubr.f32.mxu0 0.0
    %v2530 = vand.u32 %v2099, 4294901760
    %2531 = vmatmul.mubr.f32.gmra.mxu0 %v2530
    %v2532 = vpop.f32.mrf.mxu0
    %v2533 = vadd.f32 %v2447, %v2532
    %v2534 = vpop.f32.mrf.mxu0
    %2535 = vdwg.mxu0
    %2536 = vmatprep.subr.mxu0 0.0
    %2537 = vmatpush1.msra.mxu0 0.0
    %2538 = vmatprep.subr.mxu0 0.0
    %2539 = vmatpush1.msra.mxu0 0.0
    %2540 = vmatprep.subr.mxu0 0.0
    %2541 = vmatpush1.msra.mxu0 0.0
    %2542 = vmatprep.subr.mxu0 0.0
    %2543 = vmatpush1.msra.mxu0 0.0
    %2544 = vmatprep.subr.mxu0 0.0
    %2545 = vmatpush1.msra.mxu0 0.0
    %2546 = vmatprep.subr.mxu0 0.0
    %2547 = vmatpush1.msra.mxu0 0.0
    %2548 = vmatprep.subr.mxu0 0.0
    %2549 = vmatpush1.msra.mxu0 0.0
    %2550 = vmatprep.subr.mxu0 0.0
    %2551 = vmatpush1.msra.mxu0 0.0
    %2552 = vmatprep.subr.mxu0 0.0
    %2553 = vmatpush1.msra.mxu0 0.0
    %2554 = vmatprep.subr.mxu0 0.0
    %2555 = vmatpush1.msra.mxu0 0.0
    %2556 = vmatprep.subr.mxu0 0.0
    %2557 = vmatpush1.msra.mxu0 0.0
    %2558 = vmatprep.subr.mxu0 0.0
    %2559 = vmatpush1.msra.mxu0 0.0
    %2560 = vmatprep.subr.mxu0 0.0
    %2561 = vmatpush1.msra.mxu0 0.0
    %2562 = vmatprep.subr.mxu0 0.0
    %v2563 = vand.u32 %v2051, 4294901760
    %2564 = vmatpush1.msra.mxu0 %v2563
    %2565 = vmatprep.subr.mxu0 0.0
    %v2566 = vand.u32 %v2050, 4294901760
    %2567 = vmatpush1.msra.mxu0 %v2566
    %2568 = vmatprep.subr.mxu0 0.0
    %v2569 = vand.u32 %v2049, 4294901760
    %2570 = vmatpush1.msra.mxu0 %v2569
    %2571 = vmatprep.subr.mxu0 0.0
    %2572 = vmatpush2.msra.mxu0 0.0
    %2573 = vmatprep.subr.mxu0 0.0
    %2574 = vmatpush2.msra.mxu0 0.0
    %2575 = vmatprep.subr.mxu0 0.0
    %2576 = vmatpush2.msra.mxu0 0.0
    %2577 = vmatprep.subr.mxu0 0.0
    %2578 = vmatpush2.msra.mxu0 0.0
    %2579 = vmatprep.subr.mxu0 0.0
    %2580 = vmatpush2.msra.mxu0 0.0
    %2581 = vmatprep.subr.mxu0 0.0
    %2582 = vmatpush2.msra.mxu0 0.0
    %2583 = vmatprep.subr.mxu0 0.0
    %2584 = vmatpush2.msra.mxu0 0.0
    %2585 = vmatprep.subr.mxu0 0.0
    %2586 = vmatpush2.msra.mxu0 0.0
    %2587 = vmatprep.subr.mxu0 0.0
    %2588 = vmatpush2.msra.mxu0 0.0
    %2589 = vmatprep.subr.mxu0 0.0
    %2590 = vmatpush2.msra.mxu0 0.0
    %2591 = vmatprep.subr.mxu0 0.0
    %2592 = vmatpush2.msra.mxu0 0.0
    %2593 = vmatprep.subr.mxu0 0.0
    %2594 = vmatpush2.msra.mxu0 0.0
    %2595 = vmatprep.subr.mxu0 0.0
    %2596 = vmatpush2.msra.mxu0 0.0
    %2597 = vmatprep.subr.mxu0 0.0
    %2598 = vmatpush2.msra.mxu0 0.0
    %2599 = vmatprep.subr.mxu0 0.0
    %2600 = vmatpush2.msra.mxu0 0.0
    %2601 = vmatprep.subr.mxu0 0.0
    %2602 = vmatpush2.msra.mxu0 0.0
    %2603 = vmatprep.mubr.f32.mxu0 0.0
    %v2604 = vand.u32 %v2096, 4294901760
    %2605 = vmatmul.mubr.f32.gmra.mxu0 %v2604
    %v2606 = vpop.f32.mrf.mxu0
    %v2607 = vadd.f32 %v2527, %v2606
    %v2608 = vpop.f32.mrf.mxu0
    %2609 = vmatprep.mubr.f32.mxu0 0.0
    %v2610 = vand.u32 %v2099, 4294901760
    %2611 = vmatmul.mubr.f32.gmra.mxu0 %v2610
    %v2612 = vpop.f32.mrf.mxu0
    %v2613 = vadd.f32 %v2533, %v2612
    %v2614 = vpop.f32.mrf.mxu0
    %2615 = vdwg.mxu0
    %v2616 = vrcp.pop %v2607
    %v2617 = vmul.f32 %v2092, %v2616
    %v2618 = vrcp.pop %v2613
    %v2619 = vmul.f32 %v2094, %v2618
    %v2620 = vmul.f32 %v2617, 0.992
    %v2621 = vmul.f32 %v2619, 0.992
    %v2622 = vadd.f32 %v2620, 0.001
    %v2623 = vadd.f32 %v2621, 0.001
    %v2624 = vmul.f32 %v2622, 6.0
    %v2625 = vmul.f32 %v2623, 6.0
    %v2627 = vsel %vm2082, %v2624, 0
    %v2630 = vsel %vm2082, %v2625, 0
    %2632 = vmatprep.subr.mxu0 0.0
    %2633 = vmatpush1.msra.mxu0 0.0
    %2634 = vmatprep.subr.mxu0 0.0
    %2635 = vmatpush1.msra.mxu0 0.0
    %2636 = vmatprep.subr.mxu0 0.0
    %2637 = vmatpush1.msra.mxu0 0.0
    %2638 = vmatprep.subr.mxu0 0.0
    %2639 = vmatpush1.msra.mxu0 0.0
    %2640 = vmatprep.subr.mxu0 0.0
    %2641 = vmatpush1.msra.mxu0 0.0
    %2642 = vmatprep.subr.mxu0 0.0
    %2643 = vmatpush1.msra.mxu0 0.0
    %2644 = vmatprep.subr.mxu0 0.0
    %2645 = vmatpush1.msra.mxu0 0.0
    %2646 = vmatprep.subr.mxu0 0.0
    %2647 = vmatpush1.msra.mxu0 0.0
    %2648 = vmatprep.subr.mxu0 0.0
    %2649 = vmatpush1.msra.mxu0 0.0
    %2650 = vmatprep.subr.mxu0 0.0
    %2651 = vmatpush1.msra.mxu0 0.0
    %2652 = vmatprep.subr.mxu0 0.0
    %2653 = vmatpush1.msra.mxu0 0.0
    %2654 = vmatprep.subr.mxu0 0.0
    %2655 = vmatpush1.msra.mxu0 0.0
    %2656 = vmatprep.subr.mxu0 0.0
    %2657 = vmatpush1.msra.mxu0 0.0
    %2658 = vmatprep.subr.mxu0 0.0
    %v2659 = vand.u32 %v2063, 4294901760
    %2660 = vmatpush1.msra.mxu0 %v2659
    %2661 = vmatprep.subr.mxu0 0.0
    %v2662 = vand.u32 %v2062, 4294901760
    %2663 = vmatpush1.msra.mxu0 %v2662
    %2664 = vmatprep.subr.mxu0 0.0
    %v2665 = vand.u32 %v2061, 4294901760
    %2666 = vmatpush1.msra.mxu0 %v2665
    %2667 = vmatprep.subr.mxu0 0.0
    %2668 = vmatpush2.msra.mxu0 0.0
    %2669 = vmatprep.subr.mxu0 0.0
    %2670 = vmatpush2.msra.mxu0 0.0
    %2671 = vmatprep.subr.mxu0 0.0
    %2672 = vmatpush2.msra.mxu0 0.0
    %2673 = vmatprep.subr.mxu0 0.0
    %2674 = vmatpush2.msra.mxu0 0.0
    %2675 = vmatprep.subr.mxu0 0.0
    %2676 = vmatpush2.msra.mxu0 0.0
    %2677 = vmatprep.subr.mxu0 0.0
    %2678 = vmatpush2.msra.mxu0 0.0
    %2679 = vmatprep.subr.mxu0 0.0
    %2680 = vmatpush2.msra.mxu0 0.0
    %2681 = vmatprep.subr.mxu0 0.0
    %2682 = vmatpush2.msra.mxu0 0.0
    %2683 = vmatprep.subr.mxu0 0.0
    %2684 = vmatpush2.msra.mxu0 0.0
    %2685 = vmatprep.subr.mxu0 0.0
    %2686 = vmatpush2.msra.mxu0 0.0
    %2687 = vmatprep.subr.mxu0 0.0
    %2688 = vmatpush2.msra.mxu0 0.0
    %2689 = vmatprep.subr.mxu0 0.0
    %2690 = vmatpush2.msra.mxu0 0.0
    %2691 = vmatprep.subr.mxu0 0.0
    %2692 = vmatpush2.msra.mxu0 0.0
    %2693 = vmatprep.subr.mxu0 0.0
    %2694 = vmatpush2.msra.mxu0 0.0
    %2695 = vmatprep.subr.mxu0 0.0
    %2696 = vmatpush2.msra.mxu0 0.0
    %2697 = vmatprep.subr.mxu0 0.0
    %2698 = vmatpush2.msra.mxu0 0.0
    %2699 = vmatprep.mubr.f32.mxu0 0.0
    %v2700 = vand.u32 %v2627, 4294901760
    %v2701 = vsub.f32 %v2627, %v2700
    %v2702 = vand.u32 %v2701, 4294901760
    %v2703 = vsub.f32 %v2701, %v2702
    %v2704 = vand.u32 %v2703, 4294901760
    %2705 = vmatmul.mubr.f32.gmra.mxu0 %v2704
    %v2706 = vpop.f32.mrf.mxu0
    %v2707 = vadd.f32 0.0, %v2706
    %v2708 = vpop.f32.mrf.mxu0
    %2709 = vmatprep.mubr.f32.mxu0 0.0
    %v2710 = vand.u32 %v2630, 4294901760
    %v2711 = vsub.f32 %v2630, %v2710
    %v2712 = vand.u32 %v2711, 4294901760
    %v2713 = vsub.f32 %v2711, %v2712
    %v2714 = vand.u32 %v2713, 4294901760
    %2715 = vmatmul.mubr.f32.gmra.mxu0 %v2714
    %v2716 = vpop.f32.mrf.mxu0
    %v2717 = vadd.f32 0.0, %v2716
    %v2718 = vpop.f32.mrf.mxu0
    %2719 = vdwg.mxu0
    %2720 = vmatprep.subr.mxu0 0.0
    %2721 = vmatpush1.msra.mxu0 0.0
    %2722 = vmatprep.subr.mxu0 0.0
    %2723 = vmatpush1.msra.mxu0 0.0
    %2724 = vmatprep.subr.mxu0 0.0
    %2725 = vmatpush1.msra.mxu0 0.0
    %2726 = vmatprep.subr.mxu0 0.0
    %2727 = vmatpush1.msra.mxu0 0.0
    %2728 = vmatprep.subr.mxu0 0.0
    %2729 = vmatpush1.msra.mxu0 0.0
    %2730 = vmatprep.subr.mxu0 0.0
    %2731 = vmatpush1.msra.mxu0 0.0
    %2732 = vmatprep.subr.mxu0 0.0
    %2733 = vmatpush1.msra.mxu0 0.0
    %2734 = vmatprep.subr.mxu0 0.0
    %2735 = vmatpush1.msra.mxu0 0.0
    %2736 = vmatprep.subr.mxu0 0.0
    %2737 = vmatpush1.msra.mxu0 0.0
    %2738 = vmatprep.subr.mxu0 0.0
    %2739 = vmatpush1.msra.mxu0 0.0
    %2740 = vmatprep.subr.mxu0 0.0
    %2741 = vmatpush1.msra.mxu0 0.0
    %2742 = vmatprep.subr.mxu0 0.0
    %2743 = vmatpush1.msra.mxu0 0.0
    %2744 = vmatprep.subr.mxu0 0.0
    %2745 = vmatpush1.msra.mxu0 0.0
    %2746 = vmatprep.subr.mxu0 0.0
    %v2747 = vand.u32 %v2063, 4294901760
    %v2748 = vsub.f32 %v2063, %v2747
    %v2749 = vand.u32 %v2748, 4294901760
    %v2750 = vsub.f32 %v2748, %v2749
    %v2751 = vand.u32 %v2750, 4294901760
    %2752 = vmatpush1.msra.mxu0 %v2751
    %2753 = vmatprep.subr.mxu0 0.0
    %v2754 = vand.u32 %v2062, 4294901760
    %v2755 = vsub.f32 %v2062, %v2754
    %v2756 = vand.u32 %v2755, 4294901760
    %v2757 = vsub.f32 %v2755, %v2756
    %v2758 = vand.u32 %v2757, 4294901760
    %2759 = vmatpush1.msra.mxu0 %v2758
    %2760 = vmatprep.subr.mxu0 0.0
    %v2761 = vand.u32 %v2061, 4294901760
    %v2762 = vsub.f32 %v2061, %v2761
    %v2763 = vand.u32 %v2762, 4294901760
    %v2764 = vsub.f32 %v2762, %v2763
    %v2765 = vand.u32 %v2764, 4294901760
    %2766 = vmatpush1.msra.mxu0 %v2765
    %2767 = vmatprep.subr.mxu0 0.0
    %2768 = vmatpush2.msra.mxu0 0.0
    %2769 = vmatprep.subr.mxu0 0.0
    %2770 = vmatpush2.msra.mxu0 0.0
    %2771 = vmatprep.subr.mxu0 0.0
    %2772 = vmatpush2.msra.mxu0 0.0
    %2773 = vmatprep.subr.mxu0 0.0
    %2774 = vmatpush2.msra.mxu0 0.0
    %2775 = vmatprep.subr.mxu0 0.0
    %2776 = vmatpush2.msra.mxu0 0.0
    %2777 = vmatprep.subr.mxu0 0.0
    %2778 = vmatpush2.msra.mxu0 0.0
    %2779 = vmatprep.subr.mxu0 0.0
    %2780 = vmatpush2.msra.mxu0 0.0
    %2781 = vmatprep.subr.mxu0 0.0
    %2782 = vmatpush2.msra.mxu0 0.0
    %2783 = vmatprep.subr.mxu0 0.0
    %2784 = vmatpush2.msra.mxu0 0.0
    %2785 = vmatprep.subr.mxu0 0.0
    %2786 = vmatpush2.msra.mxu0 0.0
    %2787 = vmatprep.subr.mxu0 0.0
    %2788 = vmatpush2.msra.mxu0 0.0
    %2789 = vmatprep.subr.mxu0 0.0
    %2790 = vmatpush2.msra.mxu0 0.0
    %2791 = vmatprep.subr.mxu0 0.0
    %2792 = vmatpush2.msra.mxu0 0.0
    %2793 = vmatprep.subr.mxu0 0.0
    %2794 = vmatpush2.msra.mxu0 0.0
    %2795 = vmatprep.subr.mxu0 0.0
    %2796 = vmatpush2.msra.mxu0 0.0
    %2797 = vmatprep.subr.mxu0 0.0
    %2798 = vmatpush2.msra.mxu0 0.0
    %2799 = vmatprep.mubr.f32.mxu0 0.0
    %v2800 = vand.u32 %v2627, 4294901760
    %2801 = vmatmul.mubr.f32.gmra.mxu0 %v2800
    %v2802 = vpop.f32.mrf.mxu0
    %v2803 = vadd.f32 %v2707, %v2802
    %v2804 = vpop.f32.mrf.mxu0
    %2805 = vmatprep.mubr.f32.mxu0 0.0
    %v2806 = vand.u32 %v2630, 4294901760
    %2807 = vmatmul.mubr.f32.gmra.mxu0 %v2806
    %v2808 = vpop.f32.mrf.mxu0
    %v2809 = vadd.f32 %v2717, %v2808
    %v2810 = vpop.f32.mrf.mxu0
    %2811 = vdwg.mxu0
    %2812 = vmatprep.subr.mxu0 0.0
    %2813 = vmatpush1.msra.mxu0 0.0
    %2814 = vmatprep.subr.mxu0 0.0
    %2815 = vmatpush1.msra.mxu0 0.0
    %2816 = vmatprep.subr.mxu0 0.0
    %2817 = vmatpush1.msra.mxu0 0.0
    %2818 = vmatprep.subr.mxu0 0.0
    %2819 = vmatpush1.msra.mxu0 0.0
    %2820 = vmatprep.subr.mxu0 0.0
    %2821 = vmatpush1.msra.mxu0 0.0
    %2822 = vmatprep.subr.mxu0 0.0
    %2823 = vmatpush1.msra.mxu0 0.0
    %2824 = vmatprep.subr.mxu0 0.0
    %2825 = vmatpush1.msra.mxu0 0.0
    %2826 = vmatprep.subr.mxu0 0.0
    %2827 = vmatpush1.msra.mxu0 0.0
    %2828 = vmatprep.subr.mxu0 0.0
    %2829 = vmatpush1.msra.mxu0 0.0
    %2830 = vmatprep.subr.mxu0 0.0
    %2831 = vmatpush1.msra.mxu0 0.0
    %2832 = vmatprep.subr.mxu0 0.0
    %2833 = vmatpush1.msra.mxu0 0.0
    %2834 = vmatprep.subr.mxu0 0.0
    %2835 = vmatpush1.msra.mxu0 0.0
    %2836 = vmatprep.subr.mxu0 0.0
    %2837 = vmatpush1.msra.mxu0 0.0
    %2838 = vmatprep.subr.mxu0 0.0
    %v2839 = vand.u32 %v2063, 4294901760
    %v2840 = vsub.f32 %v2063, %v2839
    %2841 = vmatpush1.msra.mxu0 %v2840
    %2842 = vmatprep.subr.mxu0 0.0
    %v2843 = vand.u32 %v2062, 4294901760
    %v2844 = vsub.f32 %v2062, %v2843
    %2845 = vmatpush1.msra.mxu0 %v2844
    %2846 = vmatprep.subr.mxu0 0.0
    %v2847 = vand.u32 %v2061, 4294901760
    %v2848 = vsub.f32 %v2061, %v2847
    %2849 = vmatpush1.msra.mxu0 %v2848
    %2850 = vmatprep.subr.mxu0 0.0
    %2851 = vmatpush2.msra.mxu0 0.0
    %2852 = vmatprep.subr.mxu0 0.0
    %2853 = vmatpush2.msra.mxu0 0.0
    %2854 = vmatprep.subr.mxu0 0.0
    %2855 = vmatpush2.msra.mxu0 0.0
    %2856 = vmatprep.subr.mxu0 0.0
    %2857 = vmatpush2.msra.mxu0 0.0
    %2858 = vmatprep.subr.mxu0 0.0
    %2859 = vmatpush2.msra.mxu0 0.0
    %2860 = vmatprep.subr.mxu0 0.0
    %2861 = vmatpush2.msra.mxu0 0.0
    %2862 = vmatprep.subr.mxu0 0.0
    %2863 = vmatpush2.msra.mxu0 0.0
    %2864 = vmatprep.subr.mxu0 0.0
    %2865 = vmatpush2.msra.mxu0 0.0
    %2866 = vmatprep.subr.mxu0 0.0
    %2867 = vmatpush2.msra.mxu0 0.0
    %2868 = vmatprep.subr.mxu0 0.0
    %2869 = vmatpush2.msra.mxu0 0.0
    %2870 = vmatprep.subr.mxu0 0.0
    %2871 = vmatpush2.msra.mxu0 0.0
    %2872 = vmatprep.subr.mxu0 0.0
    %2873 = vmatpush2.msra.mxu0 0.0
    %2874 = vmatprep.subr.mxu0 0.0
    %2875 = vmatpush2.msra.mxu0 0.0
    %2876 = vmatprep.subr.mxu0 0.0
    %2877 = vmatpush2.msra.mxu0 0.0
    %2878 = vmatprep.subr.mxu0 0.0
    %2879 = vmatpush2.msra.mxu0 0.0
    %2880 = vmatprep.subr.mxu0 0.0
    %2881 = vmatpush2.msra.mxu0 0.0
    %2882 = vmatprep.mubr.f32.mxu0 0.0
    %v2883 = vand.u32 %v2627, 4294901760
    %v2884 = vsub.f32 %v2627, %v2883
    %2885 = vmatmul.mubr.f32.gmra.mxu0 %v2884
    %v2886 = vpop.f32.mrf.mxu0
    %v2887 = vadd.f32 %v2803, %v2886
    %v2888 = vpop.f32.mrf.mxu0
    %2889 = vmatprep.mubr.f32.mxu0 0.0
    %v2890 = vand.u32 %v2630, 4294901760
    %v2891 = vsub.f32 %v2630, %v2890
    %2892 = vmatmul.mubr.f32.gmra.mxu0 %v2891
    %v2893 = vpop.f32.mrf.mxu0
    %v2894 = vadd.f32 %v2809, %v2893
    %v2895 = vpop.f32.mrf.mxu0
    %2896 = vdwg.mxu0
    %2897 = vmatprep.subr.mxu0 0.0
    %2898 = vmatpush1.msra.mxu0 0.0
    %2899 = vmatprep.subr.mxu0 0.0
    %2900 = vmatpush1.msra.mxu0 0.0
    %2901 = vmatprep.subr.mxu0 0.0
    %2902 = vmatpush1.msra.mxu0 0.0
    %2903 = vmatprep.subr.mxu0 0.0
    %2904 = vmatpush1.msra.mxu0 0.0
    %2905 = vmatprep.subr.mxu0 0.0
    %2906 = vmatpush1.msra.mxu0 0.0
    %2907 = vmatprep.subr.mxu0 0.0
    %2908 = vmatpush1.msra.mxu0 0.0
    %2909 = vmatprep.subr.mxu0 0.0
    %2910 = vmatpush1.msra.mxu0 0.0
    %2911 = vmatprep.subr.mxu0 0.0
    %2912 = vmatpush1.msra.mxu0 0.0
    %2913 = vmatprep.subr.mxu0 0.0
    %2914 = vmatpush1.msra.mxu0 0.0
    %2915 = vmatprep.subr.mxu0 0.0
    %2916 = vmatpush1.msra.mxu0 0.0
    %2917 = vmatprep.subr.mxu0 0.0
    %2918 = vmatpush1.msra.mxu0 0.0
    %2919 = vmatprep.subr.mxu0 0.0
    %2920 = vmatpush1.msra.mxu0 0.0
    %2921 = vmatprep.subr.mxu0 0.0
    %2922 = vmatpush1.msra.mxu0 0.0
    %2923 = vmatprep.subr.mxu0 0.0
    %v2924 = vand.u32 %v2063, 4294901760
    %2925 = vmatpush1.msra.mxu0 %v2924
    %2926 = vmatprep.subr.mxu0 0.0
    %v2927 = vand.u32 %v2062, 4294901760
    %2928 = vmatpush1.msra.mxu0 %v2927
    %2929 = vmatprep.subr.mxu0 0.0
    %v2930 = vand.u32 %v2061, 4294901760
    %2931 = vmatpush1.msra.mxu0 %v2930
    %2932 = vmatprep.subr.mxu0 0.0
    %2933 = vmatpush2.msra.mxu0 0.0
    %2934 = vmatprep.subr.mxu0 0.0
    %2935 = vmatpush2.msra.mxu0 0.0
    %2936 = vmatprep.subr.mxu0 0.0
    %2937 = vmatpush2.msra.mxu0 0.0
    %2938 = vmatprep.subr.mxu0 0.0
    %2939 = vmatpush2.msra.mxu0 0.0
    %2940 = vmatprep.subr.mxu0 0.0
    %2941 = vmatpush2.msra.mxu0 0.0
    %2942 = vmatprep.subr.mxu0 0.0
    %2943 = vmatpush2.msra.mxu0 0.0
    %2944 = vmatprep.subr.mxu0 0.0
    %2945 = vmatpush2.msra.mxu0 0.0
    %2946 = vmatprep.subr.mxu0 0.0
    %2947 = vmatpush2.msra.mxu0 0.0
    %2948 = vmatprep.subr.mxu0 0.0
    %2949 = vmatpush2.msra.mxu0 0.0
    %2950 = vmatprep.subr.mxu0 0.0
    %2951 = vmatpush2.msra.mxu0 0.0
    %2952 = vmatprep.subr.mxu0 0.0
    %2953 = vmatpush2.msra.mxu0 0.0
    %2954 = vmatprep.subr.mxu0 0.0
    %2955 = vmatpush2.msra.mxu0 0.0
    %2956 = vmatprep.subr.mxu0 0.0
    %2957 = vmatpush2.msra.mxu0 0.0
    %2958 = vmatprep.subr.mxu0 0.0
    %2959 = vmatpush2.msra.mxu0 0.0
    %2960 = vmatprep.subr.mxu0 0.0
    %2961 = vmatpush2.msra.mxu0 0.0
    %2962 = vmatprep.subr.mxu0 0.0
    %2963 = vmatpush2.msra.mxu0 0.0
    %2964 = vmatprep.mubr.f32.mxu0 0.0
    %v2965 = vand.u32 %v2627, 4294901760
    %v2966 = vsub.f32 %v2627, %v2965
    %v2967 = vand.u32 %v2966, 4294901760
    %2968 = vmatmul.mubr.f32.gmra.mxu0 %v2967
    %v2969 = vpop.f32.mrf.mxu0
    %v2970 = vadd.f32 %v2887, %v2969
    %v2971 = vpop.f32.mrf.mxu0
    %2972 = vmatprep.mubr.f32.mxu0 0.0
    %v2973 = vand.u32 %v2630, 4294901760
    %v2974 = vsub.f32 %v2630, %v2973
    %v2975 = vand.u32 %v2974, 4294901760
    %2976 = vmatmul.mubr.f32.gmra.mxu0 %v2975
    %v2977 = vpop.f32.mrf.mxu0
    %v2978 = vadd.f32 %v2894, %v2977
    %v2979 = vpop.f32.mrf.mxu0
    %2980 = vdwg.mxu0
    %2981 = vmatprep.subr.mxu0 0.0
    %2982 = vmatpush1.msra.mxu0 0.0
    %2983 = vmatprep.subr.mxu0 0.0
    %2984 = vmatpush1.msra.mxu0 0.0
    %2985 = vmatprep.subr.mxu0 0.0
    %2986 = vmatpush1.msra.mxu0 0.0
    %2987 = vmatprep.subr.mxu0 0.0
    %2988 = vmatpush1.msra.mxu0 0.0
    %2989 = vmatprep.subr.mxu0 0.0
    %2990 = vmatpush1.msra.mxu0 0.0
    %2991 = vmatprep.subr.mxu0 0.0
    %2992 = vmatpush1.msra.mxu0 0.0
    %2993 = vmatprep.subr.mxu0 0.0
    %2994 = vmatpush1.msra.mxu0 0.0
    %2995 = vmatprep.subr.mxu0 0.0
    %2996 = vmatpush1.msra.mxu0 0.0
    %2997 = vmatprep.subr.mxu0 0.0
    %2998 = vmatpush1.msra.mxu0 0.0
    %2999 = vmatprep.subr.mxu0 0.0
    %3000 = vmatpush1.msra.mxu0 0.0
    %3001 = vmatprep.subr.mxu0 0.0
    %3002 = vmatpush1.msra.mxu0 0.0
    %3003 = vmatprep.subr.mxu0 0.0
    %3004 = vmatpush1.msra.mxu0 0.0
    %3005 = vmatprep.subr.mxu0 0.0
    %3006 = vmatpush1.msra.mxu0 0.0
    %3007 = vmatprep.subr.mxu0 0.0
    %v3008 = vand.u32 %v2063, 4294901760
    %v3009 = vsub.f32 %v2063, %v3008
    %v3010 = vand.u32 %v3009, 4294901760
    %3011 = vmatpush1.msra.mxu0 %v3010
    %3012 = vmatprep.subr.mxu0 0.0
    %v3013 = vand.u32 %v2062, 4294901760
    %v3014 = vsub.f32 %v2062, %v3013
    %v3015 = vand.u32 %v3014, 4294901760
    %3016 = vmatpush1.msra.mxu0 %v3015
    %3017 = vmatprep.subr.mxu0 0.0
    %v3018 = vand.u32 %v2061, 4294901760
    %v3019 = vsub.f32 %v2061, %v3018
    %v3020 = vand.u32 %v3019, 4294901760
    %3021 = vmatpush1.msra.mxu0 %v3020
    %3022 = vmatprep.subr.mxu0 0.0
    %3023 = vmatpush2.msra.mxu0 0.0
    %3024 = vmatprep.subr.mxu0 0.0
    %3025 = vmatpush2.msra.mxu0 0.0
    %3026 = vmatprep.subr.mxu0 0.0
    %3027 = vmatpush2.msra.mxu0 0.0
    %3028 = vmatprep.subr.mxu0 0.0
    %3029 = vmatpush2.msra.mxu0 0.0
    %3030 = vmatprep.subr.mxu0 0.0
    %3031 = vmatpush2.msra.mxu0 0.0
    %3032 = vmatprep.subr.mxu0 0.0
    %3033 = vmatpush2.msra.mxu0 0.0
    %3034 = vmatprep.subr.mxu0 0.0
    %3035 = vmatpush2.msra.mxu0 0.0
    %3036 = vmatprep.subr.mxu0 0.0
    %3037 = vmatpush2.msra.mxu0 0.0
    %3038 = vmatprep.subr.mxu0 0.0
    %3039 = vmatpush2.msra.mxu0 0.0
    %3040 = vmatprep.subr.mxu0 0.0
    %3041 = vmatpush2.msra.mxu0 0.0
    %3042 = vmatprep.subr.mxu0 0.0
    %3043 = vmatpush2.msra.mxu0 0.0
    %3044 = vmatprep.subr.mxu0 0.0
    %3045 = vmatpush2.msra.mxu0 0.0
    %3046 = vmatprep.subr.mxu0 0.0
    %3047 = vmatpush2.msra.mxu0 0.0
    %3048 = vmatprep.subr.mxu0 0.0
    %3049 = vmatpush2.msra.mxu0 0.0
    %3050 = vmatprep.subr.mxu0 0.0
    %3051 = vmatpush2.msra.mxu0 0.0
    %3052 = vmatprep.subr.mxu0 0.0
    %3053 = vmatpush2.msra.mxu0 0.0
    %3054 = vmatprep.mubr.f32.mxu0 0.0
    %v3055 = vand.u32 %v2627, 4294901760
    %3056 = vmatmul.mubr.f32.gmra.mxu0 %v3055
    %v3057 = vpop.f32.mrf.mxu0
    %v3058 = vadd.f32 %v2970, %v3057
    %v3059 = vpop.f32.mrf.mxu0
    %3060 = vmatprep.mubr.f32.mxu0 0.0
    %v3061 = vand.u32 %v2630, 4294901760
    %3062 = vmatmul.mubr.f32.gmra.mxu0 %v3061
    %v3063 = vpop.f32.mrf.mxu0
    %v3064 = vadd.f32 %v2978, %v3063
    %v3065 = vpop.f32.mrf.mxu0
    %3066 = vdwg.mxu0
    %3067 = vmatprep.subr.mxu0 0.0
    %3068 = vmatpush1.msra.mxu0 0.0
    %3069 = vmatprep.subr.mxu0 0.0
    %3070 = vmatpush1.msra.mxu0 0.0
    %3071 = vmatprep.subr.mxu0 0.0
    %3072 = vmatpush1.msra.mxu0 0.0
    %3073 = vmatprep.subr.mxu0 0.0
    %3074 = vmatpush1.msra.mxu0 0.0
    %3075 = vmatprep.subr.mxu0 0.0
    %3076 = vmatpush1.msra.mxu0 0.0
    %3077 = vmatprep.subr.mxu0 0.0
    %3078 = vmatpush1.msra.mxu0 0.0
    %3079 = vmatprep.subr.mxu0 0.0
    %3080 = vmatpush1.msra.mxu0 0.0
    %3081 = vmatprep.subr.mxu0 0.0
    %3082 = vmatpush1.msra.mxu0 0.0
    %3083 = vmatprep.subr.mxu0 0.0
    %3084 = vmatpush1.msra.mxu0 0.0
    %3085 = vmatprep.subr.mxu0 0.0
    %3086 = vmatpush1.msra.mxu0 0.0
    %3087 = vmatprep.subr.mxu0 0.0
    %3088 = vmatpush1.msra.mxu0 0.0
    %3089 = vmatprep.subr.mxu0 0.0
    %3090 = vmatpush1.msra.mxu0 0.0
    %3091 = vmatprep.subr.mxu0 0.0
    %3092 = vmatpush1.msra.mxu0 0.0
    %3093 = vmatprep.subr.mxu0 0.0
    %v3094 = vand.u32 %v2063, 4294901760
    %3095 = vmatpush1.msra.mxu0 %v3094
    %3096 = vmatprep.subr.mxu0 0.0
    %v3097 = vand.u32 %v2062, 4294901760
    %3098 = vmatpush1.msra.mxu0 %v3097
    %3099 = vmatprep.subr.mxu0 0.0
    %v3100 = vand.u32 %v2061, 4294901760
    %3101 = vmatpush1.msra.mxu0 %v3100
    %3102 = vmatprep.subr.mxu0 0.0
    %3103 = vmatpush2.msra.mxu0 0.0
    %3104 = vmatprep.subr.mxu0 0.0
    %3105 = vmatpush2.msra.mxu0 0.0
    %3106 = vmatprep.subr.mxu0 0.0
    %3107 = vmatpush2.msra.mxu0 0.0
    %3108 = vmatprep.subr.mxu0 0.0
    %3109 = vmatpush2.msra.mxu0 0.0
    %3110 = vmatprep.subr.mxu0 0.0
    %3111 = vmatpush2.msra.mxu0 0.0
    %3112 = vmatprep.subr.mxu0 0.0
    %3113 = vmatpush2.msra.mxu0 0.0
    %3114 = vmatprep.subr.mxu0 0.0
    %3115 = vmatpush2.msra.mxu0 0.0
    %3116 = vmatprep.subr.mxu0 0.0
    %3117 = vmatpush2.msra.mxu0 0.0
    %3118 = vmatprep.subr.mxu0 0.0
    %3119 = vmatpush2.msra.mxu0 0.0
    %3120 = vmatprep.subr.mxu0 0.0
    %3121 = vmatpush2.msra.mxu0 0.0
    %3122 = vmatprep.subr.mxu0 0.0
    %3123 = vmatpush2.msra.mxu0 0.0
    %3124 = vmatprep.subr.mxu0 0.0
    %3125 = vmatpush2.msra.mxu0 0.0
    %3126 = vmatprep.subr.mxu0 0.0
    %3127 = vmatpush2.msra.mxu0 0.0
    %3128 = vmatprep.subr.mxu0 0.0
    %3129 = vmatpush2.msra.mxu0 0.0
    %3130 = vmatprep.subr.mxu0 0.0
    %3131 = vmatpush2.msra.mxu0 0.0
    %3132 = vmatprep.subr.mxu0 0.0
    %3133 = vmatpush2.msra.mxu0 0.0
    %3134 = vmatprep.mubr.f32.mxu0 0.0
    %v3135 = vand.u32 %v2627, 4294901760
    %3136 = vmatmul.mubr.f32.gmra.mxu0 %v3135
    %v3137 = vpop.f32.mrf.mxu0
    %v3138 = vadd.f32 %v3058, %v3137
    %v3139 = vpop.f32.mrf.mxu0
    %3140 = vmatprep.mubr.f32.mxu0 0.0
    %v3141 = vand.u32 %v2630, 4294901760
    %3142 = vmatmul.mubr.f32.gmra.mxu0 %v3141
    %v3143 = vpop.f32.mrf.mxu0
    %v3144 = vadd.f32 %v3064, %v3143
    %v3145 = vpop.f32.mrf.mxu0
    %3146 = vdwg.mxu0
    %v3147 = vmax.f32 %v1998, 0.0
    %v3148 = vmax.f32 %v2080, 0.0
    %v3149 = vand.u32 2147483647, %v1998
    %v3150 = vand.u32 2147483647, %v2080
    %v3151 = vsub.f32 0.0, %v3149
    %v3152 = vsub.f32 0.0, %v3150
    %v3153 = vmul.f32 %v3151, 1.442695
    %v3154 = vpow.pop %v3153
    %v3155 = vmul.f32 %v3152, 1.442695
    %v3156 = vpow.pop %v3155
    %v3157 = vadd.f32 %v3154, 1.0
    %v3158 = vadd.f32 %v3156, 1.0
    %v3159 = vlog2.pop %v3157
    %v3160 = vmul.f32 %v3159, 0.6931472
    %v3161 = vlog2.pop %v3158
    %v3162 = vmul.f32 %v3161, 0.6931472
    %v3163 = vadd.f32 %v3147, %v3160
    %v3164 = vadd.f32 %v3148, %v3162
    %v3165 = vadd.f32 %v3163, 0.001
    %v3166 = vadd.f32 %v3164, 0.001
    %vm3167 = vcmp.lt.f32.partialorder %v2077, 0.5
    %v3168 = vsel %vm3167, 1, 0
    %vm3169 = vcmp.eq.s32.totalorder %v3168, 1
    %3171 = vrot.lane.b32.xlu0 %v3165, 80
    %v3172 = vpop.permute.xlu0 %3171
    %v3174 = vsel %vm3169, 1.0, %v3172
    %vm3175 = vcmp.gt.f32.partialorder %v2077, 6.5
    %v3176 = vsel %vm3175, 1, 0
    %vm3177 = vcmp.eq.s32.totalorder %v3176, 1
    %3179 = vrot.lane.b32.xlu0 %v3166, 80
    %v3180 = vpop.permute.xlu0 %3179
    %v3182 = vsel %vm3177, 1.0, %v3180
    %v3183 = vadd.f32 %v52, 3.0
    %3185 = vrot.lane.b32.xlu0 %v3183, 125
    %v3186 = vpop.permute.xlu0 %3185
    %v3187 = vsel %vm1035, %v3186, 0
    %v3190 = vsel %vm1045, %v2075, 0
    %3192 = vmatprep.subr.mxu0 0.0
    %3193 = vmatpush1.msra.mxu0 0.0
    %3194 = vmatprep.subr.mxu0 0.0
    %3195 = vmatpush1.msra.mxu0 0.0
    %3196 = vmatprep.subr.mxu0 0.0
    %3197 = vmatpush1.msra.mxu0 0.0
    %3198 = vmatprep.subr.mxu0 0.0
    %3199 = vmatpush1.msra.mxu0 0.0
    %3200 = vmatprep.subr.mxu0 0.0
    %3201 = vmatpush1.msra.mxu0 0.0
    %3202 = vmatprep.subr.mxu0 0.0
    %3203 = vmatpush1.msra.mxu0 0.0
    %3204 = vmatprep.subr.mxu0 0.0
    %3205 = vmatpush1.msra.mxu0 0.0
    %3206 = vmatprep.subr.mxu0 0.0
    %3207 = vmatpush1.msra.mxu0 0.0
    %3208 = vmatprep.subr.mxu0 0.0
    %3209 = vmatpush1.msra.mxu0 0.0
    %3210 = vmatprep.subr.mxu0 0.0
    %3211 = vmatpush1.msra.mxu0 0.0
    %3212 = vmatprep.subr.mxu0 0.0
    %3213 = vmatpush1.msra.mxu0 0.0
    %3214 = vmatprep.subr.mxu0 0.0
    %3215 = vmatpush1.msra.mxu0 0.0
    %3216 = vmatprep.subr.mxu0 0.0
    %3217 = vmatpush1.msra.mxu0 0.0
    %3218 = vmatprep.subr.mxu0 0.0
    %3219 = vmatpush1.msra.mxu0 0.0
    %3220 = vmatprep.subr.mxu0 0.0
    %3221 = vmatpush1.msra.mxu0 0.0
    %3222 = vmatprep.subr.mxu0 0.0
    %v3223 = vand.u32 %v3190, 4294901760
    %3224 = vmatpush1.msra.mxu0 %v3223
    %3225 = vmatprep.subr.mxu0 0.0
    %3226 = vmatpush2.msra.mxu0 0.0
    %3227 = vmatprep.subr.mxu0 0.0
    %3228 = vmatpush2.msra.mxu0 0.0
    %3229 = vmatprep.subr.mxu0 0.0
    %3230 = vmatpush2.msra.mxu0 0.0
    %3231 = vmatprep.subr.mxu0 0.0
    %3232 = vmatpush2.msra.mxu0 0.0
    %3233 = vmatprep.subr.mxu0 0.0
    %3234 = vmatpush2.msra.mxu0 0.0
    %3235 = vmatprep.subr.mxu0 0.0
    %3236 = vmatpush2.msra.mxu0 0.0
    %3237 = vmatprep.subr.mxu0 0.0
    %3238 = vmatpush2.msra.mxu0 0.0
    %3239 = vmatprep.subr.mxu0 0.0
    %3240 = vmatpush2.msra.mxu0 0.0
    %3241 = vmatprep.subr.mxu0 0.0
    %3242 = vmatpush2.msra.mxu0 0.0
    %3243 = vmatprep.subr.mxu0 0.0
    %3244 = vmatpush2.msra.mxu0 0.0
    %3245 = vmatprep.subr.mxu0 0.0
    %3246 = vmatpush2.msra.mxu0 0.0
    %3247 = vmatprep.subr.mxu0 0.0
    %3248 = vmatpush2.msra.mxu0 0.0
    %3249 = vmatprep.subr.mxu0 0.0
    %3250 = vmatpush2.msra.mxu0 0.0
    %3251 = vmatprep.subr.mxu0 0.0
    %3252 = vmatpush2.msra.mxu0 0.0
    %3253 = vmatprep.subr.mxu0 0.0
    %3254 = vmatpush2.msra.mxu0 0.0
    %3255 = vmatprep.subr.mxu0 0.0
    %3256 = vmatpush2.msra.mxu0 0.0
    %3257 = vmatprep.mubr.f32.mxu0 0.0
    %v3258 = vand.u32 %v3187, 4294901760
    %v3259 = vsub.f32 %v3187, %v3258
    %v3260 = vand.u32 %v3259, 4294901760
    %v3261 = vsub.f32 %v3259, %v3260
    %v3262 = vand.u32 %v3261, 4294901760
    %3263 = vmatmul.mubr.f32.gmra.mxu0 %v3262
    %v3264 = vpop.f32.mrf.mxu0
    %v3265 = vadd.f32 0.0, %v3264
    %v3266 = vpop.f32.mrf.mxu0
    %3267 = vdwg.mxu0
    %3268 = vmatprep.subr.mxu0 0.0
    %3269 = vmatpush1.msra.mxu0 0.0
    %3270 = vmatprep.subr.mxu0 0.0
    %3271 = vmatpush1.msra.mxu0 0.0
    %3272 = vmatprep.subr.mxu0 0.0
    %3273 = vmatpush1.msra.mxu0 0.0
    %3274 = vmatprep.subr.mxu0 0.0
    %3275 = vmatpush1.msra.mxu0 0.0
    %3276 = vmatprep.subr.mxu0 0.0
    %3277 = vmatpush1.msra.mxu0 0.0
    %3278 = vmatprep.subr.mxu0 0.0
    %3279 = vmatpush1.msra.mxu0 0.0
    %3280 = vmatprep.subr.mxu0 0.0
    %3281 = vmatpush1.msra.mxu0 0.0
    %3282 = vmatprep.subr.mxu0 0.0
    %3283 = vmatpush1.msra.mxu0 0.0
    %3284 = vmatprep.subr.mxu0 0.0
    %3285 = vmatpush1.msra.mxu0 0.0
    %3286 = vmatprep.subr.mxu0 0.0
    %3287 = vmatpush1.msra.mxu0 0.0
    %3288 = vmatprep.subr.mxu0 0.0
    %3289 = vmatpush1.msra.mxu0 0.0
    %3290 = vmatprep.subr.mxu0 0.0
    %3291 = vmatpush1.msra.mxu0 0.0
    %3292 = vmatprep.subr.mxu0 0.0
    %3293 = vmatpush1.msra.mxu0 0.0
    %3294 = vmatprep.subr.mxu0 0.0
    %3295 = vmatpush1.msra.mxu0 0.0
    %3296 = vmatprep.subr.mxu0 0.0
    %3297 = vmatpush1.msra.mxu0 0.0
    %3298 = vmatprep.subr.mxu0 0.0
    %v3299 = vand.u32 %v3190, 4294901760
    %v3300 = vsub.f32 %v3190, %v3299
    %v3301 = vand.u32 %v3300, 4294901760
    %v3302 = vsub.f32 %v3300, %v3301
    %v3303 = vand.u32 %v3302, 4294901760
    %3304 = vmatpush1.msra.mxu0 %v3303
    %3305 = vmatprep.subr.mxu0 0.0
    %3306 = vmatpush2.msra.mxu0 0.0
    %3307 = vmatprep.subr.mxu0 0.0
    %3308 = vmatpush2.msra.mxu0 0.0
    %3309 = vmatprep.subr.mxu0 0.0
    %3310 = vmatpush2.msra.mxu0 0.0
    %3311 = vmatprep.subr.mxu0 0.0
    %3312 = vmatpush2.msra.mxu0 0.0
    %3313 = vmatprep.subr.mxu0 0.0
    %3314 = vmatpush2.msra.mxu0 0.0
    %3315 = vmatprep.subr.mxu0 0.0
    %3316 = vmatpush2.msra.mxu0 0.0
    %3317 = vmatprep.subr.mxu0 0.0
    %3318 = vmatpush2.msra.mxu0 0.0
    %3319 = vmatprep.subr.mxu0 0.0
    %3320 = vmatpush2.msra.mxu0 0.0
    %3321 = vmatprep.subr.mxu0 0.0
    %3322 = vmatpush2.msra.mxu0 0.0
    %3323 = vmatprep.subr.mxu0 0.0
    %3324 = vmatpush2.msra.mxu0 0.0
    %3325 = vmatprep.subr.mxu0 0.0
    %3326 = vmatpush2.msra.mxu0 0.0
    %3327 = vmatprep.subr.mxu0 0.0
    %3328 = vmatpush2.msra.mxu0 0.0
    %3329 = vmatprep.subr.mxu0 0.0
    %3330 = vmatpush2.msra.mxu0 0.0
    %3331 = vmatprep.subr.mxu0 0.0
    %3332 = vmatpush2.msra.mxu0 0.0
    %3333 = vmatprep.subr.mxu0 0.0
    %3334 = vmatpush2.msra.mxu0 0.0
    %3335 = vmatprep.subr.mxu0 0.0
    %3336 = vmatpush2.msra.mxu0 0.0
    %3337 = vmatprep.mubr.f32.mxu0 0.0
    %v3338 = vand.u32 %v3187, 4294901760
    %3339 = vmatmul.mubr.f32.gmra.mxu0 %v3338
    %v3340 = vpop.f32.mrf.mxu0
    %v3341 = vadd.f32 %v3265, %v3340
    %v3342 = vpop.f32.mrf.mxu0
    %3343 = vdwg.mxu0
    %3344 = vmatprep.subr.mxu0 0.0
    %3345 = vmatpush1.msra.mxu0 0.0
    %3346 = vmatprep.subr.mxu0 0.0
    %3347 = vmatpush1.msra.mxu0 0.0
    %3348 = vmatprep.subr.mxu0 0.0
    %3349 = vmatpush1.msra.mxu0 0.0
    %3350 = vmatprep.subr.mxu0 0.0
    %3351 = vmatpush1.msra.mxu0 0.0
    %3352 = vmatprep.subr.mxu0 0.0
    %3353 = vmatpush1.msra.mxu0 0.0
    %3354 = vmatprep.subr.mxu0 0.0
    %3355 = vmatpush1.msra.mxu0 0.0
    %3356 = vmatprep.subr.mxu0 0.0
    %3357 = vmatpush1.msra.mxu0 0.0
    %3358 = vmatprep.subr.mxu0 0.0
    %3359 = vmatpush1.msra.mxu0 0.0
    %3360 = vmatprep.subr.mxu0 0.0
    %3361 = vmatpush1.msra.mxu0 0.0
    %3362 = vmatprep.subr.mxu0 0.0
    %3363 = vmatpush1.msra.mxu0 0.0
    %3364 = vmatprep.subr.mxu0 0.0
    %3365 = vmatpush1.msra.mxu0 0.0
    %3366 = vmatprep.subr.mxu0 0.0
    %3367 = vmatpush1.msra.mxu0 0.0
    %3368 = vmatprep.subr.mxu0 0.0
    %3369 = vmatpush1.msra.mxu0 0.0
    %3370 = vmatprep.subr.mxu0 0.0
    %3371 = vmatpush1.msra.mxu0 0.0
    %3372 = vmatprep.subr.mxu0 0.0
    %3373 = vmatpush1.msra.mxu0 0.0
    %3374 = vmatprep.subr.mxu0 0.0
    %v3375 = vand.u32 %v3190, 4294901760
    %v3376 = vsub.f32 %v3190, %v3375
    %3377 = vmatpush1.msra.mxu0 %v3376
    %3378 = vmatprep.subr.mxu0 0.0
    %3379 = vmatpush2.msra.mxu0 0.0
    %3380 = vmatprep.subr.mxu0 0.0
    %3381 = vmatpush2.msra.mxu0 0.0
    %3382 = vmatprep.subr.mxu0 0.0
    %3383 = vmatpush2.msra.mxu0 0.0
    %3384 = vmatprep.subr.mxu0 0.0
    %3385 = vmatpush2.msra.mxu0 0.0
    %3386 = vmatprep.subr.mxu0 0.0
    %3387 = vmatpush2.msra.mxu0 0.0
    %3388 = vmatprep.subr.mxu0 0.0
    %3389 = vmatpush2.msra.mxu0 0.0
    %3390 = vmatprep.subr.mxu0 0.0
    %3391 = vmatpush2.msra.mxu0 0.0
    %3392 = vmatprep.subr.mxu0 0.0
    %3393 = vmatpush2.msra.mxu0 0.0
    %3394 = vmatprep.subr.mxu0 0.0
    %3395 = vmatpush2.msra.mxu0 0.0
    %3396 = vmatprep.subr.mxu0 0.0
    %3397 = vmatpush2.msra.mxu0 0.0
    %3398 = vmatprep.subr.mxu0 0.0
    %3399 = vmatpush2.msra.mxu0 0.0
    %3400 = vmatprep.subr.mxu0 0.0
    %3401 = vmatpush2.msra.mxu0 0.0
    %3402 = vmatprep.subr.mxu0 0.0
    %3403 = vmatpush2.msra.mxu0 0.0
    %3404 = vmatprep.subr.mxu0 0.0
    %3405 = vmatpush2.msra.mxu0 0.0
    %3406 = vmatprep.subr.mxu0 0.0
    %3407 = vmatpush2.msra.mxu0 0.0
    %3408 = vmatprep.subr.mxu0 0.0
    %3409 = vmatpush2.msra.mxu0 0.0
    %3410 = vmatprep.mubr.f32.mxu0 0.0
    %v3411 = vand.u32 %v3187, 4294901760
    %v3412 = vsub.f32 %v3187, %v3411
    %3413 = vmatmul.mubr.f32.gmra.mxu0 %v3412
    %v3414 = vpop.f32.mrf.mxu0
    %v3415 = vadd.f32 %v3341, %v3414
    %v3416 = vpop.f32.mrf.mxu0
    %3417 = vdwg.mxu0
    %3418 = vmatprep.subr.mxu0 0.0
    %3419 = vmatpush1.msra.mxu0 0.0
    %3420 = vmatprep.subr.mxu0 0.0
    %3421 = vmatpush1.msra.mxu0 0.0
    %3422 = vmatprep.subr.mxu0 0.0
    %3423 = vmatpush1.msra.mxu0 0.0
    %3424 = vmatprep.subr.mxu0 0.0
    %3425 = vmatpush1.msra.mxu0 0.0
    %3426 = vmatprep.subr.mxu0 0.0
    %3427 = vmatpush1.msra.mxu0 0.0
    %3428 = vmatprep.subr.mxu0 0.0
    %3429 = vmatpush1.msra.mxu0 0.0
    %3430 = vmatprep.subr.mxu0 0.0
    %3431 = vmatpush1.msra.mxu0 0.0
    %3432 = vmatprep.subr.mxu0 0.0
    %3433 = vmatpush1.msra.mxu0 0.0
    %3434 = vmatprep.subr.mxu0 0.0
    %3435 = vmatpush1.msra.mxu0 0.0
    %3436 = vmatprep.subr.mxu0 0.0
    %3437 = vmatpush1.msra.mxu0 0.0
    %3438 = vmatprep.subr.mxu0 0.0
    %3439 = vmatpush1.msra.mxu0 0.0
    %3440 = vmatprep.subr.mxu0 0.0
    %3441 = vmatpush1.msra.mxu0 0.0
    %3442 = vmatprep.subr.mxu0 0.0
    %3443 = vmatpush1.msra.mxu0 0.0
    %3444 = vmatprep.subr.mxu0 0.0
    %3445 = vmatpush1.msra.mxu0 0.0
    %3446 = vmatprep.subr.mxu0 0.0
    %3447 = vmatpush1.msra.mxu0 0.0
    %3448 = vmatprep.subr.mxu0 0.0
    %v3449 = vand.u32 %v3190, 4294901760
    %3450 = vmatpush1.msra.mxu0 %v3449
    %3451 = vmatprep.subr.mxu0 0.0
    %3452 = vmatpush2.msra.mxu0 0.0
    %3453 = vmatprep.subr.mxu0 0.0
    %3454 = vmatpush2.msra.mxu0 0.0
    %3455 = vmatprep.subr.mxu0 0.0
    %3456 = vmatpush2.msra.mxu0 0.0
    %3457 = vmatprep.subr.mxu0 0.0
    %3458 = vmatpush2.msra.mxu0 0.0
    %3459 = vmatprep.subr.mxu0 0.0
    %3460 = vmatpush2.msra.mxu0 0.0
    %3461 = vmatprep.subr.mxu0 0.0
    %3462 = vmatpush2.msra.mxu0 0.0
    %3463 = vmatprep.subr.mxu0 0.0
    %3464 = vmatpush2.msra.mxu0 0.0
    %3465 = vmatprep.subr.mxu0 0.0
    %3466 = vmatpush2.msra.mxu0 0.0
    %3467 = vmatprep.subr.mxu0 0.0
    %3468 = vmatpush2.msra.mxu0 0.0
    %3469 = vmatprep.subr.mxu0 0.0
    %3470 = vmatpush2.msra.mxu0 0.0
    %3471 = vmatprep.subr.mxu0 0.0
    %3472 = vmatpush2.msra.mxu0 0.0
    %3473 = vmatprep.subr.mxu0 0.0
    %3474 = vmatpush2.msra.mxu0 0.0
    %3475 = vmatprep.subr.mxu0 0.0
    %3476 = vmatpush2.msra.mxu0 0.0
    %3477 = vmatprep.subr.mxu0 0.0
    %3478 = vmatpush2.msra.mxu0 0.0
    %3479 = vmatprep.subr.mxu0 0.0
    %3480 = vmatpush2.msra.mxu0 0.0
    %3481 = vmatprep.subr.mxu0 0.0
    %3482 = vmatpush2.msra.mxu0 0.0
    %3483 = vmatprep.mubr.f32.mxu0 0.0
    %v3484 = vand.u32 %v3187, 4294901760
    %v3485 = vsub.f32 %v3187, %v3484
    %v3486 = vand.u32 %v3485, 4294901760
    %3487 = vmatmul.mubr.f32.gmra.mxu0 %v3486
    %v3488 = vpop.f32.mrf.mxu0
    %v3489 = vadd.f32 %v3415, %v3488
    %v3490 = vpop.f32.mrf.mxu0
    %3491 = vdwg.mxu0
    %3492 = vmatprep.subr.mxu0 0.0
    %3493 = vmatpush1.msra.mxu0 0.0
    %3494 = vmatprep.subr.mxu0 0.0
    %3495 = vmatpush1.msra.mxu0 0.0
    %3496 = vmatprep.subr.mxu0 0.0
    %3497 = vmatpush1.msra.mxu0 0.0
    %3498 = vmatprep.subr.mxu0 0.0
    %3499 = vmatpush1.msra.mxu0 0.0
    %3500 = vmatprep.subr.mxu0 0.0
    %3501 = vmatpush1.msra.mxu0 0.0
    %3502 = vmatprep.subr.mxu0 0.0
    %3503 = vmatpush1.msra.mxu0 0.0
    %3504 = vmatprep.subr.mxu0 0.0
    %3505 = vmatpush1.msra.mxu0 0.0
    %3506 = vmatprep.subr.mxu0 0.0
    %3507 = vmatpush1.msra.mxu0 0.0
    %3508 = vmatprep.subr.mxu0 0.0
    %3509 = vmatpush1.msra.mxu0 0.0
    %3510 = vmatprep.subr.mxu0 0.0
    %3511 = vmatpush1.msra.mxu0 0.0
    %3512 = vmatprep.subr.mxu0 0.0
    %3513 = vmatpush1.msra.mxu0 0.0
    %3514 = vmatprep.subr.mxu0 0.0
    %3515 = vmatpush1.msra.mxu0 0.0
    %3516 = vmatprep.subr.mxu0 0.0
    %3517 = vmatpush1.msra.mxu0 0.0
    %3518 = vmatprep.subr.mxu0 0.0
    %3519 = vmatpush1.msra.mxu0 0.0
    %3520 = vmatprep.subr.mxu0 0.0
    %3521 = vmatpush1.msra.mxu0 0.0
    %3522 = vmatprep.subr.mxu0 0.0
    %v3523 = vand.u32 %v3190, 4294901760
    %v3524 = vsub.f32 %v3190, %v3523
    %v3525 = vand.u32 %v3524, 4294901760
    %3526 = vmatpush1.msra.mxu0 %v3525
    %3527 = vmatprep.subr.mxu0 0.0
    %3528 = vmatpush2.msra.mxu0 0.0
    %3529 = vmatprep.subr.mxu0 0.0
    %3530 = vmatpush2.msra.mxu0 0.0
    %3531 = vmatprep.subr.mxu0 0.0
    %3532 = vmatpush2.msra.mxu0 0.0
    %3533 = vmatprep.subr.mxu0 0.0
    %3534 = vmatpush2.msra.mxu0 0.0
    %3535 = vmatprep.subr.mxu0 0.0
    %3536 = vmatpush2.msra.mxu0 0.0
    %3537 = vmatprep.subr.mxu0 0.0
    %3538 = vmatpush2.msra.mxu0 0.0
    %3539 = vmatprep.subr.mxu0 0.0
    %3540 = vmatpush2.msra.mxu0 0.0
    %3541 = vmatprep.subr.mxu0 0.0
    %3542 = vmatpush2.msra.mxu0 0.0
    %3543 = vmatprep.subr.mxu0 0.0
    %3544 = vmatpush2.msra.mxu0 0.0
    %3545 = vmatprep.subr.mxu0 0.0
    %3546 = vmatpush2.msra.mxu0 0.0
    %3547 = vmatprep.subr.mxu0 0.0
    %3548 = vmatpush2.msra.mxu0 0.0
    %3549 = vmatprep.subr.mxu0 0.0
    %3550 = vmatpush2.msra.mxu0 0.0
    %3551 = vmatprep.subr.mxu0 0.0
    %3552 = vmatpush2.msra.mxu0 0.0
    %3553 = vmatprep.subr.mxu0 0.0
    %3554 = vmatpush2.msra.mxu0 0.0
    %3555 = vmatprep.subr.mxu0 0.0
    %3556 = vmatpush2.msra.mxu0 0.0
    %3557 = vmatprep.subr.mxu0 0.0
    %3558 = vmatpush2.msra.mxu0 0.0
    %3559 = vmatprep.mubr.f32.mxu0 0.0
    %v3560 = vand.u32 %v3187, 4294901760
    %3561 = vmatmul.mubr.f32.gmra.mxu0 %v3560
    %v3562 = vpop.f32.mrf.mxu0
    %v3563 = vadd.f32 %v3489, %v3562
    %v3564 = vpop.f32.mrf.mxu0
    %3565 = vdwg.mxu0
    %3566 = vmatprep.subr.mxu0 0.0
    %3567 = vmatpush1.msra.mxu0 0.0
    %3568 = vmatprep.subr.mxu0 0.0
    %3569 = vmatpush1.msra.mxu0 0.0
    %3570 = vmatprep.subr.mxu0 0.0
    %3571 = vmatpush1.msra.mxu0 0.0
    %3572 = vmatprep.subr.mxu0 0.0
    %3573 = vmatpush1.msra.mxu0 0.0
    %3574 = vmatprep.subr.mxu0 0.0
    %3575 = vmatpush1.msra.mxu0 0.0
    %3576 = vmatprep.subr.mxu0 0.0
    %3577 = vmatpush1.msra.mxu0 0.0
    %3578 = vmatprep.subr.mxu0 0.0
    %3579 = vmatpush1.msra.mxu0 0.0
    %3580 = vmatprep.subr.mxu0 0.0
    %3581 = vmatpush1.msra.mxu0 0.0
    %3582 = vmatprep.subr.mxu0 0.0
    %3583 = vmatpush1.msra.mxu0 0.0
    %3584 = vmatprep.subr.mxu0 0.0
    %3585 = vmatpush1.msra.mxu0 0.0
    %3586 = vmatprep.subr.mxu0 0.0
    %3587 = vmatpush1.msra.mxu0 0.0
    %3588 = vmatprep.subr.mxu0 0.0
    %3589 = vmatpush1.msra.mxu0 0.0
    %3590 = vmatprep.subr.mxu0 0.0
    %3591 = vmatpush1.msra.mxu0 0.0
    %3592 = vmatprep.subr.mxu0 0.0
    %3593 = vmatpush1.msra.mxu0 0.0
    %3594 = vmatprep.subr.mxu0 0.0
    %3595 = vmatpush1.msra.mxu0 0.0
    %3596 = vmatprep.subr.mxu0 0.0
    %v3597 = vand.u32 %v3190, 4294901760
    %3598 = vmatpush1.msra.mxu0 %v3597
    %3599 = vmatprep.subr.mxu0 0.0
    %3600 = vmatpush2.msra.mxu0 0.0
    %3601 = vmatprep.subr.mxu0 0.0
    %3602 = vmatpush2.msra.mxu0 0.0
    %3603 = vmatprep.subr.mxu0 0.0
    %3604 = vmatpush2.msra.mxu0 0.0
    %3605 = vmatprep.subr.mxu0 0.0
    %3606 = vmatpush2.msra.mxu0 0.0
    %3607 = vmatprep.subr.mxu0 0.0
    %3608 = vmatpush2.msra.mxu0 0.0
    %3609 = vmatprep.subr.mxu0 0.0
    %3610 = vmatpush2.msra.mxu0 0.0
    %3611 = vmatprep.subr.mxu0 0.0
    %3612 = vmatpush2.msra.mxu0 0.0
    %3613 = vmatprep.subr.mxu0 0.0
    %3614 = vmatpush2.msra.mxu0 0.0
    %3615 = vmatprep.subr.mxu0 0.0
    %3616 = vmatpush2.msra.mxu0 0.0
    %3617 = vmatprep.subr.mxu0 0.0
    %3618 = vmatpush2.msra.mxu0 0.0
    %3619 = vmatprep.subr.mxu0 0.0
    %3620 = vmatpush2.msra.mxu0 0.0
    %3621 = vmatprep.subr.mxu0 0.0
    %3622 = vmatpush2.msra.mxu0 0.0
    %3623 = vmatprep.subr.mxu0 0.0
    %3624 = vmatpush2.msra.mxu0 0.0
    %3625 = vmatprep.subr.mxu0 0.0
    %3626 = vmatpush2.msra.mxu0 0.0
    %3627 = vmatprep.subr.mxu0 0.0
    %3628 = vmatpush2.msra.mxu0 0.0
    %3629 = vmatprep.subr.mxu0 0.0
    %3630 = vmatpush2.msra.mxu0 0.0
    %3631 = vmatprep.mubr.f32.mxu0 0.0
    %v3632 = vand.u32 %v3187, 4294901760
    %3633 = vmatmul.mubr.f32.gmra.mxu0 %v3632
    %v3634 = vpop.f32.mrf.mxu0
    %v3635 = vadd.f32 %v3563, %v3634
    %v3636 = vpop.f32.mrf.mxu0
    %3637 = vdwg.mxu0
    %vm3638 = vcmp.ge.f32.partialorder %v3635, %v3138
    %v3639 = vsel %vm3638, 1, 0
    %v3640 = vcvt.s32.f32 %v3639
    %v3642 = vsel %vm2082, %v3640, 0
    %3644 = vmatprep.subr.mxu0 0.0
    %3645 = vmatpush1.msra.mxu0 0.0
    %3646 = vmatprep.subr.mxu0 0.0
    %3647 = vmatpush1.msra.mxu0 0.0
    %3648 = vmatprep.subr.mxu0 0.0
    %3649 = vmatpush1.msra.mxu0 0.0
    %3650 = vmatprep.subr.mxu0 0.0
    %3651 = vmatpush1.msra.mxu0 0.0
    %3652 = vmatprep.subr.mxu0 0.0
    %3653 = vmatpush1.msra.mxu0 0.0
    %3654 = vmatprep.subr.mxu0 0.0
    %3655 = vmatpush1.msra.mxu0 0.0
    %3656 = vmatprep.subr.mxu0 0.0
    %3657 = vmatpush1.msra.mxu0 0.0
    %3658 = vmatprep.subr.mxu0 0.0
    %3659 = vmatpush1.msra.mxu0 0.0
    %3660 = vmatprep.subr.mxu0 0.0
    %3661 = vmatpush1.msra.mxu0 0.0
    %3662 = vmatprep.subr.mxu0 0.0
    %3663 = vmatpush1.msra.mxu0 0.0
    %3664 = vmatprep.subr.mxu0 0.0
    %3665 = vmatpush1.msra.mxu0 0.0
    %3666 = vmatprep.subr.mxu0 0.0
    %3667 = vmatpush1.msra.mxu0 0.0
    %3668 = vmatprep.subr.mxu0 0.0
    %3669 = vmatpush1.msra.mxu0 0.0
    %3670 = vmatprep.subr.mxu0 0.0
    %v3671 = vand.u32 %v2072, 4294901760
    %3672 = vmatpush1.msra.mxu0 %v3671
    %3673 = vmatprep.subr.mxu0 0.0
    %v3674 = vand.u32 %v2071, 4294901760
    %3675 = vmatpush1.msra.mxu0 %v3674
    %3676 = vmatprep.subr.mxu0 0.0
    %v3677 = vand.u32 %v2070, 4294901760
    %3678 = vmatpush1.msra.mxu0 %v3677
    %3679 = vmatprep.subr.mxu0 0.0
    %3680 = vmatpush2.msra.mxu0 0.0
    %3681 = vmatprep.subr.mxu0 0.0
    %3682 = vmatpush2.msra.mxu0 0.0
    %3683 = vmatprep.subr.mxu0 0.0
    %3684 = vmatpush2.msra.mxu0 0.0
    %3685 = vmatprep.subr.mxu0 0.0
    %3686 = vmatpush2.msra.mxu0 0.0
    %3687 = vmatprep.subr.mxu0 0.0
    %3688 = vmatpush2.msra.mxu0 0.0
    %3689 = vmatprep.subr.mxu0 0.0
    %3690 = vmatpush2.msra.mxu0 0.0
    %3691 = vmatprep.subr.mxu0 0.0
    %3692 = vmatpush2.msra.mxu0 0.0
    %3693 = vmatprep.subr.mxu0 0.0
    %3694 = vmatpush2.msra.mxu0 0.0
    %3695 = vmatprep.subr.mxu0 0.0
    %3696 = vmatpush2.msra.mxu0 0.0
    %3697 = vmatprep.subr.mxu0 0.0
    %3698 = vmatpush2.msra.mxu0 0.0
    %3699 = vmatprep.subr.mxu0 0.0
    %3700 = vmatpush2.msra.mxu0 0.0
    %3701 = vmatprep.subr.mxu0 0.0
    %3702 = vmatpush2.msra.mxu0 0.0
    %3703 = vmatprep.subr.mxu0 0.0
    %3704 = vmatpush2.msra.mxu0 0.0
    %3705 = vmatprep.subr.mxu0 0.0
    %3706 = vmatpush2.msra.mxu0 0.0
    %3707 = vmatprep.subr.mxu0 0.0
    %3708 = vmatpush2.msra.mxu0 0.0
    %3709 = vmatprep.subr.mxu0 0.0
    %3710 = vmatpush2.msra.mxu0 0.0
    %3711 = vmatprep.mubr.f32.mxu0 0.0
    %v3712 = vand.u32 %v3642, 4294901760
    %v3713 = vsub.f32 %v3642, %v3712
    %v3714 = vand.u32 %v3713, 4294901760
    %v3715 = vsub.f32 %v3713, %v3714
    %v3716 = vand.u32 %v3715, 4294901760
    %3717 = vmatmul.mubr.f32.gmra.mxu0 %v3716
    %v3718 = vpop.f32.mrf.mxu0
    %v3719 = vadd.f32 0.0, %v3718
    %v3720 = vpop.f32.mrf.mxu0
    %3721 = vdwg.mxu0
    %3722 = vmatprep.subr.mxu0 0.0
    %3723 = vmatpush1.msra.mxu0 0.0
    %3724 = vmatprep.subr.mxu0 0.0
    %3725 = vmatpush1.msra.mxu0 0.0
    %3726 = vmatprep.subr.mxu0 0.0
    %3727 = vmatpush1.msra.mxu0 0.0
    %3728 = vmatprep.subr.mxu0 0.0
    %3729 = vmatpush1.msra.mxu0 0.0
    %3730 = vmatprep.subr.mxu0 0.0
    %3731 = vmatpush1.msra.mxu0 0.0
    %3732 = vmatprep.subr.mxu0 0.0
    %3733 = vmatpush1.msra.mxu0 0.0
    %3734 = vmatprep.subr.mxu0 0.0
    %3735 = vmatpush1.msra.mxu0 0.0
    %3736 = vmatprep.subr.mxu0 0.0
    %3737 = vmatpush1.msra.mxu0 0.0
    %3738 = vmatprep.subr.mxu0 0.0
    %3739 = vmatpush1.msra.mxu0 0.0
    %3740 = vmatprep.subr.mxu0 0.0
    %3741 = vmatpush1.msra.mxu0 0.0
    %3742 = vmatprep.subr.mxu0 0.0
    %3743 = vmatpush1.msra.mxu0 0.0
    %3744 = vmatprep.subr.mxu0 0.0
    %3745 = vmatpush1.msra.mxu0 0.0
    %3746 = vmatprep.subr.mxu0 0.0
    %3747 = vmatpush1.msra.mxu0 0.0
    %3748 = vmatprep.subr.mxu0 0.0
    %v3749 = vand.u32 %v2072, 4294901760
    %v3750 = vsub.f32 %v2072, %v3749
    %v3751 = vand.u32 %v3750, 4294901760
    %v3752 = vsub.f32 %v3750, %v3751
    %v3753 = vand.u32 %v3752, 4294901760
    %3754 = vmatpush1.msra.mxu0 %v3753
    %3755 = vmatprep.subr.mxu0 0.0
    %v3756 = vand.u32 %v2071, 4294901760
    %v3757 = vsub.f32 %v2071, %v3756
    %v3758 = vand.u32 %v3757, 4294901760
    %v3759 = vsub.f32 %v3757, %v3758
    %v3760 = vand.u32 %v3759, 4294901760
    %3761 = vmatpush1.msra.mxu0 %v3760
    %3762 = vmatprep.subr.mxu0 0.0
    %v3763 = vand.u32 %v2070, 4294901760
    %v3764 = vsub.f32 %v2070, %v3763
    %v3765 = vand.u32 %v3764, 4294901760
    %v3766 = vsub.f32 %v3764, %v3765
    %v3767 = vand.u32 %v3766, 4294901760
    %3768 = vmatpush1.msra.mxu0 %v3767
    %3769 = vmatprep.subr.mxu0 0.0
    %3770 = vmatpush2.msra.mxu0 0.0
    %3771 = vmatprep.subr.mxu0 0.0
    %3772 = vmatpush2.msra.mxu0 0.0
    %3773 = vmatprep.subr.mxu0 0.0
    %3774 = vmatpush2.msra.mxu0 0.0
    %3775 = vmatprep.subr.mxu0 0.0
    %3776 = vmatpush2.msra.mxu0 0.0
    %3777 = vmatprep.subr.mxu0 0.0
    %3778 = vmatpush2.msra.mxu0 0.0
    %3779 = vmatprep.subr.mxu0 0.0
    %3780 = vmatpush2.msra.mxu0 0.0
    %3781 = vmatprep.subr.mxu0 0.0
    %3782 = vmatpush2.msra.mxu0 0.0
    %3783 = vmatprep.subr.mxu0 0.0
    %3784 = vmatpush2.msra.mxu0 0.0
    %3785 = vmatprep.subr.mxu0 0.0
    %3786 = vmatpush2.msra.mxu0 0.0
    %3787 = vmatprep.subr.mxu0 0.0
    %3788 = vmatpush2.msra.mxu0 0.0
    %3789 = vmatprep.subr.mxu0 0.0
    %3790 = vmatpush2.msra.mxu0 0.0
    %3791 = vmatprep.subr.mxu0 0.0
    %3792 = vmatpush2.msra.mxu0 0.0
    %3793 = vmatprep.subr.mxu0 0.0
    %3794 = vmatpush2.msra.mxu0 0.0
    %3795 = vmatprep.subr.mxu0 0.0
    %3796 = vmatpush2.msra.mxu0 0.0
    %3797 = vmatprep.subr.mxu0 0.0
    %3798 = vmatpush2.msra.mxu0 0.0
    %3799 = vmatprep.subr.mxu0 0.0
    %3800 = vmatpush2.msra.mxu0 0.0
    %3801 = vmatprep.mubr.f32.mxu0 0.0
    %v3802 = vand.u32 %v3642, 4294901760
    %3803 = vmatmul.mubr.f32.gmra.mxu0 %v3802
    %v3804 = vpop.f32.mrf.mxu0
    %v3805 = vadd.f32 %v3719, %v3804
    %v3806 = vpop.f32.mrf.mxu0
    %3807 = vdwg.mxu0
    %3808 = vmatprep.subr.mxu0 0.0
    %3809 = vmatpush1.msra.mxu0 0.0
    %3810 = vmatprep.subr.mxu0 0.0
    %3811 = vmatpush1.msra.mxu0 0.0
    %3812 = vmatprep.subr.mxu0 0.0
    %3813 = vmatpush1.msra.mxu0 0.0
    %3814 = vmatprep.subr.mxu0 0.0
    %3815 = vmatpush1.msra.mxu0 0.0
    %3816 = vmatprep.subr.mxu0 0.0
    %3817 = vmatpush1.msra.mxu0 0.0
    %3818 = vmatprep.subr.mxu0 0.0
    %3819 = vmatpush1.msra.mxu0 0.0
    %3820 = vmatprep.subr.mxu0 0.0
    %3821 = vmatpush1.msra.mxu0 0.0
    %3822 = vmatprep.subr.mxu0 0.0
    %3823 = vmatpush1.msra.mxu0 0.0
    %3824 = vmatprep.subr.mxu0 0.0
    %3825 = vmatpush1.msra.mxu0 0.0
    %3826 = vmatprep.subr.mxu0 0.0
    %3827 = vmatpush1.msra.mxu0 0.0
    %3828 = vmatprep.subr.mxu0 0.0
    %3829 = vmatpush1.msra.mxu0 0.0
    %3830 = vmatprep.subr.mxu0 0.0
    %3831 = vmatpush1.msra.mxu0 0.0
    %3832 = vmatprep.subr.mxu0 0.0
    %3833 = vmatpush1.msra.mxu0 0.0
    %3834 = vmatprep.subr.mxu0 0.0
    %v3835 = vand.u32 %v2072, 4294901760
    %v3836 = vsub.f32 %v2072, %v3835
    %3837 = vmatpush1.msra.mxu0 %v3836
    %3838 = vmatprep.subr.mxu0 0.0
    %v3839 = vand.u32 %v2071, 4294901760
    %v3840 = vsub.f32 %v2071, %v3839
    %3841 = vmatpush1.msra.mxu0 %v3840
    %3842 = vmatprep.subr.mxu0 0.0
    %v3843 = vand.u32 %v2070, 4294901760
    %v3844 = vsub.f32 %v2070, %v3843
    %3845 = vmatpush1.msra.mxu0 %v3844
    %3846 = vmatprep.subr.mxu0 0.0
    %3847 = vmatpush2.msra.mxu0 0.0
    %3848 = vmatprep.subr.mxu0 0.0
    %3849 = vmatpush2.msra.mxu0 0.0
    %3850 = vmatprep.subr.mxu0 0.0
    %3851 = vmatpush2.msra.mxu0 0.0
    %3852 = vmatprep.subr.mxu0 0.0
    %3853 = vmatpush2.msra.mxu0 0.0
    %3854 = vmatprep.subr.mxu0 0.0
    %3855 = vmatpush2.msra.mxu0 0.0
    %3856 = vmatprep.subr.mxu0 0.0
    %3857 = vmatpush2.msra.mxu0 0.0
    %3858 = vmatprep.subr.mxu0 0.0
    %3859 = vmatpush2.msra.mxu0 0.0
    %3860 = vmatprep.subr.mxu0 0.0
    %3861 = vmatpush2.msra.mxu0 0.0
    %3862 = vmatprep.subr.mxu0 0.0
    %3863 = vmatpush2.msra.mxu0 0.0
    %3864 = vmatprep.subr.mxu0 0.0
    %3865 = vmatpush2.msra.mxu0 0.0
    %3866 = vmatprep.subr.mxu0 0.0
    %3867 = vmatpush2.msra.mxu0 0.0
    %3868 = vmatprep.subr.mxu0 0.0
    %3869 = vmatpush2.msra.mxu0 0.0
    %3870 = vmatprep.subr.mxu0 0.0
    %3871 = vmatpush2.msra.mxu0 0.0
    %3872 = vmatprep.subr.mxu0 0.0
    %3873 = vmatpush2.msra.mxu0 0.0
    %3874 = vmatprep.subr.mxu0 0.0
    %3875 = vmatpush2.msra.mxu0 0.0
    %3876 = vmatprep.subr.mxu0 0.0
    %3877 = vmatpush2.msra.mxu0 0.0
    %3878 = vmatprep.mubr.f32.mxu0 0.0
    %v3879 = vand.u32 %v3642, 4294901760
    %v3880 = vsub.f32 %v3642, %v3879
    %3881 = vmatmul.mubr.f32.gmra.mxu0 %v3880
    %v3882 = vpop.f32.mrf.mxu0
    %v3883 = vadd.f32 %v3805, %v3882
    %v3884 = vpop.f32.mrf.mxu0
    %3885 = vdwg.mxu0
    %3886 = vmatprep.subr.mxu0 0.0
    %3887 = vmatpush1.msra.mxu0 0.0
    %3888 = vmatprep.subr.mxu0 0.0
    %3889 = vmatpush1.msra.mxu0 0.0
    %3890 = vmatprep.subr.mxu0 0.0
    %3891 = vmatpush1.msra.mxu0 0.0
    %3892 = vmatprep.subr.mxu0 0.0
    %3893 = vmatpush1.msra.mxu0 0.0
    %3894 = vmatprep.subr.mxu0 0.0
    %3895 = vmatpush1.msra.mxu0 0.0
    %3896 = vmatprep.subr.mxu0 0.0
    %3897 = vmatpush1.msra.mxu0 0.0
    %3898 = vmatprep.subr.mxu0 0.0
    %3899 = vmatpush1.msra.mxu0 0.0
    %3900 = vmatprep.subr.mxu0 0.0
    %3901 = vmatpush1.msra.mxu0 0.0
    %3902 = vmatprep.subr.mxu0 0.0
    %3903 = vmatpush1.msra.mxu0 0.0
    %3904 = vmatprep.subr.mxu0 0.0
    %3905 = vmatpush1.msra.mxu0 0.0
    %3906 = vmatprep.subr.mxu0 0.0
    %3907 = vmatpush1.msra.mxu0 0.0
    %3908 = vmatprep.subr.mxu0 0.0
    %3909 = vmatpush1.msra.mxu0 0.0
    %3910 = vmatprep.subr.mxu0 0.0
    %3911 = vmatpush1.msra.mxu0 0.0
    %3912 = vmatprep.subr.mxu0 0.0
    %v3913 = vand.u32 %v2072, 4294901760
    %3914 = vmatpush1.msra.mxu0 %v3913
    %3915 = vmatprep.subr.mxu0 0.0
    %v3916 = vand.u32 %v2071, 4294901760
    %3917 = vmatpush1.msra.mxu0 %v3916
    %3918 = vmatprep.subr.mxu0 0.0
    %v3919 = vand.u32 %v2070, 4294901760
    %3920 = vmatpush1.msra.mxu0 %v3919
    %3921 = vmatprep.subr.mxu0 0.0
    %3922 = vmatpush2.msra.mxu0 0.0
    %3923 = vmatprep.subr.mxu0 0.0
    %3924 = vmatpush2.msra.mxu0 0.0
    %3925 = vmatprep.subr.mxu0 0.0
    %3926 = vmatpush2.msra.mxu0 0.0
    %3927 = vmatprep.subr.mxu0 0.0
    %3928 = vmatpush2.msra.mxu0 0.0
    %3929 = vmatprep.subr.mxu0 0.0
    %3930 = vmatpush2.msra.mxu0 0.0
    %3931 = vmatprep.subr.mxu0 0.0
    %3932 = vmatpush2.msra.mxu0 0.0
    %3933 = vmatprep.subr.mxu0 0.0
    %3934 = vmatpush2.msra.mxu0 0.0
    %3935 = vmatprep.subr.mxu0 0.0
    %3936 = vmatpush2.msra.mxu0 0.0
    %3937 = vmatprep.subr.mxu0 0.0
    %3938 = vmatpush2.msra.mxu0 0.0
    %3939 = vmatprep.subr.mxu0 0.0
    %3940 = vmatpush2.msra.mxu0 0.0
    %3941 = vmatprep.subr.mxu0 0.0
    %3942 = vmatpush2.msra.mxu0 0.0
    %3943 = vmatprep.subr.mxu0 0.0
    %3944 = vmatpush2.msra.mxu0 0.0
    %3945 = vmatprep.subr.mxu0 0.0
    %3946 = vmatpush2.msra.mxu0 0.0
    %3947 = vmatprep.subr.mxu0 0.0
    %3948 = vmatpush2.msra.mxu0 0.0
    %3949 = vmatprep.subr.mxu0 0.0
    %3950 = vmatpush2.msra.mxu0 0.0
    %3951 = vmatprep.subr.mxu0 0.0
    %3952 = vmatpush2.msra.mxu0 0.0
    %3953 = vmatprep.mubr.f32.mxu0 0.0
    %v3954 = vand.u32 %v3642, 4294901760
    %v3955 = vsub.f32 %v3642, %v3954
    %v3956 = vand.u32 %v3955, 4294901760
    %3957 = vmatmul.mubr.f32.gmra.mxu0 %v3956
    %v3958 = vpop.f32.mrf.mxu0
    %v3959 = vadd.f32 %v3883, %v3958
    %v3960 = vpop.f32.mrf.mxu0
    %3961 = vdwg.mxu0
    %3962 = vmatprep.subr.mxu0 0.0
    %3963 = vmatpush1.msra.mxu0 0.0
    %3964 = vmatprep.subr.mxu0 0.0
    %3965 = vmatpush1.msra.mxu0 0.0
    %3966 = vmatprep.subr.mxu0 0.0
    %3967 = vmatpush1.msra.mxu0 0.0
    %3968 = vmatprep.subr.mxu0 0.0
    %3969 = vmatpush1.msra.mxu0 0.0
    %3970 = vmatprep.subr.mxu0 0.0
    %3971 = vmatpush1.msra.mxu0 0.0
    %3972 = vmatprep.subr.mxu0 0.0
    %3973 = vmatpush1.msra.mxu0 0.0
    %3974 = vmatprep.subr.mxu0 0.0
    %3975 = vmatpush1.msra.mxu0 0.0
    %3976 = vmatprep.subr.mxu0 0.0
    %3977 = vmatpush1.msra.mxu0 0.0
    %3978 = vmatprep.subr.mxu0 0.0
    %3979 = vmatpush1.msra.mxu0 0.0
    %3980 = vmatprep.subr.mxu0 0.0
    %3981 = vmatpush1.msra.mxu0 0.0
    %3982 = vmatprep.subr.mxu0 0.0
    %3983 = vmatpush1.msra.mxu0 0.0
    %3984 = vmatprep.subr.mxu0 0.0
    %3985 = vmatpush1.msra.mxu0 0.0
    %3986 = vmatprep.subr.mxu0 0.0
    %3987 = vmatpush1.msra.mxu0 0.0
    %3988 = vmatprep.subr.mxu0 0.0
    %v3989 = vand.u32 %v2072, 4294901760
    %v3990 = vsub.f32 %v2072, %v3989
    %v3991 = vand.u32 %v3990, 4294901760
    %3992 = vmatpush1.msra.mxu0 %v3991
    %3993 = vmatprep.subr.mxu0 0.0
    %v3994 = vand.u32 %v2071, 4294901760
    %v3995 = vsub.f32 %v2071, %v3994
    %v3996 = vand.u32 %v3995, 4294901760
    %3997 = vmatpush1.msra.mxu0 %v3996
    %3998 = vmatprep.subr.mxu0 0.0
    %v3999 = vand.u32 %v2070, 4294901760
    %v4000 = vsub.f32 %v2070, %v3999
    %v4001 = vand.u32 %v4000, 4294901760
    %4002 = vmatpush1.msra.mxu0 %v4001
    %4003 = vmatprep.subr.mxu0 0.0
    %4004 = vmatpush2.msra.mxu0 0.0
    %4005 = vmatprep.subr.mxu0 0.0
    %4006 = vmatpush2.msra.mxu0 0.0
    %4007 = vmatprep.subr.mxu0 0.0
    %4008 = vmatpush2.msra.mxu0 0.0
    %4009 = vmatprep.subr.mxu0 0.0
    %4010 = vmatpush2.msra.mxu0 0.0
    %4011 = vmatprep.subr.mxu0 0.0
    %4012 = vmatpush2.msra.mxu0 0.0
    %4013 = vmatprep.subr.mxu0 0.0
    %4014 = vmatpush2.msra.mxu0 0.0
    %4015 = vmatprep.subr.mxu0 0.0
    %4016 = vmatpush2.msra.mxu0 0.0
    %4017 = vmatprep.subr.mxu0 0.0
    %4018 = vmatpush2.msra.mxu0 0.0
    %4019 = vmatprep.subr.mxu0 0.0
    %4020 = vmatpush2.msra.mxu0 0.0
    %4021 = vmatprep.subr.mxu0 0.0
    %4022 = vmatpush2.msra.mxu0 0.0
    %4023 = vmatprep.subr.mxu0 0.0
    %4024 = vmatpush2.msra.mxu0 0.0
    %4025 = vmatprep.subr.mxu0 0.0
    %4026 = vmatpush2.msra.mxu0 0.0
    %4027 = vmatprep.subr.mxu0 0.0
    %4028 = vmatpush2.msra.mxu0 0.0
    %4029 = vmatprep.subr.mxu0 0.0
    %4030 = vmatpush2.msra.mxu0 0.0
    %4031 = vmatprep.subr.mxu0 0.0
    %4032 = vmatpush2.msra.mxu0 0.0
    %4033 = vmatprep.subr.mxu0 0.0
    %4034 = vmatpush2.msra.mxu0 0.0
    %4035 = vmatprep.mubr.f32.mxu0 0.0
    %v4036 = vand.u32 %v3642, 4294901760
    %4037 = vmatmul.mubr.f32.gmra.mxu0 %v4036
    %v4038 = vpop.f32.mrf.mxu0
    %v4039 = vadd.f32 %v3959, %v4038
    %v4040 = vpop.f32.mrf.mxu0
    %4041 = vdwg.mxu0
    %4042 = vmatprep.subr.mxu0 0.0
    %4043 = vmatpush1.msra.mxu0 0.0
    %4044 = vmatprep.subr.mxu0 0.0
    %4045 = vmatpush1.msra.mxu0 0.0
    %4046 = vmatprep.subr.mxu0 0.0
    %4047 = vmatpush1.msra.mxu0 0.0
    %4048 = vmatprep.subr.mxu0 0.0
    %4049 = vmatpush1.msra.mxu0 0.0
    %4050 = vmatprep.subr.mxu0 0.0
    %4051 = vmatpush1.msra.mxu0 0.0
    %4052 = vmatprep.subr.mxu0 0.0
    %4053 = vmatpush1.msra.mxu0 0.0
    %4054 = vmatprep.subr.mxu0 0.0
    %4055 = vmatpush1.msra.mxu0 0.0
    %4056 = vmatprep.subr.mxu0 0.0
    %4057 = vmatpush1.msra.mxu0 0.0
    %4058 = vmatprep.subr.mxu0 0.0
    %4059 = vmatpush1.msra.mxu0 0.0
    %4060 = vmatprep.subr.mxu0 0.0
    %4061 = vmatpush1.msra.mxu0 0.0
    %4062 = vmatprep.subr.mxu0 0.0
    %4063 = vmatpush1.msra.mxu0 0.0
    %4064 = vmatprep.subr.mxu0 0.0
    %4065 = vmatpush1.msra.mxu0 0.0
    %4066 = vmatprep.subr.mxu0 0.0
    %4067 = vmatpush1.msra.mxu0 0.0
    %4068 = vmatprep.subr.mxu0 0.0
    %v4069 = vand.u32 %v2072, 4294901760
    %4070 = vmatpush1.msra.mxu0 %v4069
    %4071 = vmatprep.subr.mxu0 0.0
    %v4072 = vand.u32 %v2071, 4294901760
    %4073 = vmatpush1.msra.mxu0 %v4072
    %4074 = vmatprep.subr.mxu0 0.0
    %v4075 = vand.u32 %v2070, 4294901760
    %4076 = vmatpush1.msra.mxu0 %v4075
    %4077 = vmatprep.subr.mxu0 0.0
    %4078 = vmatpush2.msra.mxu0 0.0
    %4079 = vmatprep.subr.mxu0 0.0
    %4080 = vmatpush2.msra.mxu0 0.0
    %4081 = vmatprep.subr.mxu0 0.0
    %4082 = vmatpush2.msra.mxu0 0.0
    %4083 = vmatprep.subr.mxu0 0.0
    %4084 = vmatpush2.msra.mxu0 0.0
    %4085 = vmatprep.subr.mxu0 0.0
    %4086 = vmatpush2.msra.mxu0 0.0
    %4087 = vmatprep.subr.mxu0 0.0
    %4088 = vmatpush2.msra.mxu0 0.0
    %4089 = vmatprep.subr.mxu0 0.0
    %4090 = vmatpush2.msra.mxu0 0.0
    %4091 = vmatprep.subr.mxu0 0.0
    %4092 = vmatpush2.msra.mxu0 0.0
    %4093 = vmatprep.subr.mxu0 0.0
    %4094 = vmatpush2.msra.mxu0 0.0
    %4095 = vmatprep.subr.mxu0 0.0
    %4096 = vmatpush2.msra.mxu0 0.0
    %4097 = vmatprep.subr.mxu0 0.0
    %4098 = vmatpush2.msra.mxu0 0.0
    %4099 = vmatprep.subr.mxu0 0.0
    %4100 = vmatpush2.msra.mxu0 0.0
    %4101 = vmatprep.subr.mxu0 0.0
    %4102 = vmatpush2.msra.mxu0 0.0
    %4103 = vmatprep.subr.mxu0 0.0
    %4104 = vmatpush2.msra.mxu0 0.0
    %4105 = vmatprep.subr.mxu0 0.0
    %4106 = vmatpush2.msra.mxu0 0.0
    %4107 = vmatprep.subr.mxu0 0.0
    %4108 = vmatpush2.msra.mxu0 0.0
    %4109 = vmatprep.mubr.f32.mxu0 0.0
    %v4110 = vand.u32 %v3642, 4294901760
    %4111 = vmatmul.mubr.f32.gmra.mxu0 %v4110
    %v4112 = vpop.f32.mrf.mxu0
    %v4113 = vadd.f32 %v4039, %v4112
    %v4114 = vpop.f32.mrf.mxu0
    %4115 = vdwg.mxu0
    %v4116 = vmax.f32 %v4113, 0.0
    %v4117 = vmin.f32 %v4116, 7.0
    %v4119 = vsel %vm1035, %v4117, 0
    %4121 = vmatprep.subr.mxu0 0.0
    %4122 = vmatpush1.msra.mxu0 0.0
    %4123 = vmatprep.subr.mxu0 0.0
    %4124 = vmatpush1.msra.mxu0 0.0
    %4125 = vmatprep.subr.mxu0 0.0
    %4126 = vmatpush1.msra.mxu0 0.0
    %4127 = vmatprep.subr.mxu0 0.0
    %4128 = vmatpush1.msra.mxu0 0.0
    %4129 = vmatprep.subr.mxu0 0.0
    %4130 = vmatpush1.msra.mxu0 0.0
    %4131 = vmatprep.subr.mxu0 0.0
    %4132 = vmatpush1.msra.mxu0 0.0
    %4133 = vmatprep.subr.mxu0 0.0
    %4134 = vmatpush1.msra.mxu0 0.0
    %4135 = vmatprep.subr.mxu0 0.0
    %4136 = vmatpush1.msra.mxu0 0.0
    %4137 = vmatprep.subr.mxu0 0.0
    %4138 = vmatpush1.msra.mxu0 0.0
    %4139 = vmatprep.subr.mxu0 0.0
    %4140 = vmatpush1.msra.mxu0 0.0
    %4141 = vmatprep.subr.mxu0 0.0
    %4142 = vmatpush1.msra.mxu0 0.0
    %4143 = vmatprep.subr.mxu0 0.0
    %4144 = vmatpush1.msra.mxu0 0.0
    %4145 = vmatprep.subr.mxu0 0.0
    %4146 = vmatpush1.msra.mxu0 0.0
    %4147 = vmatprep.subr.mxu0 0.0
    %4148 = vmatpush1.msra.mxu0 0.0
    %4149 = vmatprep.subr.mxu0 0.0
    %4150 = vmatpush1.msra.mxu0 0.0
    %4151 = vmatprep.subr.mxu0 0.0
    %v4152 = vand.u32 %v3190, 4294901760
    %4153 = vmatpush1.msra.mxu0 %v4152
    %4154 = vmatprep.subr.mxu0 0.0
    %4155 = vmatpush2.msra.mxu0 0.0
    %4156 = vmatprep.subr.mxu0 0.0
    %4157 = vmatpush2.msra.mxu0 0.0
    %4158 = vmatprep.subr.mxu0 0.0
    %4159 = vmatpush2.msra.mxu0 0.0
    %4160 = vmatprep.subr.mxu0 0.0
    %4161 = vmatpush2.msra.mxu0 0.0
    %4162 = vmatprep.subr.mxu0 0.0
    %4163 = vmatpush2.msra.mxu0 0.0
    %4164 = vmatprep.subr.mxu0 0.0
    %4165 = vmatpush2.msra.mxu0 0.0
    %4166 = vmatprep.subr.mxu0 0.0
    %4167 = vmatpush2.msra.mxu0 0.0
    %4168 = vmatprep.subr.mxu0 0.0
    %4169 = vmatpush2.msra.mxu0 0.0
    %4170 = vmatprep.subr.mxu0 0.0
    %4171 = vmatpush2.msra.mxu0 0.0
    %4172 = vmatprep.subr.mxu0 0.0
    %4173 = vmatpush2.msra.mxu0 0.0
    %4174 = vmatprep.subr.mxu0 0.0
    %4175 = vmatpush2.msra.mxu0 0.0
    %4176 = vmatprep.subr.mxu0 0.0
    %4177 = vmatpush2.msra.mxu0 0.0
    %4178 = vmatprep.subr.mxu0 0.0
    %4179 = vmatpush2.msra.mxu0 0.0
    %4180 = vmatprep.subr.mxu0 0.0
    %4181 = vmatpush2.msra.mxu0 0.0
    %4182 = vmatprep.subr.mxu0 0.0
    %4183 = vmatpush2.msra.mxu0 0.0
    %4184 = vmatprep.subr.mxu0 0.0
    %4185 = vmatpush2.msra.mxu0 0.0
    %4186 = vmatprep.mubr.f32.mxu0 0.0
    %v4187 = vand.u32 %v4119, 4294901760
    %v4188 = vsub.f32 %v4119, %v4187
    %v4189 = vand.u32 %v4188, 4294901760
    %v4190 = vsub.f32 %v4188, %v4189
    %v4191 = vand.u32 %v4190, 4294901760
    %4192 = vmatmul.mubr.f32.gmra.mxu0 %v4191
    %v4193 = vpop.f32.mrf.mxu0
    %v4194 = vadd.f32 0.0, %v4193
    %v4195 = vpop.f32.mrf.mxu0
    %4196 = vdwg.mxu0
    %4197 = vmatprep.subr.mxu0 0.0
    %4198 = vmatpush1.msra.mxu0 0.0
    %4199 = vmatprep.subr.mxu0 0.0
    %4200 = vmatpush1.msra.mxu0 0.0
    %4201 = vmatprep.subr.mxu0 0.0
    %4202 = vmatpush1.msra.mxu0 0.0
    %4203 = vmatprep.subr.mxu0 0.0
    %4204 = vmatpush1.msra.mxu0 0.0
    %4205 = vmatprep.subr.mxu0 0.0
    %4206 = vmatpush1.msra.mxu0 0.0
    %4207 = vmatprep.subr.mxu0 0.0
    %4208 = vmatpush1.msra.mxu0 0.0
    %4209 = vmatprep.subr.mxu0 0.0
    %4210 = vmatpush1.msra.mxu0 0.0
    %4211 = vmatprep.subr.mxu0 0.0
    %4212 = vmatpush1.msra.mxu0 0.0
    %4213 = vmatprep.subr.mxu0 0.0
    %4214 = vmatpush1.msra.mxu0 0.0
    %4215 = vmatprep.subr.mxu0 0.0
    %4216 = vmatpush1.msra.mxu0 0.0
    %4217 = vmatprep.subr.mxu0 0.0
    %4218 = vmatpush1.msra.mxu0 0.0
    %4219 = vmatprep.subr.mxu0 0.0
    %4220 = vmatpush1.msra.mxu0 0.0
    %4221 = vmatprep.subr.mxu0 0.0
    %4222 = vmatpush1.msra.mxu0 0.0
    %4223 = vmatprep.subr.mxu0 0.0
    %4224 = vmatpush1.msra.mxu0 0.0
    %4225 = vmatprep.subr.mxu0 0.0
    %4226 = vmatpush1.msra.mxu0 0.0
    %4227 = vmatprep.subr.mxu0 0.0
    %v4228 = vand.u32 %v3190, 4294901760
    %v4229 = vsub.f32 %v3190, %v4228
    %v4230 = vand.u32 %v4229, 4294901760
    %v4231 = vsub.f32 %v4229, %v4230
    %v4232 = vand.u32 %v4231, 4294901760
    %4233 = vmatpush1.msra.mxu0 %v4232
    %4234 = vmatprep.subr.mxu0 0.0
    %4235 = vmatpush2.msra.mxu0 0.0
    %4236 = vmatprep.subr.mxu0 0.0
    %4237 = vmatpush2.msra.mxu0 0.0
    %4238 = vmatprep.subr.mxu0 0.0
    %4239 = vmatpush2.msra.mxu0 0.0
    %4240 = vmatprep.subr.mxu0 0.0
    %4241 = vmatpush2.msra.mxu0 0.0
    %4242 = vmatprep.subr.mxu0 0.0
    %4243 = vmatpush2.msra.mxu0 0.0
    %4244 = vmatprep.subr.mxu0 0.0
    %4245 = vmatpush2.msra.mxu0 0.0
    %4246 = vmatprep.subr.mxu0 0.0
    %4247 = vmatpush2.msra.mxu0 0.0
    %4248 = vmatprep.subr.mxu0 0.0
    %4249 = vmatpush2.msra.mxu0 0.0
    %4250 = vmatprep.subr.mxu0 0.0
    %4251 = vmatpush2.msra.mxu0 0.0
    %4252 = vmatprep.subr.mxu0 0.0
    %4253 = vmatpush2.msra.mxu0 0.0
    %4254 = vmatprep.subr.mxu0 0.0
    %4255 = vmatpush2.msra.mxu0 0.0
    %4256 = vmatprep.subr.mxu0 0.0
    %4257 = vmatpush2.msra.mxu0 0.0
    %4258 = vmatprep.subr.mxu0 0.0
    %4259 = vmatpush2.msra.mxu0 0.0
    %4260 = vmatprep.subr.mxu0 0.0
    %4261 = vmatpush2.msra.mxu0 0.0
    %4262 = vmatprep.subr.mxu0 0.0
    %4263 = vmatpush2.msra.mxu0 0.0
    %4264 = vmatprep.subr.mxu0 0.0
    %4265 = vmatpush2.msra.mxu0 0.0
    %4266 = vmatprep.mubr.f32.mxu0 0.0
    %v4267 = vand.u32 %v4119, 4294901760
    %4268 = vmatmul.mubr.f32.gmra.mxu0 %v4267
    %v4269 = vpop.f32.mrf.mxu0
    %v4270 = vadd.f32 %v4194, %v4269
    %v4271 = vpop.f32.mrf.mxu0
    %4272 = vdwg.mxu0
    %4273 = vmatprep.subr.mxu0 0.0
    %4274 = vmatpush1.msra.mxu0 0.0
    %4275 = vmatprep.subr.mxu0 0.0
    %4276 = vmatpush1.msra.mxu0 0.0
    %4277 = vmatprep.subr.mxu0 0.0
    %4278 = vmatpush1.msra.mxu0 0.0
    %4279 = vmatprep.subr.mxu0 0.0
    %4280 = vmatpush1.msra.mxu0 0.0
    %4281 = vmatprep.subr.mxu0 0.0
    %4282 = vmatpush1.msra.mxu0 0.0
    %4283 = vmatprep.subr.mxu0 0.0
    %4284 = vmatpush1.msra.mxu0 0.0
    %4285 = vmatprep.subr.mxu0 0.0
    %4286 = vmatpush1.msra.mxu0 0.0
    %4287 = vmatprep.subr.mxu0 0.0
    %4288 = vmatpush1.msra.mxu0 0.0
    %4289 = vmatprep.subr.mxu0 0.0
    %4290 = vmatpush1.msra.mxu0 0.0
    %4291 = vmatprep.subr.mxu0 0.0
    %4292 = vmatpush1.msra.mxu0 0.0
    %4293 = vmatprep.subr.mxu0 0.0
    %4294 = vmatpush1.msra.mxu0 0.0
    %4295 = vmatprep.subr.mxu0 0.0
    %4296 = vmatpush1.msra.mxu0 0.0
    %4297 = vmatprep.subr.mxu0 0.0
    %4298 = vmatpush1.msra.mxu0 0.0
    %4299 = vmatprep.subr.mxu0 0.0
    %4300 = vmatpush1.msra.mxu0 0.0
    %4301 = vmatprep.subr.mxu0 0.0
    %4302 = vmatpush1.msra.mxu0 0.0
    %4303 = vmatprep.subr.mxu0 0.0
    %v4304 = vand.u32 %v3190, 4294901760
    %v4305 = vsub.f32 %v3190, %v4304
    %4306 = vmatpush1.msra.mxu0 %v4305
    %4307 = vmatprep.subr.mxu0 0.0
    %4308 = vmatpush2.msra.mxu0 0.0
    %4309 = vmatprep.subr.mxu0 0.0
    %4310 = vmatpush2.msra.mxu0 0.0
    %4311 = vmatprep.subr.mxu0 0.0
    %4312 = vmatpush2.msra.mxu0 0.0
    %4313 = vmatprep.subr.mxu0 0.0
    %4314 = vmatpush2.msra.mxu0 0.0
    %4315 = vmatprep.subr.mxu0 0.0
    %4316 = vmatpush2.msra.mxu0 0.0
    %4317 = vmatprep.subr.mxu0 0.0
    %4318 = vmatpush2.msra.mxu0 0.0
    %4319 = vmatprep.subr.mxu0 0.0
    %4320 = vmatpush2.msra.mxu0 0.0
    %4321 = vmatprep.subr.mxu0 0.0
    %4322 = vmatpush2.msra.mxu0 0.0
    %4323 = vmatprep.subr.mxu0 0.0
    %4324 = vmatpush2.msra.mxu0 0.0
    %4325 = vmatprep.subr.mxu0 0.0
    %4326 = vmatpush2.msra.mxu0 0.0
    %4327 = vmatprep.subr.mxu0 0.0
    %4328 = vmatpush2.msra.mxu0 0.0
    %4329 = vmatprep.subr.mxu0 0.0
    %4330 = vmatpush2.msra.mxu0 0.0
    %4331 = vmatprep.subr.mxu0 0.0
    %4332 = vmatpush2.msra.mxu0 0.0
    %4333 = vmatprep.subr.mxu0 0.0
    %4334 = vmatpush2.msra.mxu0 0.0
    %4335 = vmatprep.subr.mxu0 0.0
    %4336 = vmatpush2.msra.mxu0 0.0
    %4337 = vmatprep.subr.mxu0 0.0
    %4338 = vmatpush2.msra.mxu0 0.0
    %4339 = vmatprep.mubr.f32.mxu0 0.0
    %v4340 = vand.u32 %v4119, 4294901760
    %v4341 = vsub.f32 %v4119, %v4340
    %4342 = vmatmul.mubr.f32.gmra.mxu0 %v4341
    %v4343 = vpop.f32.mrf.mxu0
    %v4344 = vadd.f32 %v4270, %v4343
    %v4345 = vpop.f32.mrf.mxu0
    %4346 = vdwg.mxu0
    %4347 = vmatprep.subr.mxu0 0.0
    %4348 = vmatpush1.msra.mxu0 0.0
    %4349 = vmatprep.subr.mxu0 0.0
    %4350 = vmatpush1.msra.mxu0 0.0
    %4351 = vmatprep.subr.mxu0 0.0
    %4352 = vmatpush1.msra.mxu0 0.0
    %4353 = vmatprep.subr.mxu0 0.0
    %4354 = vmatpush1.msra.mxu0 0.0
    %4355 = vmatprep.subr.mxu0 0.0
    %4356 = vmatpush1.msra.mxu0 0.0
    %4357 = vmatprep.subr.mxu0 0.0
    %4358 = vmatpush1.msra.mxu0 0.0
    %4359 = vmatprep.subr.mxu0 0.0
    %4360 = vmatpush1.msra.mxu0 0.0
    %4361 = vmatprep.subr.mxu0 0.0
    %4362 = vmatpush1.msra.mxu0 0.0
    %4363 = vmatprep.subr.mxu0 0.0
    %4364 = vmatpush1.msra.mxu0 0.0
    %4365 = vmatprep.subr.mxu0 0.0
    %4366 = vmatpush1.msra.mxu0 0.0
    %4367 = vmatprep.subr.mxu0 0.0
    %4368 = vmatpush1.msra.mxu0 0.0
    %4369 = vmatprep.subr.mxu0 0.0
    %4370 = vmatpush1.msra.mxu0 0.0
    %4371 = vmatprep.subr.mxu0 0.0
    %4372 = vmatpush1.msra.mxu0 0.0
    %4373 = vmatprep.subr.mxu0 0.0
    %4374 = vmatpush1.msra.mxu0 0.0
    %4375 = vmatprep.subr.mxu0 0.0
    %4376 = vmatpush1.msra.mxu0 0.0
    %4377 = vmatprep.subr.mxu0 0.0
    %v4378 = vand.u32 %v3190, 4294901760
    %4379 = vmatpush1.msra.mxu0 %v4378
    %4380 = vmatprep.subr.mxu0 0.0
    %4381 = vmatpush2.msra.mxu0 0.0
    %4382 = vmatprep.subr.mxu0 0.0
    %4383 = vmatpush2.msra.mxu0 0.0
    %4384 = vmatprep.subr.mxu0 0.0
    %4385 = vmatpush2.msra.mxu0 0.0
    %4386 = vmatprep.subr.mxu0 0.0
    %4387 = vmatpush2.msra.mxu0 0.0
    %4388 = vmatprep.subr.mxu0 0.0
    %4389 = vmatpush2.msra.mxu0 0.0
    %4390 = vmatprep.subr.mxu0 0.0
    %4391 = vmatpush2.msra.mxu0 0.0
    %4392 = vmatprep.subr.mxu0 0.0
    %4393 = vmatpush2.msra.mxu0 0.0
    %4394 = vmatprep.subr.mxu0 0.0
    %4395 = vmatpush2.msra.mxu0 0.0
    %4396 = vmatprep.subr.mxu0 0.0
    %4397 = vmatpush2.msra.mxu0 0.0
    %4398 = vmatprep.subr.mxu0 0.0
    %4399 = vmatpush2.msra.mxu0 0.0
    %4400 = vmatprep.subr.mxu0 0.0
    %4401 = vmatpush2.msra.mxu0 0.0
    %4402 = vmatprep.subr.mxu0 0.0
    %4403 = vmatpush2.msra.mxu0 0.0
    %4404 = vmatprep.subr.mxu0 0.0
    %4405 = vmatpush2.msra.mxu0 0.0
    %4406 = vmatprep.subr.mxu0 0.0
    %4407 = vmatpush2.msra.mxu0 0.0
    %4408 = vmatprep.subr.mxu0 0.0
    %4409 = vmatpush2.msra.mxu0 0.0
    %4410 = vmatprep.subr.mxu0 0.0
    %4411 = vmatpush2.msra.mxu0 0.0
    %4412 = vmatprep.mubr.f32.mxu0 0.0
    %v4413 = vand.u32 %v4119, 4294901760
    %v4414 = vsub.f32 %v4119, %v4413
    %v4415 = vand.u32 %v4414, 4294901760
    %4416 = vmatmul.mubr.f32.gmra.mxu0 %v4415
    %v4417 = vpop.f32.mrf.mxu0
    %v4418 = vadd.f32 %v4344, %v4417
    %v4419 = vpop.f32.mrf.mxu0
    %4420 = vdwg.mxu0
    %4421 = vmatprep.subr.mxu0 0.0
    %4422 = vmatpush1.msra.mxu0 0.0
    %4423 = vmatprep.subr.mxu0 0.0
    %4424 = vmatpush1.msra.mxu0 0.0
    %4425 = vmatprep.subr.mxu0 0.0
    %4426 = vmatpush1.msra.mxu0 0.0
    %4427 = vmatprep.subr.mxu0 0.0
    %4428 = vmatpush1.msra.mxu0 0.0
    %4429 = vmatprep.subr.mxu0 0.0
    %4430 = vmatpush1.msra.mxu0 0.0
    %4431 = vmatprep.subr.mxu0 0.0
    %4432 = vmatpush1.msra.mxu0 0.0
    %4433 = vmatprep.subr.mxu0 0.0
    %4434 = vmatpush1.msra.mxu0 0.0
    %4435 = vmatprep.subr.mxu0 0.0
    %4436 = vmatpush1.msra.mxu0 0.0
    %4437 = vmatprep.subr.mxu0 0.0
    %4438 = vmatpush1.msra.mxu0 0.0
    %4439 = vmatprep.subr.mxu0 0.0
    %4440 = vmatpush1.msra.mxu0 0.0
    %4441 = vmatprep.subr.mxu0 0.0
    %4442 = vmatpush1.msra.mxu0 0.0
    %4443 = vmatprep.subr.mxu0 0.0
    %4444 = vmatpush1.msra.mxu0 0.0
    %4445 = vmatprep.subr.mxu0 0.0
    %4446 = vmatpush1.msra.mxu0 0.0
    %4447 = vmatprep.subr.mxu0 0.0
    %4448 = vmatpush1.msra.mxu0 0.0
    %4449 = vmatprep.subr.mxu0 0.0
    %4450 = vmatpush1.msra.mxu0 0.0
    %4451 = vmatprep.subr.mxu0 0.0
    %v4452 = vand.u32 %v3190, 4294901760
    %v4453 = vsub.f32 %v3190, %v4452
    %v4454 = vand.u32 %v4453, 4294901760
    %4455 = vmatpush1.msra.mxu0 %v4454
    %4456 = vmatprep.subr.mxu0 0.0
    %4457 = vmatpush2.msra.mxu0 0.0
    %4458 = vmatprep.subr.mxu0 0.0
    %4459 = vmatpush2.msra.mxu0 0.0
    %4460 = vmatprep.subr.mxu0 0.0
    %4461 = vmatpush2.msra.mxu0 0.0
    %4462 = vmatprep.subr.mxu0 0.0
    %4463 = vmatpush2.msra.mxu0 0.0
    %4464 = vmatprep.subr.mxu0 0.0
    %4465 = vmatpush2.msra.mxu0 0.0
    %4466 = vmatprep.subr.mxu0 0.0
    %4467 = vmatpush2.msra.mxu0 0.0
    %4468 = vmatprep.subr.mxu0 0.0
    %4469 = vmatpush2.msra.mxu0 0.0
    %4470 = vmatprep.subr.mxu0 0.0
    %4471 = vmatpush2.msra.mxu0 0.0
    %4472 = vmatprep.subr.mxu0 0.0
    %4473 = vmatpush2.msra.mxu0 0.0
    %4474 = vmatprep.subr.mxu0 0.0
    %4475 = vmatpush2.msra.mxu0 0.0
    %4476 = vmatprep.subr.mxu0 0.0
    %4477 = vmatpush2.msra.mxu0 0.0
    %4478 = vmatprep.subr.mxu0 0.0
    %4479 = vmatpush2.msra.mxu0 0.0
    %4480 = vmatprep.subr.mxu0 0.0
    %4481 = vmatpush2.msra.mxu0 0.0
    %4482 = vmatprep.subr.mxu0 0.0
    %4483 = vmatpush2.msra.mxu0 0.0
    %4484 = vmatprep.subr.mxu0 0.0
    %4485 = vmatpush2.msra.mxu0 0.0
    %4486 = vmatprep.subr.mxu0 0.0
    %4487 = vmatpush2.msra.mxu0 0.0
    %4488 = vmatprep.mubr.f32.mxu0 0.0
    %v4489 = vand.u32 %v4119, 4294901760
    %4490 = vmatmul.mubr.f32.gmra.mxu0 %v4489
    %v4491 = vpop.f32.mrf.mxu0
    %v4492 = vadd.f32 %v4418, %v4491
    %v4493 = vpop.f32.mrf.mxu0
    %4494 = vdwg.mxu0
    %4495 = vmatprep.subr.mxu0 0.0
    %4496 = vmatpush1.msra.mxu0 0.0
    %4497 = vmatprep.subr.mxu0 0.0
    %4498 = vmatpush1.msra.mxu0 0.0
    %4499 = vmatprep.subr.mxu0 0.0
    %4500 = vmatpush1.msra.mxu0 0.0
    %4501 = vmatprep.subr.mxu0 0.0
    %4502 = vmatpush1.msra.mxu0 0.0
    %4503 = vmatprep.subr.mxu0 0.0
    %4504 = vmatpush1.msra.mxu0 0.0
    %4505 = vmatprep.subr.mxu0 0.0
    %4506 = vmatpush1.msra.mxu0 0.0
    %4507 = vmatprep.subr.mxu0 0.0
    %4508 = vmatpush1.msra.mxu0 0.0
    %4509 = vmatprep.subr.mxu0 0.0
    %4510 = vmatpush1.msra.mxu0 0.0
    %4511 = vmatprep.subr.mxu0 0.0
    %4512 = vmatpush1.msra.mxu0 0.0
    %4513 = vmatprep.subr.mxu0 0.0
    %4514 = vmatpush1.msra.mxu0 0.0
    %4515 = vmatprep.subr.mxu0 0.0
    %4516 = vmatpush1.msra.mxu0 0.0
    %4517 = vmatprep.subr.mxu0 0.0
    %4518 = vmatpush1.msra.mxu0 0.0
    %4519 = vmatprep.subr.mxu0 0.0
    %4520 = vmatpush1.msra.mxu0 0.0
    %4521 = vmatprep.subr.mxu0 0.0
    %4522 = vmatpush1.msra.mxu0 0.0
    %4523 = vmatprep.subr.mxu0 0.0
    %4524 = vmatpush1.msra.mxu0 0.0
    %4525 = vmatprep.subr.mxu0 0.0
    %v4526 = vand.u32 %v3190, 4294901760
    %4527 = vmatpush1.msra.mxu0 %v4526
    %4528 = vmatprep.subr.mxu0 0.0
    %4529 = vmatpush2.msra.mxu0 0.0
    %4530 = vmatprep.subr.mxu0 0.0
    %4531 = vmatpush2.msra.mxu0 0.0
    %4532 = vmatprep.subr.mxu0 0.0
    %4533 = vmatpush2.msra.mxu0 0.0
    %4534 = vmatprep.subr.mxu0 0.0
    %4535 = vmatpush2.msra.mxu0 0.0
    %4536 = vmatprep.subr.mxu0 0.0
    %4537 = vmatpush2.msra.mxu0 0.0
    %4538 = vmatprep.subr.mxu0 0.0
    %4539 = vmatpush2.msra.mxu0 0.0
    %4540 = vmatprep.subr.mxu0 0.0
    %4541 = vmatpush2.msra.mxu0 0.0
    %4542 = vmatprep.subr.mxu0 0.0
    %4543 = vmatpush2.msra.mxu0 0.0
    %4544 = vmatprep.subr.mxu0 0.0
    %4545 = vmatpush2.msra.mxu0 0.0
    %4546 = vmatprep.subr.mxu0 0.0
    %4547 = vmatpush2.msra.mxu0 0.0
    %4548 = vmatprep.subr.mxu0 0.0
    %4549 = vmatpush2.msra.mxu0 0.0
    %4550 = vmatprep.subr.mxu0 0.0
    %4551 = vmatpush2.msra.mxu0 0.0
    %4552 = vmatprep.subr.mxu0 0.0
    %4553 = vmatpush2.msra.mxu0 0.0
    %4554 = vmatprep.subr.mxu0 0.0
    %4555 = vmatpush2.msra.mxu0 0.0
    %4556 = vmatprep.subr.mxu0 0.0
    %4557 = vmatpush2.msra.mxu0 0.0
    %4558 = vmatprep.subr.mxu0 0.0
    %4559 = vmatpush2.msra.mxu0 0.0
    %4560 = vmatprep.mubr.f32.mxu0 0.0
    %v4561 = vand.u32 %v4119, 4294901760
    %4562 = vmatmul.mubr.f32.gmra.mxu0 %v4561
    %v4563 = vpop.f32.mrf.mxu0
    %v4564 = vadd.f32 %v4492, %v4563
    %v4565 = vpop.f32.mrf.mxu0
    %4566 = vdwg.mxu0
    %v4567 = vsub.f32 %v4564, %v2077
    %v4568 = vand.u32 2147483647, %v4567
    %vm4569 = vcmp.lt.f32.partialorder %v4568, 0.5
    %v4570 = vsel %vm4569, 1, 0
    %v4571 = vcvt.s32.f32 %v4570
    %v4572 = vmul.f32 %v4571, %v2624
    %v4573 = vmul.f32 %v4571, %v3138
    %v4574 = vmul.f32 %v4571, %v2625
    %v4575 = vmul.f32 %v4571, %v3144
    %v4576 = vmul.f32 %v4571, %v3174
    %v4577 = vmul.f32 %v4571, %v3182
    %v4579 = vsel %vm2082, %v4572, 0
    %v4582 = vsel %vm2082, %v4573, 0
    %v4585 = vsel %vm2082, %v4574, 0
    %v4588 = vsel %vm2082, %v4575, 0
    %v4591 = vsel %vm2082, %v4576, 0
    %v4594 = vsel %vm2082, %v4577, 0
    %4596 = vmatprep.subr.mxu0 0.0
    %4597 = vmatpush1.msra.mxu0 0.0
    %4598 = vmatprep.subr.mxu0 0.0
    %4599 = vmatpush1.msra.mxu0 0.0
    %4600 = vmatprep.subr.mxu0 0.0
    %4601 = vmatpush1.msra.mxu0 0.0
    %4602 = vmatprep.subr.mxu0 0.0
    %4603 = vmatpush1.msra.mxu0 0.0
    %4604 = vmatprep.subr.mxu0 0.0
    %4605 = vmatpush1.msra.mxu0 0.0
    %4606 = vmatprep.subr.mxu0 0.0
    %4607 = vmatpush1.msra.mxu0 0.0
    %4608 = vmatprep.subr.mxu0 0.0
    %4609 = vmatpush1.msra.mxu0 0.0
    %4610 = vmatprep.subr.mxu0 0.0
    %4611 = vmatpush1.msra.mxu0 0.0
    %4612 = vmatprep.subr.mxu0 0.0
    %4613 = vmatpush1.msra.mxu0 0.0
    %4614 = vmatprep.subr.mxu0 0.0
    %4615 = vmatpush1.msra.mxu0 0.0
    %4616 = vmatprep.subr.mxu0 0.0
    %4617 = vmatpush1.msra.mxu0 0.0
    %4618 = vmatprep.subr.mxu0 0.0
    %4619 = vmatpush1.msra.mxu0 0.0
    %4620 = vmatprep.subr.mxu0 0.0
    %4621 = vmatpush1.msra.mxu0 0.0
    %4622 = vmatprep.subr.mxu0 0.0
    %v4623 = vand.u32 %v2072, 4294901760
    %4624 = vmatpush1.msra.mxu0 %v4623
    %4625 = vmatprep.subr.mxu0 0.0
    %v4626 = vand.u32 %v2071, 4294901760
    %4627 = vmatpush1.msra.mxu0 %v4626
    %4628 = vmatprep.subr.mxu0 0.0
    %v4629 = vand.u32 %v2070, 4294901760
    %4630 = vmatpush1.msra.mxu0 %v4629
    %4631 = vmatprep.subr.mxu0 0.0
    %4632 = vmatpush2.msra.mxu0 0.0
    %4633 = vmatprep.subr.mxu0 0.0
    %4634 = vmatpush2.msra.mxu0 0.0
    %4635 = vmatprep.subr.mxu0 0.0
    %4636 = vmatpush2.msra.mxu0 0.0
    %4637 = vmatprep.subr.mxu0 0.0
    %4638 = vmatpush2.msra.mxu0 0.0
    %4639 = vmatprep.subr.mxu0 0.0
    %4640 = vmatpush2.msra.mxu0 0.0
    %4641 = vmatprep.subr.mxu0 0.0
    %4642 = vmatpush2.msra.mxu0 0.0
    %4643 = vmatprep.subr.mxu0 0.0
    %4644 = vmatpush2.msra.mxu0 0.0
    %4645 = vmatprep.subr.mxu0 0.0
    %4646 = vmatpush2.msra.mxu0 0.0
    %4647 = vmatprep.subr.mxu0 0.0
    %4648 = vmatpush2.msra.mxu0 0.0
    %4649 = vmatprep.subr.mxu0 0.0
    %4650 = vmatpush2.msra.mxu0 0.0
    %4651 = vmatprep.subr.mxu0 0.0
    %4652 = vmatpush2.msra.mxu0 0.0
    %4653 = vmatprep.subr.mxu0 0.0
    %4654 = vmatpush2.msra.mxu0 0.0
    %4655 = vmatprep.subr.mxu0 0.0
    %4656 = vmatpush2.msra.mxu0 0.0
    %4657 = vmatprep.subr.mxu0 0.0
    %4658 = vmatpush2.msra.mxu0 0.0
    %4659 = vmatprep.subr.mxu0 0.0
    %4660 = vmatpush2.msra.mxu0 0.0
    %4661 = vmatprep.subr.mxu0 0.0
    %4662 = vmatpush2.msra.mxu0 0.0
    %4663 = vmatprep.mubr.f32.mxu0 0.0
    %v4664 = vand.u32 %v4579, 4294901760
    %v4665 = vsub.f32 %v4579, %v4664
    %v4666 = vand.u32 %v4665, 4294901760
    %v4667 = vsub.f32 %v4665, %v4666
    %v4668 = vand.u32 %v4667, 4294901760
    %4669 = vmatmul.mubr.f32.gmra.mxu0 %v4668
    %v4670 = vpop.f32.mrf.mxu0
    %v4671 = vadd.f32 0.0, %v4670
    %v4672 = vpop.f32.mrf.mxu0
    %4673 = vmatprep.mubr.f32.mxu0 0.0
    %v4674 = vand.u32 %v4582, 4294901760
    %v4675 = vsub.f32 %v4582, %v4674
    %v4676 = vand.u32 %v4675, 4294901760
    %v4677 = vsub.f32 %v4675, %v4676
    %v4678 = vand.u32 %v4677, 4294901760
    %4679 = vmatmul.mubr.f32.gmra.mxu0 %v4678
    %v4680 = vpop.f32.mrf.mxu0
    %v4681 = vadd.f32 0.0, %v4680
    %v4682 = vpop.f32.mrf.mxu0
    %4683 = vmatprep.mubr.f32.mxu0 0.0
    %v4684 = vand.u32 %v4585, 4294901760
    %v4685 = vsub.f32 %v4585, %v4684
    %v4686 = vand.u32 %v4685, 4294901760
    %v4687 = vsub.f32 %v4685, %v4686
    %v4688 = vand.u32 %v4687, 4294901760
    %4689 = vmatmul.mubr.f32.gmra.mxu0 %v4688
    %v4690 = vpop.f32.mrf.mxu0
    %v4691 = vadd.f32 0.0, %v4690
    %v4692 = vpop.f32.mrf.mxu0
    %4693 = vmatprep.mubr.f32.mxu0 0.0
    %v4694 = vand.u32 %v4588, 4294901760
    %v4695 = vsub.f32 %v4588, %v4694
    %v4696 = vand.u32 %v4695, 4294901760
    %v4697 = vsub.f32 %v4695, %v4696
    %v4698 = vand.u32 %v4697, 4294901760
    %4699 = vmatmul.mubr.f32.gmra.mxu0 %v4698
    %v4700 = vpop.f32.mrf.mxu0
    %v4701 = vadd.f32 0.0, %v4700
    %v4702 = vpop.f32.mrf.mxu0
    %4703 = vmatprep.mubr.f32.mxu0 0.0
    %v4704 = vand.u32 %v4591, 4294901760
    %v4705 = vsub.f32 %v4591, %v4704
    %v4706 = vand.u32 %v4705, 4294901760
    %v4707 = vsub.f32 %v4705, %v4706
    %v4708 = vand.u32 %v4707, 4294901760
    %4709 = vmatmul.mubr.f32.gmra.mxu0 %v4708
    %v4710 = vpop.f32.mrf.mxu0
    %v4711 = vadd.f32 0.0, %v4710
    %v4712 = vpop.f32.mrf.mxu0
    %4713 = vmatprep.mubr.f32.mxu0 0.0
    %v4714 = vand.u32 %v4594, 4294901760
    %v4715 = vsub.f32 %v4594, %v4714
    %v4716 = vand.u32 %v4715, 4294901760
    %v4717 = vsub.f32 %v4715, %v4716
    %v4718 = vand.u32 %v4717, 4294901760
    %4719 = vmatmul.mubr.f32.gmra.mxu0 %v4718
    %v4720 = vpop.f32.mrf.mxu0
    %v4721 = vadd.f32 0.0, %v4720
    %v4722 = vpop.f32.mrf.mxu0
    %4723 = vdwg.mxu0
    %4724 = vmatprep.subr.mxu0 0.0
    %4725 = vmatpush1.msra.mxu0 0.0
    %4726 = vmatprep.subr.mxu0 0.0
    %4727 = vmatpush1.msra.mxu0 0.0
    %4728 = vmatprep.subr.mxu0 0.0
    %4729 = vmatpush1.msra.mxu0 0.0
    %4730 = vmatprep.subr.mxu0 0.0
    %4731 = vmatpush1.msra.mxu0 0.0
    %4732 = vmatprep.subr.mxu0 0.0
    %4733 = vmatpush1.msra.mxu0 0.0
    %4734 = vmatprep.subr.mxu0 0.0
    %4735 = vmatpush1.msra.mxu0 0.0
    %4736 = vmatprep.subr.mxu0 0.0
    %4737 = vmatpush1.msra.mxu0 0.0
    %4738 = vmatprep.subr.mxu0 0.0
    %4739 = vmatpush1.msra.mxu0 0.0
    %4740 = vmatprep.subr.mxu0 0.0
    %4741 = vmatpush1.msra.mxu0 0.0
    %4742 = vmatprep.subr.mxu0 0.0
    %4743 = vmatpush1.msra.mxu0 0.0
    %4744 = vmatprep.subr.mxu0 0.0
    %4745 = vmatpush1.msra.mxu0 0.0
    %4746 = vmatprep.subr.mxu0 0.0
    %4747 = vmatpush1.msra.mxu0 0.0
    %4748 = vmatprep.subr.mxu0 0.0
    %4749 = vmatpush1.msra.mxu0 0.0
    %4750 = vmatprep.subr.mxu0 0.0
    %v4751 = vand.u32 %v2072, 4294901760
    %v4752 = vsub.f32 %v2072, %v4751
    %v4753 = vand.u32 %v4752, 4294901760
    %v4754 = vsub.f32 %v4752, %v4753
    %v4755 = vand.u32 %v4754, 4294901760
    %4756 = vmatpush1.msra.mxu0 %v4755
    %4757 = vmatprep.subr.mxu0 0.0
    %v4758 = vand.u32 %v2071, 4294901760
    %v4759 = vsub.f32 %v2071, %v4758
    %v4760 = vand.u32 %v4759, 4294901760
    %v4761 = vsub.f32 %v4759, %v4760
    %v4762 = vand.u32 %v4761, 4294901760
    %4763 = vmatpush1.msra.mxu0 %v4762
    %4764 = vmatprep.subr.mxu0 0.0
    %v4765 = vand.u32 %v2070, 4294901760
    %v4766 = vsub.f32 %v2070, %v4765
    %v4767 = vand.u32 %v4766, 4294901760
    %v4768 = vsub.f32 %v4766, %v4767
    %v4769 = vand.u32 %v4768, 4294901760
    %4770 = vmatpush1.msra.mxu0 %v4769
    %4771 = vmatprep.subr.mxu0 0.0
    %4772 = vmatpush2.msra.mxu0 0.0
    %4773 = vmatprep.subr.mxu0 0.0
    %4774 = vmatpush2.msra.mxu0 0.0
    %4775 = vmatprep.subr.mxu0 0.0
    %4776 = vmatpush2.msra.mxu0 0.0
    %4777 = vmatprep.subr.mxu0 0.0
    %4778 = vmatpush2.msra.mxu0 0.0
    %4779 = vmatprep.subr.mxu0 0.0
    %4780 = vmatpush2.msra.mxu0 0.0
    %4781 = vmatprep.subr.mxu0 0.0
    %4782 = vmatpush2.msra.mxu0 0.0
    %4783 = vmatprep.subr.mxu0 0.0
    %4784 = vmatpush2.msra.mxu0 0.0
    %4785 = vmatprep.subr.mxu0 0.0
    %4786 = vmatpush2.msra.mxu0 0.0
    %4787 = vmatprep.subr.mxu0 0.0
    %4788 = vmatpush2.msra.mxu0 0.0
    %4789 = vmatprep.subr.mxu0 0.0
    %4790 = vmatpush2.msra.mxu0 0.0
    %4791 = vmatprep.subr.mxu0 0.0
    %4792 = vmatpush2.msra.mxu0 0.0
    %4793 = vmatprep.subr.mxu0 0.0
    %4794 = vmatpush2.msra.mxu0 0.0
    %4795 = vmatprep.subr.mxu0 0.0
    %4796 = vmatpush2.msra.mxu0 0.0
    %4797 = vmatprep.subr.mxu0 0.0
    %4798 = vmatpush2.msra.mxu0 0.0
    %4799 = vmatprep.subr.mxu0 0.0
    %4800 = vmatpush2.msra.mxu0 0.0
    %4801 = vmatprep.subr.mxu0 0.0
    %4802 = vmatpush2.msra.mxu0 0.0
    %4803 = vmatprep.mubr.f32.mxu0 0.0
    %v4804 = vand.u32 %v4579, 4294901760
    %4805 = vmatmul.mubr.f32.gmra.mxu0 %v4804
    %v4806 = vpop.f32.mrf.mxu0
    %v4807 = vadd.f32 %v4671, %v4806
    %v4808 = vpop.f32.mrf.mxu0
    %4809 = vmatprep.mubr.f32.mxu0 0.0
    %v4810 = vand.u32 %v4582, 4294901760
    %4811 = vmatmul.mubr.f32.gmra.mxu0 %v4810
    %v4812 = vpop.f32.mrf.mxu0
    %v4813 = vadd.f32 %v4681, %v4812
    %v4814 = vpop.f32.mrf.mxu0
    %4815 = vmatprep.mubr.f32.mxu0 0.0
    %v4816 = vand.u32 %v4585, 4294901760
    %4817 = vmatmul.mubr.f32.gmra.mxu0 %v4816
    %v4818 = vpop.f32.mrf.mxu0
    %v4819 = vadd.f32 %v4691, %v4818
    %v4820 = vpop.f32.mrf.mxu0
    %4821 = vmatprep.mubr.f32.mxu0 0.0
    %v4822 = vand.u32 %v4588, 4294901760
    %4823 = vmatmul.mubr.f32.gmra.mxu0 %v4822
    %v4824 = vpop.f32.mrf.mxu0
    %v4825 = vadd.f32 %v4701, %v4824
    %v4826 = vpop.f32.mrf.mxu0
    %4827 = vmatprep.mubr.f32.mxu0 0.0
    %v4828 = vand.u32 %v4591, 4294901760
    %4829 = vmatmul.mubr.f32.gmra.mxu0 %v4828
    %v4830 = vpop.f32.mrf.mxu0
    %v4831 = vadd.f32 %v4711, %v4830
    %v4832 = vpop.f32.mrf.mxu0
    %4833 = vmatprep.mubr.f32.mxu0 0.0
    %v4834 = vand.u32 %v4594, 4294901760
    %4835 = vmatmul.mubr.f32.gmra.mxu0 %v4834
    %v4836 = vpop.f32.mrf.mxu0
    %v4837 = vadd.f32 %v4721, %v4836
    %v4838 = vpop.f32.mrf.mxu0
    %4839 = vdwg.mxu0
    %4840 = vmatprep.subr.mxu0 0.0
    %4841 = vmatpush1.msra.mxu0 0.0
    %4842 = vmatprep.subr.mxu0 0.0
    %4843 = vmatpush1.msra.mxu0 0.0
    %4844 = vmatprep.subr.mxu0 0.0
    %4845 = vmatpush1.msra.mxu0 0.0
    %4846 = vmatprep.subr.mxu0 0.0
    %4847 = vmatpush1.msra.mxu0 0.0
    %4848 = vmatprep.subr.mxu0 0.0
    %4849 = vmatpush1.msra.mxu0 0.0
    %4850 = vmatprep.subr.mxu0 0.0
    %4851 = vmatpush1.msra.mxu0 0.0
    %4852 = vmatprep.subr.mxu0 0.0
    %4853 = vmatpush1.msra.mxu0 0.0
    %4854 = vmatprep.subr.mxu0 0.0
    %4855 = vmatpush1.msra.mxu0 0.0
    %4856 = vmatprep.subr.mxu0 0.0
    %4857 = vmatpush1.msra.mxu0 0.0
    %4858 = vmatprep.subr.mxu0 0.0
    %4859 = vmatpush1.msra.mxu0 0.0
    %4860 = vmatprep.subr.mxu0 0.0
    %4861 = vmatpush1.msra.mxu0 0.0
    %4862 = vmatprep.subr.mxu0 0.0
    %4863 = vmatpush1.msra.mxu0 0.0
    %4864 = vmatprep.subr.mxu0 0.0
    %4865 = vmatpush1.msra.mxu0 0.0
    %4866 = vmatprep.subr.mxu0 0.0
    %v4867 = vand.u32 %v2072, 4294901760
    %v4868 = vsub.f32 %v2072, %v4867
    %4869 = vmatpush1.msra.mxu0 %v4868
    %4870 = vmatprep.subr.mxu0 0.0
    %v4871 = vand.u32 %v2071, 4294901760
    %v4872 = vsub.f32 %v2071, %v4871
    %4873 = vmatpush1.msra.mxu0 %v4872
    %4874 = vmatprep.subr.mxu0 0.0
    %v4875 = vand.u32 %v2070, 4294901760
    %v4876 = vsub.f32 %v2070, %v4875
    %4877 = vmatpush1.msra.mxu0 %v4876
    %4878 = vmatprep.subr.mxu0 0.0
    %4879 = vmatpush2.msra.mxu0 0.0
    %4880 = vmatprep.subr.mxu0 0.0
    %4881 = vmatpush2.msra.mxu0 0.0
    %4882 = vmatprep.subr.mxu0 0.0
    %4883 = vmatpush2.msra.mxu0 0.0
    %4884 = vmatprep.subr.mxu0 0.0
    %4885 = vmatpush2.msra.mxu0 0.0
    %4886 = vmatprep.subr.mxu0 0.0
    %4887 = vmatpush2.msra.mxu0 0.0
    %4888 = vmatprep.subr.mxu0 0.0
    %4889 = vmatpush2.msra.mxu0 0.0
    %4890 = vmatprep.subr.mxu0 0.0
    %4891 = vmatpush2.msra.mxu0 0.0
    %4892 = vmatprep.subr.mxu0 0.0
    %4893 = vmatpush2.msra.mxu0 0.0
    %4894 = vmatprep.subr.mxu0 0.0
    %4895 = vmatpush2.msra.mxu0 0.0
    %4896 = vmatprep.subr.mxu0 0.0
    %4897 = vmatpush2.msra.mxu0 0.0
    %4898 = vmatprep.subr.mxu0 0.0
    %4899 = vmatpush2.msra.mxu0 0.0
    %4900 = vmatprep.subr.mxu0 0.0
    %4901 = vmatpush2.msra.mxu0 0.0
    %4902 = vmatprep.subr.mxu0 0.0
    %4903 = vmatpush2.msra.mxu0 0.0
    %4904 = vmatprep.subr.mxu0 0.0
    %4905 = vmatpush2.msra.mxu0 0.0
    %4906 = vmatprep.subr.mxu0 0.0
    %4907 = vmatpush2.msra.mxu0 0.0
    %4908 = vmatprep.subr.mxu0 0.0
    %4909 = vmatpush2.msra.mxu0 0.0
    %4910 = vmatprep.mubr.f32.mxu0 0.0
    %v4911 = vand.u32 %v4579, 4294901760
    %v4912 = vsub.f32 %v4579, %v4911
    %4913 = vmatmul.mubr.f32.gmra.mxu0 %v4912
    %v4914 = vpop.f32.mrf.mxu0
    %v4915 = vadd.f32 %v4807, %v4914
    %v4916 = vpop.f32.mrf.mxu0
    %4917 = vmatprep.mubr.f32.mxu0 0.0
    %v4918 = vand.u32 %v4582, 4294901760
    %v4919 = vsub.f32 %v4582, %v4918
    %4920 = vmatmul.mubr.f32.gmra.mxu0 %v4919
    %v4921 = vpop.f32.mrf.mxu0
    %v4922 = vadd.f32 %v4813, %v4921
    %v4923 = vpop.f32.mrf.mxu0
    %4924 = vmatprep.mubr.f32.mxu0 0.0
    %v4925 = vand.u32 %v4585, 4294901760
    %v4926 = vsub.f32 %v4585, %v4925
    %4927 = vmatmul.mubr.f32.gmra.mxu0 %v4926
    %v4928 = vpop.f32.mrf.mxu0
    %v4929 = vadd.f32 %v4819, %v4928
    %v4930 = vpop.f32.mrf.mxu0
    %4931 = vmatprep.mubr.f32.mxu0 0.0
    %v4932 = vand.u32 %v4588, 4294901760
    %v4933 = vsub.f32 %v4588, %v4932
    %4934 = vmatmul.mubr.f32.gmra.mxu0 %v4933
    %v4935 = vpop.f32.mrf.mxu0
    %v4936 = vadd.f32 %v4825, %v4935
    %v4937 = vpop.f32.mrf.mxu0
    %4938 = vmatprep.mubr.f32.mxu0 0.0
    %v4939 = vand.u32 %v4591, 4294901760
    %v4940 = vsub.f32 %v4591, %v4939
    %4941 = vmatmul.mubr.f32.gmra.mxu0 %v4940
    %v4942 = vpop.f32.mrf.mxu0
    %v4943 = vadd.f32 %v4831, %v4942
    %v4944 = vpop.f32.mrf.mxu0
    %4945 = vmatprep.mubr.f32.mxu0 0.0
    %v4946 = vand.u32 %v4594, 4294901760
    %v4947 = vsub.f32 %v4594, %v4946
    %4948 = vmatmul.mubr.f32.gmra.mxu0 %v4947
    %v4949 = vpop.f32.mrf.mxu0
    %v4950 = vadd.f32 %v4837, %v4949
    %v4951 = vpop.f32.mrf.mxu0
    %4952 = vdwg.mxu0
    %4953 = vmatprep.subr.mxu0 0.0
    %4954 = vmatpush1.msra.mxu0 0.0
    %4955 = vmatprep.subr.mxu0 0.0
    %4956 = vmatpush1.msra.mxu0 0.0
    %4957 = vmatprep.subr.mxu0 0.0
    %4958 = vmatpush1.msra.mxu0 0.0
    %4959 = vmatprep.subr.mxu0 0.0
    %4960 = vmatpush1.msra.mxu0 0.0
    %4961 = vmatprep.subr.mxu0 0.0
    %4962 = vmatpush1.msra.mxu0 0.0
    %4963 = vmatprep.subr.mxu0 0.0
    %4964 = vmatpush1.msra.mxu0 0.0
    %4965 = vmatprep.subr.mxu0 0.0
    %4966 = vmatpush1.msra.mxu0 0.0
    %4967 = vmatprep.subr.mxu0 0.0
    %4968 = vmatpush1.msra.mxu0 0.0
    %4969 = vmatprep.subr.mxu0 0.0
    %4970 = vmatpush1.msra.mxu0 0.0
    %4971 = vmatprep.subr.mxu0 0.0
    %4972 = vmatpush1.msra.mxu0 0.0
    %4973 = vmatprep.subr.mxu0 0.0
    %4974 = vmatpush1.msra.mxu0 0.0
    %4975 = vmatprep.subr.mxu0 0.0
    %4976 = vmatpush1.msra.mxu0 0.0
    %4977 = vmatprep.subr.mxu0 0.0
    %4978 = vmatpush1.msra.mxu0 0.0
    %4979 = vmatprep.subr.mxu0 0.0
    %v4980 = vand.u32 %v2072, 4294901760
    %4981 = vmatpush1.msra.mxu0 %v4980
    %4982 = vmatprep.subr.mxu0 0.0
    %v4983 = vand.u32 %v2071, 4294901760
    %4984 = vmatpush1.msra.mxu0 %v4983
    %4985 = vmatprep.subr.mxu0 0.0
    %v4986 = vand.u32 %v2070, 4294901760
    %4987 = vmatpush1.msra.mxu0 %v4986
    %4988 = vmatprep.subr.mxu0 0.0
    %4989 = vmatpush2.msra.mxu0 0.0
    %4990 = vmatprep.subr.mxu0 0.0
    %4991 = vmatpush2.msra.mxu0 0.0
    %4992 = vmatprep.subr.mxu0 0.0
    %4993 = vmatpush2.msra.mxu0 0.0
    %4994 = vmatprep.subr.mxu0 0.0
    %4995 = vmatpush2.msra.mxu0 0.0
    %4996 = vmatprep.subr.mxu0 0.0
    %4997 = vmatpush2.msra.mxu0 0.0
    %4998 = vmatprep.subr.mxu0 0.0
    %4999 = vmatpush2.msra.mxu0 0.0
    %5000 = vmatprep.subr.mxu0 0.0
    %5001 = vmatpush2.msra.mxu0 0.0
    %5002 = vmatprep.subr.mxu0 0.0
    %5003 = vmatpush2.msra.mxu0 0.0
    %5004 = vmatprep.subr.mxu0 0.0
    %5005 = vmatpush2.msra.mxu0 0.0
    %5006 = vmatprep.subr.mxu0 0.0
    %5007 = vmatpush2.msra.mxu0 0.0
    %5008 = vmatprep.subr.mxu0 0.0
    %5009 = vmatpush2.msra.mxu0 0.0
    %5010 = vmatprep.subr.mxu0 0.0
    %5011 = vmatpush2.msra.mxu0 0.0
    %5012 = vmatprep.subr.mxu0 0.0
    %5013 = vmatpush2.msra.mxu0 0.0
    %5014 = vmatprep.subr.mxu0 0.0
    %5015 = vmatpush2.msra.mxu0 0.0
    %5016 = vmatprep.subr.mxu0 0.0
    %5017 = vmatpush2.msra.mxu0 0.0
    %5018 = vmatprep.subr.mxu0 0.0
    %5019 = vmatpush2.msra.mxu0 0.0
    %5020 = vmatprep.mubr.f32.mxu0 0.0
    %v5021 = vand.u32 %v4579, 4294901760
    %v5022 = vsub.f32 %v4579, %v5021
    %v5023 = vand.u32 %v5022, 4294901760
    %5024 = vmatmul.mubr.f32.gmra.mxu0 %v5023
    %v5025 = vpop.f32.mrf.mxu0
    %v5026 = vadd.f32 %v4915, %v5025
    %v5027 = vpop.f32.mrf.mxu0
    %5028 = vmatprep.mubr.f32.mxu0 0.0
    %v5029 = vand.u32 %v4582, 4294901760
    %v5030 = vsub.f32 %v4582, %v5029
    %v5031 = vand.u32 %v5030, 4294901760
    %5032 = vmatmul.mubr.f32.gmra.mxu0 %v5031
    %v5033 = vpop.f32.mrf.mxu0
    %v5034 = vadd.f32 %v4922, %v5033
    %v5035 = vpop.f32.mrf.mxu0
    %5036 = vmatprep.mubr.f32.mxu0 0.0
    %v5037 = vand.u32 %v4585, 4294901760
    %v5038 = vsub.f32 %v4585, %v5037
    %v5039 = vand.u32 %v5038, 4294901760
    %5040 = vmatmul.mubr.f32.gmra.mxu0 %v5039
    %v5041 = vpop.f32.mrf.mxu0
    %v5042 = vadd.f32 %v4929, %v5041
    %v5043 = vpop.f32.mrf.mxu0
    %5044 = vmatprep.mubr.f32.mxu0 0.0
    %v5045 = vand.u32 %v4588, 4294901760
    %v5046 = vsub.f32 %v4588, %v5045
    %v5047 = vand.u32 %v5046, 4294901760
    %5048 = vmatmul.mubr.f32.gmra.mxu0 %v5047
    %v5049 = vpop.f32.mrf.mxu0
    %v5050 = vadd.f32 %v4936, %v5049
    %v5051 = vpop.f32.mrf.mxu0
    %5052 = vmatprep.mubr.f32.mxu0 0.0
    %v5053 = vand.u32 %v4591, 4294901760
    %v5054 = vsub.f32 %v4591, %v5053
    %v5055 = vand.u32 %v5054, 4294901760
    %5056 = vmatmul.mubr.f32.gmra.mxu0 %v5055
    %v5057 = vpop.f32.mrf.mxu0
    %v5058 = vadd.f32 %v4943, %v5057
    %v5059 = vpop.f32.mrf.mxu0
    %5060 = vmatprep.mubr.f32.mxu0 0.0
    %v5061 = vand.u32 %v4594, 4294901760
    %v5062 = vsub.f32 %v4594, %v5061
    %v5063 = vand.u32 %v5062, 4294901760
    %5064 = vmatmul.mubr.f32.gmra.mxu0 %v5063
    %v5065 = vpop.f32.mrf.mxu0
    %v5066 = vadd.f32 %v4950, %v5065
    %v5067 = vpop.f32.mrf.mxu0
    %5068 = vdwg.mxu0
    %5069 = vmatprep.subr.mxu0 0.0
    %5070 = vmatpush1.msra.mxu0 0.0
    %5071 = vmatprep.subr.mxu0 0.0
    %5072 = vmatpush1.msra.mxu0 0.0
    %5073 = vmatprep.subr.mxu0 0.0
    %5074 = vmatpush1.msra.mxu0 0.0
    %5075 = vmatprep.subr.mxu0 0.0
    %5076 = vmatpush1.msra.mxu0 0.0
    %5077 = vmatprep.subr.mxu0 0.0
    %5078 = vmatpush1.msra.mxu0 0.0
    %5079 = vmatprep.subr.mxu0 0.0
    %5080 = vmatpush1.msra.mxu0 0.0
    %5081 = vmatprep.subr.mxu0 0.0
    %5082 = vmatpush1.msra.mxu0 0.0
    %5083 = vmatprep.subr.mxu0 0.0
    %5084 = vmatpush1.msra.mxu0 0.0
    %5085 = vmatprep.subr.mxu0 0.0
    %5086 = vmatpush1.msra.mxu0 0.0
    %5087 = vmatprep.subr.mxu0 0.0
    %5088 = vmatpush1.msra.mxu0 0.0
    %5089 = vmatprep.subr.mxu0 0.0
    %5090 = vmatpush1.msra.mxu0 0.0
    %5091 = vmatprep.subr.mxu0 0.0
    %5092 = vmatpush1.msra.mxu0 0.0
    %5093 = vmatprep.subr.mxu0 0.0
    %5094 = vmatpush1.msra.mxu0 0.0
    %5095 = vmatprep.subr.mxu0 0.0
    %v5096 = vand.u32 %v2072, 4294901760
    %v5097 = vsub.f32 %v2072, %v5096
    %v5098 = vand.u32 %v5097, 4294901760
    %5099 = vmatpush1.msra.mxu0 %v5098
    %5100 = vmatprep.subr.mxu0 0.0
    %v5101 = vand.u32 %v2071, 4294901760
    %v5102 = vsub.f32 %v2071, %v5101
    %v5103 = vand.u32 %v5102, 4294901760
    %5104 = vmatpush1.msra.mxu0 %v5103
    %5105 = vmatprep.subr.mxu0 0.0
    %v5106 = vand.u32 %v2070, 4294901760
    %v5107 = vsub.f32 %v2070, %v5106
    %v5108 = vand.u32 %v5107, 4294901760
    %5109 = vmatpush1.msra.mxu0 %v5108
    %5110 = vmatprep.subr.mxu0 0.0
    %5111 = vmatpush2.msra.mxu0 0.0
    %5112 = vmatprep.subr.mxu0 0.0
    %5113 = vmatpush2.msra.mxu0 0.0
    %5114 = vmatprep.subr.mxu0 0.0
    %5115 = vmatpush2.msra.mxu0 0.0
    %5116 = vmatprep.subr.mxu0 0.0
    %5117 = vmatpush2.msra.mxu0 0.0
    %5118 = vmatprep.subr.mxu0 0.0
    %5119 = vmatpush2.msra.mxu0 0.0
    %5120 = vmatprep.subr.mxu0 0.0
    %5121 = vmatpush2.msra.mxu0 0.0
    %5122 = vmatprep.subr.mxu0 0.0
    %5123 = vmatpush2.msra.mxu0 0.0
    %5124 = vmatprep.subr.mxu0 0.0
    %5125 = vmatpush2.msra.mxu0 0.0
    %5126 = vmatprep.subr.mxu0 0.0
    %5127 = vmatpush2.msra.mxu0 0.0
    %5128 = vmatprep.subr.mxu0 0.0
    %5129 = vmatpush2.msra.mxu0 0.0
    %5130 = vmatprep.subr.mxu0 0.0
    %5131 = vmatpush2.msra.mxu0 0.0
    %5132 = vmatprep.subr.mxu0 0.0
    %5133 = vmatpush2.msra.mxu0 0.0
    %5134 = vmatprep.subr.mxu0 0.0
    %5135 = vmatpush2.msra.mxu0 0.0
    %5136 = vmatprep.subr.mxu0 0.0
    %5137 = vmatpush2.msra.mxu0 0.0
    %5138 = vmatprep.subr.mxu0 0.0
    %5139 = vmatpush2.msra.mxu0 0.0
    %5140 = vmatprep.subr.mxu0 0.0
    %5141 = vmatpush2.msra.mxu0 0.0
    %5142 = vmatprep.mubr.f32.mxu0 0.0
    %v5143 = vand.u32 %v4579, 4294901760
    %5144 = vmatmul.mubr.f32.gmra.mxu0 %v5143
    %v5145 = vpop.f32.mrf.mxu0
    %v5146 = vadd.f32 %v5026, %v5145
    %v5147 = vpop.f32.mrf.mxu0
    %5148 = vmatprep.mubr.f32.mxu0 0.0
    %v5149 = vand.u32 %v4582, 4294901760
    %5150 = vmatmul.mubr.f32.gmra.mxu0 %v5149
    %v5151 = vpop.f32.mrf.mxu0
    %v5152 = vadd.f32 %v5034, %v5151
    %v5153 = vpop.f32.mrf.mxu0
    %5154 = vmatprep.mubr.f32.mxu0 0.0
    %v5155 = vand.u32 %v4585, 4294901760
    %5156 = vmatmul.mubr.f32.gmra.mxu0 %v5155
    %v5157 = vpop.f32.mrf.mxu0
    %v5158 = vadd.f32 %v5042, %v5157
    %v5159 = vpop.f32.mrf.mxu0
    %5160 = vmatprep.mubr.f32.mxu0 0.0
    %v5161 = vand.u32 %v4588, 4294901760
    %5162 = vmatmul.mubr.f32.gmra.mxu0 %v5161
    %v5163 = vpop.f32.mrf.mxu0
    %v5164 = vadd.f32 %v5050, %v5163
    %v5165 = vpop.f32.mrf.mxu0
    %5166 = vmatprep.mubr.f32.mxu0 0.0
    %v5167 = vand.u32 %v4591, 4294901760
    %5168 = vmatmul.mubr.f32.gmra.mxu0 %v5167
    %v5169 = vpop.f32.mrf.mxu0
    %v5170 = vadd.f32 %v5058, %v5169
    %v5171 = vpop.f32.mrf.mxu0
    %5172 = vmatprep.mubr.f32.mxu0 0.0
    %v5173 = vand.u32 %v4594, 4294901760
    %5174 = vmatmul.mubr.f32.gmra.mxu0 %v5173
    %v5175 = vpop.f32.mrf.mxu0
    %v5176 = vadd.f32 %v5066, %v5175
    %v5177 = vpop.f32.mrf.mxu0
    %5178 = vdwg.mxu0
    %5179 = vmatprep.subr.mxu0 0.0
    %5180 = vmatpush1.msra.mxu0 0.0
    %5181 = vmatprep.subr.mxu0 0.0
    %5182 = vmatpush1.msra.mxu0 0.0
    %5183 = vmatprep.subr.mxu0 0.0
    %5184 = vmatpush1.msra.mxu0 0.0
    %5185 = vmatprep.subr.mxu0 0.0
    %5186 = vmatpush1.msra.mxu0 0.0
    %5187 = vmatprep.subr.mxu0 0.0
    %5188 = vmatpush1.msra.mxu0 0.0
    %5189 = vmatprep.subr.mxu0 0.0
    %5190 = vmatpush1.msra.mxu0 0.0
    %5191 = vmatprep.subr.mxu0 0.0
    %5192 = vmatpush1.msra.mxu0 0.0
    %5193 = vmatprep.subr.mxu0 0.0
    %5194 = vmatpush1.msra.mxu0 0.0
    %5195 = vmatprep.subr.mxu0 0.0
    %5196 = vmatpush1.msra.mxu0 0.0
    %5197 = vmatprep.subr.mxu0 0.0
    %5198 = vmatpush1.msra.mxu0 0.0
    %5199 = vmatprep.subr.mxu0 0.0
    %5200 = vmatpush1.msra.mxu0 0.0
    %5201 = vmatprep.subr.mxu0 0.0
    %5202 = vmatpush1.msra.mxu0 0.0
    %5203 = vmatprep.subr.mxu0 0.0
    %5204 = vmatpush1.msra.mxu0 0.0
    %5205 = vmatprep.subr.mxu0 0.0
    %v5206 = vand.u32 %v2072, 4294901760
    %5207 = vmatpush1.msra.mxu0 %v5206
    %5208 = vmatprep.subr.mxu0 0.0
    %v5209 = vand.u32 %v2071, 4294901760
    %5210 = vmatpush1.msra.mxu0 %v5209
    %5211 = vmatprep.subr.mxu0 0.0
    %v5212 = vand.u32 %v2070, 4294901760
    %5213 = vmatpush1.msra.mxu0 %v5212
    %5214 = vmatprep.subr.mxu0 0.0
    %5215 = vmatpush2.msra.mxu0 0.0
    %5216 = vmatprep.subr.mxu0 0.0
    %5217 = vmatpush2.msra.mxu0 0.0
    %5218 = vmatprep.subr.mxu0 0.0
    %5219 = vmatpush2.msra.mxu0 0.0
    %5220 = vmatprep.subr.mxu0 0.0
    %5221 = vmatpush2.msra.mxu0 0.0
    %5222 = vmatprep.subr.mxu0 0.0
    %5223 = vmatpush2.msra.mxu0 0.0
    %5224 = vmatprep.subr.mxu0 0.0
    %5225 = vmatpush2.msra.mxu0 0.0
    %5226 = vmatprep.subr.mxu0 0.0
    %5227 = vmatpush2.msra.mxu0 0.0
    %5228 = vmatprep.subr.mxu0 0.0
    %5229 = vmatpush2.msra.mxu0 0.0
    %5230 = vmatprep.subr.mxu0 0.0
    %5231 = vmatpush2.msra.mxu0 0.0
    %5232 = vmatprep.subr.mxu0 0.0
    %5233 = vmatpush2.msra.mxu0 0.0
    %5234 = vmatprep.subr.mxu0 0.0
    %5235 = vmatpush2.msra.mxu0 0.0
    %5236 = vmatprep.subr.mxu0 0.0
    %5237 = vmatpush2.msra.mxu0 0.0
    %5238 = vmatprep.subr.mxu0 0.0
    %5239 = vmatpush2.msra.mxu0 0.0
    %5240 = vmatprep.subr.mxu0 0.0
    %5241 = vmatpush2.msra.mxu0 0.0
    %5242 = vmatprep.subr.mxu0 0.0
    %5243 = vmatpush2.msra.mxu0 0.0
    %5244 = vmatprep.subr.mxu0 0.0
    %5245 = vmatpush2.msra.mxu0 0.0
    %5246 = vmatprep.mubr.f32.mxu0 0.0
    %v5247 = vand.u32 %v4579, 4294901760
    %5248 = vmatmul.mubr.f32.gmra.mxu0 %v5247
    %v5249 = vpop.f32.mrf.mxu0
    %v5250 = vadd.f32 %v5146, %v5249
    %v5251 = vpop.f32.mrf.mxu0
    %5252 = vmatprep.mubr.f32.mxu0 0.0
    %v5253 = vand.u32 %v4582, 4294901760
    %5254 = vmatmul.mubr.f32.gmra.mxu0 %v5253
    %v5255 = vpop.f32.mrf.mxu0
    %v5256 = vadd.f32 %v5152, %v5255
    %v5257 = vpop.f32.mrf.mxu0
    %5258 = vmatprep.mubr.f32.mxu0 0.0
    %v5259 = vand.u32 %v4585, 4294901760
    %5260 = vmatmul.mubr.f32.gmra.mxu0 %v5259
    %v5261 = vpop.f32.mrf.mxu0
    %v5262 = vadd.f32 %v5158, %v5261
    %v5263 = vpop.f32.mrf.mxu0
    %5264 = vmatprep.mubr.f32.mxu0 0.0
    %v5265 = vand.u32 %v4588, 4294901760
    %5266 = vmatmul.mubr.f32.gmra.mxu0 %v5265
    %v5267 = vpop.f32.mrf.mxu0
    %v5268 = vadd.f32 %v5164, %v5267
    %v5269 = vpop.f32.mrf.mxu0
    %5270 = vmatprep.mubr.f32.mxu0 0.0
    %v5271 = vand.u32 %v4591, 4294901760
    %5272 = vmatmul.mubr.f32.gmra.mxu0 %v5271
    %v5273 = vpop.f32.mrf.mxu0
    %v5274 = vadd.f32 %v5170, %v5273
    %v5275 = vpop.f32.mrf.mxu0
    %5276 = vmatprep.mubr.f32.mxu0 0.0
    %v5277 = vand.u32 %v4594, 4294901760
    %5278 = vmatmul.mubr.f32.gmra.mxu0 %v5277
    %v5279 = vpop.f32.mrf.mxu0
    %v5280 = vadd.f32 %v5176, %v5279
    %v5281 = vpop.f32.mrf.mxu0
    %5282 = vdwg.mxu0
    %v5283 = vrcp.pop %v5250
    %v5284 = vsub.f32 %v5256, %v5250
    %v5285 = vsub.f32 %v5284, 3.0
    %v5286 = vsub.f32 %v5268, %v5262
    %v5287 = vsub.f32 %v5286, 3.0
    %v5288 = vmul.f32 %v5262, %v5283
    %5290 = vrot.lane.b32.xlu0 %v5285, 3
    %v5291 = vpop.permute.xlu0 %5290
    %v5293 = vsub.f32 %v52, %v5291
    %5295 = vrot.lane.b32.xlu0 %v5283, 3
    %v5296 = vpop.permute.xlu0 %5295
    %v5298 = vmul.f32 %v5293, %v5296
    %v5299 = vmax.f32 %v5298, 0.0
    %v5300 = vmin.f32 %v5299, 1.0
    %v5301 = vmul.f32 %v5300, %v5300
    %v5302 = vsub.f32 1.0, %v5300
    %v5303 = vmul.f32 %v5300, %v5302
    %5305 = vrot.lane.b32.xlu0 %v5301, 125
    %v5306 = vpop.permute.xlu0 %5305
    %v5308 = vmul.f32 %v5288, %v5306
    %5310 = vrot.lane.b32.xlu0 %v5303, 125
    %v5311 = vpop.permute.xlu0 %5310
    %v5313 = vmul.f32 %v5274, %v5311
    %v5314 = vadd.f32 %v5308, %v5313
    %v5315 = vmul.f32 %v5262, %v5314
    %v5316 = vadd.f32 %v5274, %v5280
    %v5317 = vmul.f32 %v5288, 2.0
    %v5318 = vsub.f32 %v5316, %v5317
    %v5319 = vmul.f32 %v5318, %v5311
    %v5320 = vadd.f32 %v5288, %v5319
    %v5321 = vrcp.pop %v5320
    %v5322 = vmul.f32 %v5315, %v5321
    %v5323 = vadd.f32 %v5287, %v5322
    %v5324 = vmul.f32 %v5288, %v5288
    %v5325 = vmul.f32 %v5280, %v5306
    %v5326 = vmul.f32 %v5317, %v5311
    %v5327 = vadd.f32 %v5325, %v5326
    %5329 = vrot.lane.b32.xlu0 %v5302, 125
    %v5330 = vpop.permute.xlu0 %5329
    %v5332 = vmul.f32 %v5274, %v5330
    %v5333 = vmul.f32 %v5332, %v5330
    %v5334 = vadd.f32 %v5327, %v5333
    %v5335 = vmul.f32 %v5324, %v5334
    %v5336 = vmul.f32 %v5320, %v5320
    %v5337 = vmax.f32 %v5336, 1e-30
    %v5338 = vrcp.pop %v5337
    %v5339 = vmul.f32 %v5335, %v5338
    %v5340 = vmax.f32 %v5339, 1e-30
    %v5341 = vlog2.pop %v5340
    %v5342 = vmul.f32 %v5341, 0.6931472
    %vm5343 = vcmp.ge.f32.partialorder %v52, -3.0
    %vm5344 = vcmp.le.f32.partialorder %v52, 3.0
    %vm5345 = vmand %vm5343, %vm5344
    %5347 = vrot.lane.b32.xlu0 %v5323, 3
    %v5348 = vpop.permute.xlu0 %5347
    %v5350 = vsel %vm5345, %v5348, %v52
    %5352 = vrot.lane.b32.xlu0 %v5342, 3
    %v5353 = vpop.permute.xlu0 %5352
    %v5355 = vsel %vm5345, %v5353, 0.0
    %v5356 = vmul.f32 %v52, -0.5
    %v5357 = vmul.f32 %v5356, %v52
    %v5358 = vmul.f32 %v5350, -0.5
    %v5359 = vmul.f32 %v5358, %v5350
    %5361 = vrot.lane.b32.xlu0 %v5355, 3
    %v5362 = vpop.permute.xlu0 %5361
    %v5364 = vsel %vm1035, %v5357, %v5359
    %vm5365 = vcmask 48128
    %v5366 = vsel %vm5365, %v5364, %v5362
    %vm5367 = vcmask 72704
    %v5368 = vsel %vm5367, %v5366, 0.0
    %5369 = vadd.xlane.f32.xlu0 %v5368
    %v5370 = vpop.xlane.xlu0 %5369
    %v5371 = vsub.f32 %v5370, 5.513631
    %5372 = vst [vmem:[#allocation8] sm:$0xff] %v5371
    // Predicated region
    $region26: #{tpu_custom_call.1} parent=1 // pred_check
      _
    $region27: #{tpu_custom_call.1} parent=1 // pred_check_branch
      %5374 = sbr.rel (0) target = $region29
    $region28: #{tpu_custom_call.1} parent=1 // pred_region
      %s5376 = ssub.s32 128, 128
      %5377 = vsyncadd [#allocation4], %s5376
      %s5379 = sshll.u32 [#allocation8], 4
      %s5380 = int_to_ptr.vmem [resolvable:$true] %s5379
      %5382 = dma.vmem_to_hbm [thread:$0]  %s5380, 128, %s3, [#allocation4]
    $region29: #{tpu_custom_call.1} parent=1 // pred_fallthru
      _
    // Predicated region
    $region30: #{tpu_custom_call.1} parent=1 // pred_check
      _
    $region31: #{tpu_custom_call.1} parent=1 // pred_check_branch
      %5384 = sbr.rel (0) target = $region33
    $region32: #{tpu_custom_call.1} parent=1 // pred_region
      %5385 = dma.done [#allocation4], 128
    $region33: #{tpu_custom_call.1} parent=1 // pred_fallthru
      _
    %5386 = vsyncpa [#allocation3], 1
    %5387 = vsyncpa [#allocation6], 1
    %5388 = vsyncpa [#allocation4], 1

</llo_original>
